<compile_context>
chip_gen: v5e
topology: v5e:2x2
jax: 0.10.0
libtpu: 0.0.40
codegen_flags: <defaults>
</compile_context>

<pallas_src>
import math

import jax
import jax.numpy as jnp
from jax.experimental import pallas as pl
from jax.experimental.pallas import tpu as pltpu

TWO_PI = 2.0 * math.pi

_LANE = 128                       # lane width (f32)
_MAX_COLS = 4096                  # cap on the lane dimension of the 2-D view
_TARGET_TILE = 256 * 2048         # ~512K elems/tile: 2 MiB in + 6 MiB out (f32)
_MIN_PALLAS_ELEMS = 64 * 1024     # below this, fused pure-JAX is already optimal


# ---------------------------------------------------------------------------
# Kernels
# ---------------------------------------------------------------------------
def _interleave_kernel(p_ref, t_ref, out_ref):
    """One (tb, cols) tile -> one (tb, 3*cols) interleaved [x0,y0,z0,x1,...] tile.

    p_ref  : SMEM f32[4] = [freq, ax, ay, 1/scale]
    t_ref  : VMEM f32[tb, cols]
    out_ref: VMEM    [tb, 3*cols]  (out dtype)
    """
    freq, ax, ay, inv_scale = p_ref[0], p_ref[1], p_ref[2], p_ref[3]
    c_theta = TWO_PI * freq            # theta = 2*pi*freq * t
    c_z = freq * inv_scale             # z = theta/(2*pi*scale) = freq*t/scale

    t = t_ref[...]
    z = c_z * t                        # independent of the cos/sin chain; ends t early
    theta = c_theta * t
    x = ax * jnp.cos(theta)
    y = ay * jnp.sin(theta)

    tb, tt = t_ref.shape
    # 3-way lane interleave inside the kernel (rides the XLU slot); the final
    # (..., 3) view outside is then a free metadata reshape.
    out = jnp.stack([x, y, z], axis=-1).reshape(tb, 3 * tt)
    out_ref[...] = out.astype(out_ref.dtype)


def _planes_kernel(p_ref, t_ref, out_ref):
    """Fallback: write lane-dense (3, tb, cols) planes (known-good lowering)."""
    freq, ax, ay, inv_scale = p_ref[0], p_ref[1], p_ref[2], p_ref[3]
    c_theta = TWO_PI * freq
    c_z = freq * inv_scale

    t = t_ref[...]
    out_ref[2] = (c_z * t).astype(out_ref.dtype)       # z first: ends t's live range
    theta = c_theta * t
    out_ref[0] = (ax * jnp.cos(theta)).astype(out_ref.dtype)
    out_ref[1] = (ay * jnp.sin(theta)).astype(out_ref.dtype)


# ---------------------------------------------------------------------------
# Tiling plans
# ---------------------------------------------------------------------------
def _plan_layout(n):
    """Lane-dense 2-D view of the flat input: (rows, cols, pad), cols % 128 == 0."""
    pad = (-n) % _LANE
    npad = n + pad
    cols = _LANE
    for c in range(_MAX_COLS, _LANE - 1, -_LANE):   # largest multiple of 128 dividing npad
        if npad % c == 0:
            cols = c
            break
    return npad // cols, cols, pad


def _plan_row_tile(rows, cols):
    """Row-tile size: ~_TARGET_TILE elems, multiple of 8 (or full rows);
    keep >=4 grid tiles when possible so both v7x TensorCores stay fed."""
    tb = max(8, (_TARGET_TILE // cols) // 8 * 8)
    if rows >= 32:
        tb = min(tb, max(8, (rows // 4) // 8 * 8))
    return min(tb, rows)


# ---------------------------------------------------------------------------
# pallas_call wrappers
# ---------------------------------------------------------------------------
def _call_interleaved(t2d, params, out_dtype):
    """t2d: f32[rows, cols] -> [rows, 3*cols] interleaved (x,y,z per element)."""
    rows, cols = t2d.shape
    tb = _plan_row_tile(rows, cols)
    n = rows * cols
    out_bytes = 3 * n * jnp.dtype(out_dtype).itemsize
    return pl.pallas_call(
        _interleave_kernel,
        out_shape=jax.ShapeDtypeStruct((rows, 3 * cols), out_dtype),
        grid=(pl.cdiv(rows, tb),),
        in_specs=[
            pl.BlockSpec(memory_space=pltpu.MemorySpace.SMEM),   # [freq, ax, ay, 1/scale]
            pl.BlockSpec((tb, cols), lambda i: (i, 0)),
        ],
        out_specs=pl.BlockSpec((tb, 3 * cols), lambda i: (i, 0)),
        compiler_params=pltpu.CompilerParams(
            dimension_semantics=("parallel",),
        ),
        cost_estimate=pl.CostEstimate(
            flops=6 * n, transcendentals=2 * n, bytes_accessed=4 * n + out_bytes),
    )(params, t2d)


def _call_planes(t2d, params, out_dtype):
    """Fallback: t2d f32[rows, cols] -> [3, rows, cols] planes (lane-dense)."""
    rows, cols = t2d.shape
    tb = _plan_row_tile(rows, cols)
    n = rows * cols
    out_bytes = 3 * n * jnp.dtype(out_dtype).itemsize
    return pl.pallas_call(
        _planes_kernel,
        out_shape=jax.ShapeDtypeStruct((3, rows, cols), out_dtype),
        grid=(pl.cdiv(rows, tb),),
        in_specs=[
            pl.BlockSpec(memory_space=pltpu.MemorySpace.SMEM),
            pl.BlockSpec((tb, cols), lambda i: (i, 0)),
        ],
        out_specs=pl.BlockSpec((3, tb, cols), lambda i: (0, i, 0)),
        compiler_params=pltpu.CompilerParams(
            dimension_semantics=("parallel",),
        ),
        cost_estimate=pl.CostEstimate(
            flops=6 * n, transcendentals=2 * n, bytes_accessed=4 * n + out_bytes),
    )(params, t2d)


# One-time probe: does the in-kernel lane interleave lower on this Mosaic build?
_INTERLEAVE_OK = None


def _interleave_supported():
    global _INTERLEAVE_OK
    if _INTERLEAVE_OK is None:
        try:
            probe_t = jnp.zeros((8, _LANE), jnp.float32)
            probe_p = jnp.zeros((4,), jnp.float32)
            jax.block_until_ready(_call_interleaved(probe_t, probe_p, jnp.float32))
            _INTERLEAVE_OK = True
        except Exception:   # lowering not supported -> use the planes fallback
            _INTERLEAVE_OK = False
    return _INTERLEAVE_OK


# ---------------------------------------------------------------------------
# Public wrapper (matches HelixPosEncoder.forward semantics)
# ---------------------------------------------------------------------------
def helix_pos_encoder(t_idx, freq, ax, ay, scale=200.0, *,
                      out_dtype=jnp.float32, use_pallas=None):
    """Pallas equivalent of HelixPosEncoder.forward.

    t_idx: array of any rank (last output axis gets the (x, y, z) triple)
    freq, ax, ay: scalar / shape-(1,) parameters; scale: python float or array
    returns: out_dtype[t_idx.shape + (3,)]
    """
    t_idx = jnp.asarray(t_idx, jnp.float32)
    freq = jnp.asarray(freq, jnp.float32).reshape(())
    ax = jnp.asarray(ax, jnp.float32).reshape(())
    ay = jnp.asarray(ay, jnp.float32).reshape(())
    inv_scale = jnp.float32(1.0) / jnp.asarray(scale, jnp.float32).reshape(())

    n = t_idx.size
    if use_pallas is None:
        use_pallas = n >= _MIN_PALLAS_ELEMS

    if not use_pallas or n == 0:
        # Small inputs: XLA's fused elementwise path is already near roofline;
        # a pallas_call launch would dominate.
        theta = TWO_PI * freq * t_idx
        out = jnp.stack(
            [ax * jnp.cos(theta), ay * jnp.sin(theta),
             theta * (inv_scale * (1.0 / TWO_PI))], axis=-1)
        return out.astype(out_dtype)

    params = jnp.stack([freq, ax, ay, inv_scale])        # SMEM f32[4]

    # Lane-dense 2-D view of the *flattened* input (independent of trailing dim).
    rows, cols, pad = _plan_layout(n)
    flat = t_idx.reshape(-1)
    if pad:
        # NOTE: non-multiple-of-128 sizes pay a pad/slice copy; aligned sizes don't.
        flat = jnp.pad(flat, (0, pad))
    t2d = flat.reshape(rows, cols)

    if _interleave_supported():
        out2d = _call_interleaved(t2d, params, out_dtype)   # (rows, 3*cols), interleaved
        out_flat = out2d.reshape(-1)                         # free metadata reshape
        if pad:
            out_flat = out_flat[: 3 * n]
        return out_flat.reshape(t_idx.shape + (3,))

    # Fallback path: lane-dense planes + one external transpose (extra HBM pass).
    planes = _call_planes(t2d, params, out_dtype)            # (3, rows, cols)
    planes = planes.reshape(3, rows * cols)
    if pad:
        planes = planes[:, :n]
    return jnp.moveaxis(planes, 0, -1).reshape(t_idx.shape + (3,))


def _reference(t_idx, freq, ax, ay, scale=200.0):
    theta = TWO_PI * freq * t_idx
    x = ax * jnp.cos(theta)
    y = ay * jnp.sin(theta)
    z = theta / (TWO_PI * scale)
    return jnp.stack([x, y, z], axis=-1)


if __name__ == "__main__":
    key = jax.random.PRNGKey(0)
    k_freq, k_t1, k_t2 = jax.random.split(key, 3)

    # Deterministic parameter init (mirrors nn.Parameter shapes in __init__).
    freq = jax.random.normal(k_freq, (1,), dtype=jnp.float32)   # randn(1)
    ax = jnp.ones((1,), dtype=jnp.float32)
    ay = jnp.ones((1,), dtype=jnp.float32)
    scale = 200.0

    # 1) Small demo shape (batch=2, seq=16); force the Pallas path.
    B, T = 2, 16
    t_small = jax.random.uniform(k_t1, (B, T), dtype=jnp.float32) * 64.0
    out_small = jax.block_until_ready(
        helix_pos_encoder(t_small, freq, ax, ay, scale, use_pallas=True))
    ref_small = _reference(t_small, freq[0], ax[0], ay[0], scale)
    assert out_small.shape == (B, T, 3), out_small.shape
    assert jnp.allclose(out_small, ref_small, atol=2e-5, rtol=1e-5), \
        "small-shape mismatch vs reference"

    # 2) Non-tile-aligned shape: exercises flatten + pad + multi-row tiles.
    B2, T2 = 12, 1333
    t_big = jax.random.uniform(k_t2, (B2, T2), dtype=jnp.float32) * 64.0
    out_big = jax.block_until_ready(
        helix_pos_encoder(t_big, freq, ax, ay, scale, use_pallas=True))
    ref_big = _reference(t_big, freq[0], ax[0], ay[0], scale)
    assert out_big.shape == (B2, T2, 3), out_big.shape
    assert jnp.allclose(out_big, ref_big, atol=2e-5, rtol=1e-5), \
        "tiled-shape mismatch vs reference"

    print("KERNEL_OK")
</pallas_src>

<mosaic_0001>
module attributes {stable_mosaic.version = 11 : i64} {
  func.func @_interleave_kernel(%arg0: i32, %arg1: memref<4xf32, #tpu.memory_space<smem>>, %arg2: memref<8x128xf32, #tpu.memory_space<vmem>>, %arg3: memref<8x384xf32, #tpu.memory_space<vmem>>) attributes {dimension_semantics = [#tpu.dimension_semantics<parallel>], iteration_bounds = array<i64: 1>, scalar_prefetch = 0 : i64, scratch_operands = 0 : i64, tpu.core_type = #tpu.core_type<tc>, window_params = [{transform_indices = @transform_0, window_bounds = array<i64: 4>}, {transform_indices = @transform_1, window_bounds = array<i64: 8, 128>}, {transform_indices = @transform_2, window_bounds = array<i64: 8, 384>}]} {
    %c0 = arith.constant 0 : index
    %0 = memref.load %arg1[%c0] : memref<4xf32, #tpu.memory_space<smem>>
    %c1 = arith.constant 1 : index
    %1 = memref.load %arg1[%c1] : memref<4xf32, #tpu.memory_space<smem>>
    %c2 = arith.constant 2 : index
    %2 = memref.load %arg1[%c2] : memref<4xf32, #tpu.memory_space<smem>>
    %c3 = arith.constant 3 : index
    %3 = memref.load %arg1[%c3] : memref<4xf32, #tpu.memory_space<smem>>
    %cst = arith.constant 6.28318548 : f32
    %4 = arith.mulf %cst, %0 : f32
    %5 = arith.mulf %0, %3 : f32
    %c0_0 = arith.constant 0 : index
    %c0_1 = arith.constant 0 : index
    %6 = vector.load %arg2[%c0_0, %c0_1] : memref<8x128xf32, #tpu.memory_space<vmem>>, vector<8x128xf32>
    %7 = vector.broadcast %5 : f32 to vector<8x128xf32>
    %8 = arith.mulf %7, %6 : vector<8x128xf32>
    %9 = vector.broadcast %4 : f32 to vector<8x128xf32>
    %10 = arith.mulf %9, %6 : vector<8x128xf32>
    %11 = math.cos %10 : vector<8x128xf32>
    %12 = vector.broadcast %1 : f32 to vector<8x128xf32>
    %13 = arith.mulf %12, %11 : vector<8x128xf32>
    %14 = math.sin %10 : vector<8x128xf32>
    %15 = vector.broadcast %2 : f32 to vector<8x128xf32>
    %16 = arith.mulf %15, %14 : vector<8x128xf32>
    %17 = vector.shape_cast %13 : vector<8x128xf32> to vector<8x128x1xf32>
    %18 = vector.shape_cast %16 : vector<8x128xf32> to vector<8x128x1xf32>
    %19 = vector.shape_cast %8 : vector<8x128xf32> to vector<8x128x1xf32>
    %20 = tpu.concatenate %17, %18, %19 in 2 : vector<8x128x1xf32>, vector<8x128x1xf32>, vector<8x128x1xf32> -> vector<8x128x3xf32>
    %21 = vector.shape_cast %20 : vector<8x128x3xf32> to vector<8x384xf32>
    %c0_2 = arith.constant 0 : index
    %c0_3 = arith.constant 0 : index
    %22 = vector.load %arg3[%c0_2, %c0_3] : memref<8x384xf32, #tpu.memory_space<vmem>>, vector<8x384xf32>
    tpu.vector_store %arg3[%c0_2, %c0_3], %21 {strides = array<i32>} : memref<8x384xf32, #tpu.memory_space<vmem>>, vector<8x384xf32>,
    return
  }
  func.func @transform_0(%arg0: i32) -> i32 {
    %c0_i32 = arith.constant 0 : i32
    %c0_i32_0 = arith.constant 0 : i32
    return %c0_i32 : i32
  }
  func.func @transform_1(%arg0: i32) -> (i32, i32) {
    %c0_i32 = arith.constant 0 : i32
    %c0_i32_0 = arith.constant 0 : i32
    return %arg0, %c0_i32 : i32, i32
  }
  func.func @transform_2(%arg0: i32) -> (i32, i32) {
    %c0_i32 = arith.constant 0 : i32
    %c0_i32_0 = arith.constant 0 : i32
    return %arg0, %c0_i32 : i32, i32
  }
}

module attributes {stable_mosaic.version = 11 : i64} {
  func.func @_planes_kernel(%arg0: i32, %arg1: memref<4xf32, #tpu.memory_space<smem>>, %arg2: memref<1x128xf32, #tpu.memory_space<vmem>>, %arg3: memref<3x1x128xf32, #tpu.memory_space<vmem>>) attributes {dimension_semantics = [#tpu.dimension_semantics<parallel>], iteration_bounds = array<i64: 1>, scalar_prefetch = 0 : i64, scratch_operands = 0 : i64, tpu.core_type = #tpu.core_type<tc>, window_params = [{transform_indices = @transform_0, window_bounds = array<i64: 4>}, {transform_indices = @transform_1, window_bounds = array<i64: 1, 128>}, {transform_indices = @transform_2, window_bounds = array<i64: 3, 1, 128>}]} {
    %c0 = arith.constant 0 : index
    %0 = memref.load %arg1[%c0] : memref<4xf32, #tpu.memory_space<smem>>
    %c1 = arith.constant 1 : index
    %1 = memref.load %arg1[%c1] : memref<4xf32, #tpu.memory_space<smem>>
    %c2 = arith.constant 2 : index
    %2 = memref.load %arg1[%c2] : memref<4xf32, #tpu.memory_space<smem>>
    %c3 = arith.constant 3 : index
    %3 = memref.load %arg1[%c3] : memref<4xf32, #tpu.memory_space<smem>>
    %cst = arith.constant 6.28318548 : f32
    %4 = arith.mulf %cst, %0 : f32
    %5 = arith.mulf %0, %3 : f32
    %c0_0 = arith.constant 0 : index
    %c0_1 = arith.constant 0 : index
    %6 = vector.load %arg2[%c0_0, %c0_1] : memref<1x128xf32, #tpu.memory_space<vmem>>, vector<1x128xf32>
    %7 = vector.broadcast %5 : f32 to vector<1x128xf32>
    %8 = arith.mulf %7, %6 : vector<1x128xf32>
    %c2_2 = arith.constant 2 : index
    %c0_3 = arith.constant 0 : index
    %c0_4 = arith.constant 0 : index
    %9 = vector.load %arg3[%c2_2, %c0_3, %c0_4] : memref<3x1x128xf32, #tpu.memory_space<vmem>>, vector<1x1x128xf32>
    %10 = vector.shape_cast %9 : vector<1x1x128xf32> to vector<1x128xf32>
    %11 = vector.shape_cast %8 : vector<1x128xf32> to vector<1x1x128xf32>
    tpu.vector_store %arg3[%c2_2, %c0_3, %c0_4], %11 {strides = array<i32>} : memref<3x1x128xf32, #tpu.memory_space<vmem>>, vector<1x1x128xf32>,
    %12 = vector.broadcast %4 : f32 to vector<1x128xf32>
    %13 = arith.mulf %12, %6 : vector<1x128xf32>
    %14 = math.cos %13 : vector<1x128xf32>
    %15 = vector.broadcast %1 : f32 to vector<1x128xf32>
    %16 = arith.mulf %15, %14 : vector<1x128xf32>
    %c0_5 = arith.constant 0 : index
    %c0_6 = arith.constant 0 : index
    %c0_7 = arith.constant 0 : index
    %17 = vector.load %arg3[%c0_5, %c0_6, %c0_7] : memref<3x1x128xf32, #tpu.memory_space<vmem>>, vector<1x1x128xf32>
    %18 = vector.shape_cast %17 : vector<1x1x128xf32> to vector<1x128xf32>
    %19 = vector.shape_cast %16 : vector<1x128xf32> to vector<1x1x128xf32>
    tpu.vector_store %arg3[%c0_5, %c0_6, %c0_7], %19 {strides = array<i32>} : memref<3x1x128xf32, #tpu.memory_space<vmem>>, vector<1x1x128xf32>,
    %20 = math.sin %13 : vector<1x128xf32>
    %21 = vector.broadcast %2 : f32 to vector<1x128xf32>
    %22 = arith.mulf %21, %20 : vector<1x128xf32>
    %c1_8 = arith.constant 1 : index
    %c0_9 = arith.constant 0 : index
    %c0_10 = arith.constant 0 : index
    %23 = vector.load %arg3[%c1_8, %c0_9, %c0_10] : memref<3x1x128xf32, #tpu.memory_space<vmem>>, vector<1x1x128xf32>
    %24 = vector.shape_cast %23 : vector<1x1x128xf32> to vector<1x128xf32>
    %25 = vector.shape_cast %22 : vector<1x128xf32> to vector<1x1x128xf32>
    tpu.vector_store %arg3[%c1_8, %c0_9, %c0_10], %25 {strides = array<i32>} : memref<3x1x128xf32, #tpu.memory_space<vmem>>, vector<1x1x128xf32>,
    return
  }
  func.func @transform_0(%arg0: i32) -> i32 {
    %c0_i32 = arith.constant 0 : i32
    %c0_i32_0 = arith.constant 0 : i32
    return %c0_i32 : i32
  }
  func.func @transform_1(%arg0: i32) -> (i32, i32) {
    %c0_i32 = arith.constant 0 : i32
    %c0_i32_0 = arith.constant 0 : i32
    return %arg0, %c0_i32 : i32, i32
  }
  func.func @transform_2(%arg0: i32) -> (i32, i32, i32) {
    %c0_i32 = arith.constant 0 : i32
    %c0_i32_0 = arith.constant 0 : i32
    %c0_i32_1 = arith.constant 0 : i32
    return %c0_i32, %arg0, %c0_i32_0 : i32, i32, i32
  }
}

</mosaic_0001>

<llo_original>
// kernel: tpu_custom_call.1
$region0: #{tpu_custom_call.1}
  #allocation0 [shape = 'u32[]', space=smem, size = 0x4, offset = 0x4, fixed_abs, tag = 'smem constant byte address 0x4 - core index']
  #allocation1 [shape = 'u32[72,128]{1,0:T(1,128)}', space=vmem, size = 0x9000, scoped, tag = 'internal scratch']
  %s0 = inlined_call_operand.hbm [shape: f32[4], index: 0, kind: input, shape index: {}]
  %s1 = inlined_call_operand.hbm [shape: f32[8,128], index: 1, kind: input, shape index: {}]
  %s2 = inlined_call_operand.hbm [shape: f32[8,384], index: 2, kind: output, shape index: {}]
  %s3 = sld [smem:[#allocation0]]
  $region26: #{tpu_custom_call.1} parent=0
    _
  %s5 = ssub.s32 1, %s3
  %s6 = scalar_select 0, %s5, %s3
  $region1: #{tpu_custom_call.1} parent=0
    #allocation2 [shape = 'u8[512]{0}', space=smem, size = 0x200, scoped, tag = 'input window, operand 0, single buffered']
    #allocation3 [shape = 's32[1]{0}', space=sflag, size = 0x4, scoped, tag = 'scoped memory for tpu_custom_call.1']
    #allocation4 [shape = 's32[1]{0}', space=sflag, size = 0x4, scoped, tag = 'scoped memory for tpu_custom_call.1']
    #allocation5 [shape = 's32[1]{0}', space=sflag, size = 0x4, scoped, tag = 'scoped memory for tpu_custom_call.1']
    #allocation6 [shape = 'u8[4096]{0}', space=vmem, size = 0x1000, scoped, tag = 'input window, operand 1, single buffered']
    #allocation7 [shape = 'u8[12288]{0}', space=vmem, size = 0x3000, scoped, tag = 'output window, operand 0, single buffered']
    %7 = vsyncpa [#allocation5], 0
    %8 = vsyncpa [#allocation3], 0
    %9 = vsyncpa [#allocation4], 0
    // Predicated region
    $region2: #{tpu_custom_call.1} parent=1 // pred_check
      _
    $region3: #{tpu_custom_call.1} parent=1 // pred_check_branch
      %11 = sbr.rel (0) target = $region5
    $region4: #{tpu_custom_call.1} parent=1 // pred_region
      %13 = vsyncadd [#allocation5], 0
      %s15 = sshll.u32 %s0, 4
      %s16 = int_to_ptr.hbm [resolvable:$true] %s15
      %18 = dma.hbm_to_smem %s16, 16, [#allocation2], [#allocation5]
    $region5: #{tpu_custom_call.1} parent=1 // pred_fallthru
      _
    // Predicated region
    $region6: #{tpu_custom_call.1} parent=1 // pred_check
      _
    $region7: #{tpu_custom_call.1} parent=1 // pred_check_branch
      %20 = sbr.rel (0) target = $region9
    $region8: #{tpu_custom_call.1} parent=1 // pred_region
      %22 = vsyncadd [#allocation3], 0
      %s24 = sshll.u32 %s1, 4
      %s25 = int_to_ptr.hbm [resolvable:$true] %s24
      %s26 = sshll.u32 [#allocation6], 4
      %s27 = int_to_ptr.vmem [resolvable:$true] %s26
      %29 = dma.hbm_to_vmem [thread:$0]  %s25, 128, %s27, [#allocation3]
    $region9: #{tpu_custom_call.1} parent=1 // pred_fallthru
      _
    // Predicated region
    $region10: #{tpu_custom_call.1} parent=1 // pred_check
      _
    $region11: #{tpu_custom_call.1} parent=1 // pred_check_branch
      %31 = sbr.rel (0) target = $region13
    $region12: #{tpu_custom_call.1} parent=1 // pred_region
      %33 = dma.done [#allocation5], 16
    $region13: #{tpu_custom_call.1} parent=1 // pred_fallthru
      _
    // Predicated region
    $region14: #{tpu_custom_call.1} parent=1 // pred_check
      _
    $region15: #{tpu_custom_call.1} parent=1 // pred_check_branch
      %35 = sbr.rel (0) target = $region17
    $region16: #{tpu_custom_call.1} parent=1 // pred_region
      %37 = dma.done [#allocation3], 128
    $region17: #{tpu_custom_call.1} parent=1 // pred_fallthru
      _
    %38 = sfence
    %s39 = sld [smem:[#allocation2]]
    %s40 = sld [smem:[#allocation2 + $0x1]]
    %s41 = sld [smem:[#allocation2 + $0x2]]
    %s42 = sld [smem:[#allocation2 + $0x3]]
    %s43 = smul.f32 %s39, 6.2831855
    %s44 = smul.f32 %s39, %s42
    %v45 = vld [vmem:[#allocation6] sm:$0xff]
    %v46 = vstv %s44
    %v47 = vmul.f32 %v46, %v45
    %v48 = vstv %s43
    %v49 = vmul.f32 %v48, %v45
    %v50 = vand.u32 2147483647, %v49
    %vm51 = vcmp.le.f32.partialorder %v50, 0.7853982
    %vm52 = vcmp.lt.s32.totalorder %v49, 0
    %v53 = vand.u32 %v49, 2139095040
    %v54 = vshrl.u32 %v53, 23
    %v55 = vsub.s32 %v54, 127
    %v56 = vand.u32 2147483647, %v49
    %v57 = vand.u32 %v56, 8388607
    %v58 = vor.u32 %v57, 8388608
    %v59 = vsub.s32 0, %v58
    %v60 = vadd.s32 %v55, 1
    %vm61 = vcmp.gt.s32.totalorder %v60, 0
    %v62 = vsel %vm61, %v60, 0
    %v63 = vshrl.u32 %v62, 5
    %v64 = vand.u32 %v62, 31
    %v65 = vsub.s32 32, %v64
    %v66 = vshrl.u32 683565275, %v65
    %v67 = vshll.u32 683565275, %v64
    %v68 = vshrl.u32 2475754826, %v65
    %v69 = vor.u32 %v67, %v68
    %v70 = vshll.u32 2475754826, %v64
    %v71 = vshrl.u32 2131351028, %v65
    %v72 = vor.u32 %v70, %v71
    %v73 = vshll.u32 2131351028, %v64
    %v74 = vshrl.u32 2102212464, %v65
    %v75 = vor.u32 %v73, %v74
    %v76 = vshll.u32 2102212464, %v64
    %v77 = vshrl.u32 920167782, %v65
    %v78 = vor.u32 %v76, %v77
    %v79 = vshll.u32 920167782, %v64
    %v80 = vshrl.u32 1326507024, %v65
    %v81 = vor.u32 %v79, %v80
    %vm82 = vcmp.lt.s32.totalorder %v63, 1
    %vm83 = vcmp.lt.s32.totalorder %v63, 2
    %vm84 = vcmp.lt.s32.totalorder %v63, 3
    %vm85 = vcmp.lt.s32.totalorder %v63, 4
    %v86 = vsel %vm82, %v66, %v69
    %v87 = vsel %vm85, %v75, 2102212464
    %v88 = vsel %vm84, %v72, %v87
    %v89 = vsel %vm83, %v86, %v88
    %v90 = vsel %vm82, %v69, %v72
    %v91 = vsel %vm85, %v78, 920167782
    %v92 = vsel %vm84, %v75, %v91
    %v93 = vsel %vm83, %v90, %v92
    %v94 = vsel %vm82, %v72, %v75
    %v95 = vsel %vm85, %v81, 1326507024
    %v96 = vsel %vm84, %v78, %v95
    %v97 = vsel %vm83, %v94, %v96
    %v98 = vshll.u32 %v58, 8
    %v99 = vand.u32 %v98, 65535
    %v100 = vshrl.u32 %v98, 16
    %v101 = vand.u32 %v97, 65535
    %v102 = vshrl.u32 %v97, 16
    %v103 = vmul.u32 %v99, %v101
    %v104 = vmul.u32 %v99, %v102
    %v105 = vmul.u32 %v100, %v101
    %v106 = vmul.u32 %v100, %v102
    %v107 = vshll.u32 %v104, 16
    %v108 = vshrl.u32 %v104, 16
    %v109 = vshll.u32 %v105, 16
    %v110 = vshrl.u32 %v105, 16
    %vm111 = vc.u32 %v103, %v107
    %v112 = vsel %vm111, 1, 0
    %v113 = vadd.s32 %v103, %v107
    %v114 = vadd.s32 %v106, %v112
    %vm115 = vc.u32 %v113, %v109
    %v116 = vsel %vm115, 1, 0
    %v117 = vadd.s32 %v113, %v109
    %v118 = vadd.s32 %v114, %v116
    %v119 = vadd.s32 %v118, %v108
    %v120 = vadd.s32 %v119, %v110
    %v121 = vand.u32 %v98, 65535
    %v122 = vshrl.u32 %v98, 16
    %v123 = vand.u32 %v93, 65535
    %v124 = vshrl.u32 %v93, 16
    %v125 = vmul.u32 %v121, %v123
    %v126 = vmul.u32 %v121, %v124
    %v127 = vmul.u32 %v122, %v123
    %v128 = vmul.u32 %v122, %v124
    %v129 = vshll.u32 %v126, 16
    %v130 = vshrl.u32 %v126, 16
    %v131 = vshll.u32 %v127, 16
    %v132 = vshrl.u32 %v127, 16
    %vm133 = vc.u32 %v125, %v129
    %v134 = vsel %vm133, 1, 0
    %v135 = vadd.s32 %v125, %v129
    %v136 = vadd.s32 %v128, %v134
    %vm137 = vc.u32 %v135, %v131
    %v138 = vsel %vm137, 1, 0
    %v139 = vadd.s32 %v135, %v131
    %v140 = vadd.s32 %v136, %v138
    %v141 = vadd.s32 %v140, %v130
    %v142 = vadd.s32 %v141, %v132
    %v143 = vmul.u32 %v98, %v89
    %v144 = vadd.s32 %v120, %v139
    %vm145 = vc.u32 %v120, %v139
    %v146 = vadd.s32 %v142, 1
    %v147 = vsel %vm145, %v146, %v142
    %v148 = vadd.s32 %v143, %v147
    %v149 = vadd.s32 %v148, 536870912
    %v150 = vshrl.u32 %v149, 30
    %v151 = vshll.u32 %v150, 30
    %v152 = vsub.s32 %v148, %v151
    %vm153 = vcmp.lt.s32.totalorder %v152, 0
    %v154 = vsub.s32 0, %v152
    %v155 = vsel %vm153, %v154, %v152
    %v156 = vclz %v155
    %v157 = vsub.s32 %v156, 2
    %vm158 = vcmp.gt.s32.totalorder 0, %v157
    %v159 = vsel %vm158, 0, %v157
    %v160 = vsub.s32 32, %v159
    %v161 = vshll.u32 %v152, %v159
    %v162 = vshrl.u32 %v144, %v160
    %v163 = vor.u32 %v161, %v162
    %v164 = vsub.s32 4294967266, %v159
    %v165 = vadd.s32 %v164, 127
    %v166 = vshll.u32 %v165, 23
    %v167 = vor.u32 4788187, %v166
    %v168 = vand.u32 2147483647, %v167
    %v170 = vcvt.s32.f32 %v163
    %v171 = vmul.f32 %v170, %v168
    %v172 = vxor.u32 %v171, 2147483648
    %v173 = vsel %vm52, %v172, %v171
    %v174 = vsub.s32 4, %v150
    %v175 = vsel %vm52, %v174, %v150
    %v176 = vsel %vm51, %v49, %v173
    %v177 = vsel %vm51, 0, %v175
    %v178 = vmul.f32 %v176, %v176
    %v179 = vmul.f32 %v178, -0.001358992
    %v180 = vadd.f32 %v179, 0.041655596
    %v181 = vmul.f32 %v178, %v180
    %v182 = vadd.f32 %v181, -0.4999988
    %v183 = vmul.f32 %v178, %v182
    %v184 = vadd.f32 1.0, %v183
    %v185 = vmul.f32 %v176, %v176
    %v186 = vmul.f32 %v185, -0.00019511016
    %v187 = vadd.f32 %v186, 0.008332121
    %v188 = vmul.f32 %v185, %v187
    %v189 = vadd.f32 %v188, -0.16666654
    %v190 = vmul.f32 %v185, %v189
    %v191 = vadd.f32 %v190, 1.0
    %v192 = vmul.f32 %v191, %v176
    %vm193 = vweird.f32 %v49
    %v194 = vand.u32 %v177, 3
    %vm195 = vcmp.lt.s32.totalorder %v194, 2
    %vm196 = vcmp.eq.s32.totalorder %v194, 0
    %v197 = vxor.u32 %v192, 2147483648
    %v198 = vsel %vm196, %v184, %v197
    %vm199 = vcmp.eq.s32.totalorder %v194, 2
    %v200 = vxor.u32 %v184, 2147483648
    %v201 = vsel %vm199, %v200, %v192
    %v202 = vsel %vm195, %v198, %v201
    %v203 = vsel %vm193, nan, %v202
    %v204 = vstv %s40
    %v205 = vmul.f32 %v204, %v203
    %v206 = vand.u32 2147483647, %v49
    %vm207 = vcmp.le.f32.partialorder %v206, 0.7853982
    %vm208 = vcmp.lt.s32.totalorder %v49, 0
    %v209 = vand.u32 %v49, 2139095040
    %v210 = vshrl.u32 %v209, 23
    %v211 = vsub.s32 %v210, 127
    %v212 = vand.u32 2147483647, %v49
    %v213 = vand.u32 %v212, 8388607
    %v214 = vor.u32 %v213, 8388608
    %v215 = vsub.s32 0, %v214
    %v216 = vadd.s32 %v211, 1
    %vm217 = vcmp.gt.s32.totalorder %v216, 0
    %v218 = vsel %vm217, %v216, 0
    %v219 = vshrl.u32 %v218, 5
    %v220 = vand.u32 %v218, 31
    %v221 = vsub.s32 32, %v220
    %v222 = vshrl.u32 683565275, %v221
    %v223 = vshll.u32 683565275, %v220
    %v224 = vshrl.u32 2475754826, %v221
    %v225 = vor.u32 %v223, %v224
    %v226 = vshll.u32 2475754826, %v220
    %v227 = vshrl.u32 2131351028, %v221
    %v228 = vor.u32 %v226, %v227
    %v229 = vshll.u32 2131351028, %v220
    %v230 = vshrl.u32 2102212464, %v221
    %v231 = vor.u32 %v229, %v230
    %v232 = vshll.u32 2102212464, %v220
    %v233 = vshrl.u32 920167782, %v221
    %v234 = vor.u32 %v232, %v233
    %v235 = vshll.u32 920167782, %v220
    %v236 = vshrl.u32 1326507024, %v221
    %v237 = vor.u32 %v235, %v236
    %vm238 = vcmp.lt.s32.totalorder %v219, 1
    %vm239 = vcmp.lt.s32.totalorder %v219, 2
    %vm240 = vcmp.lt.s32.totalorder %v219, 3
    %vm241 = vcmp.lt.s32.totalorder %v219, 4
    %v242 = vsel %vm238, %v222, %v225
    %v243 = vsel %vm241, %v231, 2102212464
    %v244 = vsel %vm240, %v228, %v243
    %v245 = vsel %vm239, %v242, %v244
    %v246 = vsel %vm238, %v225, %v228
    %v247 = vsel %vm241, %v234, 920167782
    %v248 = vsel %vm240, %v231, %v247
    %v249 = vsel %vm239, %v246, %v248
    %v250 = vsel %vm238, %v228, %v231
    %v251 = vsel %vm241, %v237, 1326507024
    %v252 = vsel %vm240, %v234, %v251
    %v253 = vsel %vm239, %v250, %v252
    %v254 = vshll.u32 %v214, 8
    %v255 = vand.u32 %v254, 65535
    %v256 = vshrl.u32 %v254, 16
    %v257 = vand.u32 %v253, 65535
    %v258 = vshrl.u32 %v253, 16
    %v259 = vmul.u32 %v255, %v257
    %v260 = vmul.u32 %v255, %v258
    %v261 = vmul.u32 %v256, %v257
    %v262 = vmul.u32 %v256, %v258
    %v263 = vshll.u32 %v260, 16
    %v264 = vshrl.u32 %v260, 16
    %v265 = vshll.u32 %v261, 16
    %v266 = vshrl.u32 %v261, 16
    %vm267 = vc.u32 %v259, %v263
    %v268 = vsel %vm267, 1, 0
    %v269 = vadd.s32 %v259, %v263
    %v270 = vadd.s32 %v262, %v268
    %vm271 = vc.u32 %v269, %v265
    %v272 = vsel %vm271, 1, 0
    %v273 = vadd.s32 %v269, %v265
    %v274 = vadd.s32 %v270, %v272
    %v275 = vadd.s32 %v274, %v264
    %v276 = vadd.s32 %v275, %v266
    %v277 = vand.u32 %v254, 65535
    %v278 = vshrl.u32 %v254, 16
    %v279 = vand.u32 %v249, 65535
    %v280 = vshrl.u32 %v249, 16
    %v281 = vmul.u32 %v277, %v279
    %v282 = vmul.u32 %v277, %v280
    %v283 = vmul.u32 %v278, %v279
    %v284 = vmul.u32 %v278, %v280
    %v285 = vshll.u32 %v282, 16
    %v286 = vshrl.u32 %v282, 16
    %v287 = vshll.u32 %v283, 16
    %v288 = vshrl.u32 %v283, 16
    %vm289 = vc.u32 %v281, %v285
    %v290 = vsel %vm289, 1, 0
    %v291 = vadd.s32 %v281, %v285
    %v292 = vadd.s32 %v284, %v290
    %vm293 = vc.u32 %v291, %v287
    %v294 = vsel %vm293, 1, 0
    %v295 = vadd.s32 %v291, %v287
    %v296 = vadd.s32 %v292, %v294
    %v297 = vadd.s32 %v296, %v286
    %v298 = vadd.s32 %v297, %v288
    %v299 = vmul.u32 %v254, %v245
    %v300 = vadd.s32 %v276, %v295
    %vm301 = vc.u32 %v276, %v295
    %v302 = vadd.s32 %v298, 1
    %v303 = vsel %vm301, %v302, %v298
    %v304 = vadd.s32 %v299, %v303
    %v305 = vadd.s32 %v304, 536870912
    %v306 = vshrl.u32 %v305, 30
    %v307 = vshll.u32 %v306, 30
    %v308 = vsub.s32 %v304, %v307
    %vm309 = vcmp.lt.s32.totalorder %v308, 0
    %v310 = vsub.s32 0, %v308
    %v311 = vsel %vm309, %v310, %v308
    %v312 = vclz %v311
    %v313 = vsub.s32 %v312, 2
    %vm314 = vcmp.gt.s32.totalorder 0, %v313
    %v315 = vsel %vm314, 0, %v313
    %v316 = vsub.s32 32, %v315
    %v317 = vshll.u32 %v308, %v315
    %v318 = vshrl.u32 %v300, %v316
    %v319 = vor.u32 %v317, %v318
    %v320 = vsub.s32 4294967266, %v315
    %v321 = vadd.s32 %v320, 127
    %v322 = vshll.u32 %v321, 23
    %v323 = vor.u32 4788187, %v322
    %v324 = vand.u32 2147483647, %v323
    %v326 = vcvt.s32.f32 %v319
    %v327 = vmul.f32 %v326, %v324
    %v328 = vxor.u32 %v327, 2147483648
    %v329 = vsel %vm208, %v328, %v327
    %v330 = vsub.s32 4, %v306
    %v331 = vsel %vm208, %v330, %v306
    %v332 = vsel %vm207, %v49, %v329
    %v333 = vsel %vm207, 0, %v331
    %v334 = vmul.f32 %v332, %v332
    %v335 = vmul.f32 %v334, -0.001358992
    %v336 = vadd.f32 %v335, 0.041655596
    %v337 = vmul.f32 %v334, %v336
    %v338 = vadd.f32 %v337, -0.4999988
    %v339 = vmul.f32 %v334, %v338
    %v340 = vadd.f32 1.0, %v339
    %v341 = vmul.f32 %v332, %v332
    %v342 = vmul.f32 %v341, -0.00019511016
    %v343 = vadd.f32 %v342, 0.008332121
    %v344 = vmul.f32 %v341, %v343
    %v345 = vadd.f32 %v344, -0.16666654
    %v346 = vmul.f32 %v341, %v345
    %v347 = vadd.f32 %v346, 1.0
    %v348 = vmul.f32 %v347, %v332
    %vm349 = vweird.f32 %v49
    %v350 = vadd.s32 %v333, 3
    %v351 = vand.u32 %v350, 3
    %vm352 = vcmp.lt.s32.totalorder %v351, 2
    %vm353 = vcmp.eq.s32.totalorder %v351, 0
    %v354 = vxor.u32 %v348, 2147483648
    %v355 = vsel %vm353, %v340, %v354
    %vm356 = vcmp.eq.s32.totalorder %v351, 2
    %v357 = vxor.u32 %v340, 2147483648
    %v358 = vsel %vm356, %v357, %v348
    %v359 = vsel %vm352, %v355, %v358
    %v360 = vsel %vm349, nan, %v359
    %v361 = vstv %s41
    %v362 = vmul.f32 %v361, %v360
    %v363 = vperm.slane %v205, 0
    %v364 = vlaneseq
    %v365 = vshrl.u32 %v364, 7
    %367 = vset.pattern.permute.xlu0 %v365
    %368 = vperm.xlu0 %367, %v363
    %v369 = vpop.permute.xlu0 %368
    %v370 = vlaneseq
    %v371 = vshrl.u32 %v370, 7
    %v372 = vadd.s32 %v371, 8
    %373 = vset.pattern.permute.xlu0 %v372
    %374 = vperm.xlu0 %373, %v363
    %v375 = vpop.permute.xlu0 %374
    %v376 = vlaneseq
    %v377 = vshrl.u32 %v376, 7
    %v378 = vadd.s32 %v377, 16
    %379 = vset.pattern.permute.xlu0 %v378
    %380 = vperm.xlu0 %379, %v363
    %v381 = vpop.permute.xlu0 %380
    %v382 = vlaneseq
    %v383 = vshrl.u32 %v382, 7
    %v384 = vadd.s32 %v383, 24
    %385 = vset.pattern.permute.xlu0 %v384
    %386 = vperm.xlu0 %385, %v363
    %v387 = vpop.permute.xlu0 %386
    %v388 = vlaneseq
    %v389 = vshrl.u32 %v388, 7
    %v390 = vadd.s32 %v389, 32
    %391 = vset.pattern.permute.xlu0 %v390
    %392 = vperm.xlu0 %391, %v363
    %v393 = vpop.permute.xlu0 %392
    %v394 = vlaneseq
    %v395 = vshrl.u32 %v394, 7
    %v396 = vadd.s32 %v395, 40
    %397 = vset.pattern.permute.xlu0 %v396
    %398 = vperm.xlu0 %397, %v363
    %v399 = vpop.permute.xlu0 %398
    %v400 = vlaneseq
    %v401 = vshrl.u32 %v400, 7
    %v402 = vadd.s32 %v401, 48
    %403 = vset.pattern.permute.xlu0 %v402
    %404 = vperm.xlu0 %403, %v363
    %v405 = vpop.permute.xlu0 %404
    %v406 = vlaneseq
    %v407 = vshrl.u32 %v406, 7
    %v408 = vadd.s32 %v407, 56
    %409 = vset.pattern.permute.xlu0 %v408
    %410 = vperm.xlu0 %409, %v363
    %v411 = vpop.permute.xlu0 %410
    %v412 = vlaneseq
    %v413 = vshrl.u32 %v412, 7
    %v414 = vadd.s32 %v413, 64
    %415 = vset.pattern.permute.xlu0 %v414
    %416 = vperm.xlu0 %415, %v363
    %v417 = vpop.permute.xlu0 %416
    %v418 = vlaneseq
    %v419 = vshrl.u32 %v418, 7
    %v420 = vadd.s32 %v419, 72
    %421 = vset.pattern.permute.xlu0 %v420
    %422 = vperm.xlu0 %421, %v363
    %v423 = vpop.permute.xlu0 %422
    %v424 = vlaneseq
    %v425 = vshrl.u32 %v424, 7
    %v426 = vadd.s32 %v425, 80
    %427 = vset.pattern.permute.xlu0 %v426
    %428 = vperm.xlu0 %427, %v363
    %v429 = vpop.permute.xlu0 %428
    %v430 = vlaneseq
    %v431 = vshrl.u32 %v430, 7
    %v432 = vadd.s32 %v431, 88
    %433 = vset.pattern.permute.xlu0 %v432
    %434 = vperm.xlu0 %433, %v363
    %v435 = vpop.permute.xlu0 %434
    %v436 = vlaneseq
    %v437 = vshrl.u32 %v436, 7
    %v438 = vadd.s32 %v437, 96
    %439 = vset.pattern.permute.xlu0 %v438
    %440 = vperm.xlu0 %439, %v363
    %v441 = vpop.permute.xlu0 %440
    %v442 = vlaneseq
    %v443 = vshrl.u32 %v442, 7
    %v444 = vadd.s32 %v443, 104
    %445 = vset.pattern.permute.xlu0 %v444
    %446 = vperm.xlu0 %445, %v363
    %v447 = vpop.permute.xlu0 %446
    %v448 = vlaneseq
    %v449 = vshrl.u32 %v448, 7
    %v450 = vadd.s32 %v449, 112
    %451 = vset.pattern.permute.xlu0 %v450
    %452 = vperm.xlu0 %451, %v363
    %v453 = vpop.permute.xlu0 %452
    %v454 = vlaneseq
    %v455 = vshrl.u32 %v454, 7
    %v456 = vadd.s32 %v455, 120
    %457 = vset.pattern.permute.xlu0 %v456
    %458 = vperm.xlu0 %457, %v363
    %v459 = vpop.permute.xlu0 %458
    %v460 = vperm.slane %v205, 1
    %v461 = vlaneseq
    %v462 = vshrl.u32 %v461, 7
    %464 = vset.pattern.permute.xlu0 %v462
    %465 = vperm.xlu0 %464, %v460
    %v466 = vpop.permute.xlu0 %465
    %v467 = vlaneseq
    %v468 = vshrl.u32 %v467, 7
    %v469 = vadd.s32 %v468, 8
    %470 = vset.pattern.permute.xlu0 %v469
    %471 = vperm.xlu0 %470, %v460
    %v472 = vpop.permute.xlu0 %471
    %v473 = vlaneseq
    %v474 = vshrl.u32 %v473, 7
    %v475 = vadd.s32 %v474, 16
    %476 = vset.pattern.permute.xlu0 %v475
    %477 = vperm.xlu0 %476, %v460
    %v478 = vpop.permute.xlu0 %477
    %v479 = vlaneseq
    %v480 = vshrl.u32 %v479, 7
    %v481 = vadd.s32 %v480, 24
    %482 = vset.pattern.permute.xlu0 %v481
    %483 = vperm.xlu0 %482, %v460
    %v484 = vpop.permute.xlu0 %483
    %v485 = vlaneseq
    %v486 = vshrl.u32 %v485, 7
    %v487 = vadd.s32 %v486, 32
    %488 = vset.pattern.permute.xlu0 %v487
    %489 = vperm.xlu0 %488, %v460
    %v490 = vpop.permute.xlu0 %489
    %v491 = vlaneseq
    %v492 = vshrl.u32 %v491, 7
    %v493 = vadd.s32 %v492, 40
    %494 = vset.pattern.permute.xlu0 %v493
    %495 = vperm.xlu0 %494, %v460
    %v496 = vpop.permute.xlu0 %495
    %v497 = vlaneseq
    %v498 = vshrl.u32 %v497, 7
    %v499 = vadd.s32 %v498, 48
    %500 = vset.pattern.permute.xlu0 %v499
    %501 = vperm.xlu0 %500, %v460
    %v502 = vpop.permute.xlu0 %501
    %v503 = vlaneseq
    %v504 = vshrl.u32 %v503, 7
    %v505 = vadd.s32 %v504, 56
    %506 = vset.pattern.permute.xlu0 %v505
    %507 = vperm.xlu0 %506, %v460
    %v508 = vpop.permute.xlu0 %507
    %v509 = vlaneseq
    %v510 = vshrl.u32 %v509, 7
    %v511 = vadd.s32 %v510, 64
    %512 = vset.pattern.permute.xlu0 %v511
    %513 = vperm.xlu0 %512, %v460
    %v514 = vpop.permute.xlu0 %513
    %v515 = vlaneseq
    %v516 = vshrl.u32 %v515, 7
    %v517 = vadd.s32 %v516, 72
    %518 = vset.pattern.permute.xlu0 %v517
    %519 = vperm.xlu0 %518, %v460
    %v520 = vpop.permute.xlu0 %519
    %v521 = vlaneseq
    %v522 = vshrl.u32 %v521, 7
    %v523 = vadd.s32 %v522, 80
    %524 = vset.pattern.permute.xlu0 %v523
    %525 = vperm.xlu0 %524, %v460
    %v526 = vpop.permute.xlu0 %525
    %v527 = vlaneseq
    %v528 = vshrl.u32 %v527, 7
    %v529 = vadd.s32 %v528, 88
    %530 = vset.pattern.permute.xlu0 %v529
    %531 = vperm.xlu0 %530, %v460
    %v532 = vpop.permute.xlu0 %531
    %v533 = vlaneseq
    %v534 = vshrl.u32 %v533, 7
    %v535 = vadd.s32 %v534, 96
    %536 = vset.pattern.permute.xlu0 %v535
    %537 = vperm.xlu0 %536, %v460
    %v538 = vpop.permute.xlu0 %537
    %v539 = vlaneseq
    %v540 = vshrl.u32 %v539, 7
    %v541 = vadd.s32 %v540, 104
    %542 = vset.pattern.permute.xlu0 %v541
    %543 = vperm.xlu0 %542, %v460
    %v544 = vpop.permute.xlu0 %543
    %v545 = vlaneseq
    %v546 = vshrl.u32 %v545, 7
    %v547 = vadd.s32 %v546, 112
    %548 = vset.pattern.permute.xlu0 %v547
    %549 = vperm.xlu0 %548, %v460
    %v550 = vpop.permute.xlu0 %549
    %v551 = vlaneseq
    %v552 = vshrl.u32 %v551, 7
    %v553 = vadd.s32 %v552, 120
    %554 = vset.pattern.permute.xlu0 %v553
    %555 = vperm.xlu0 %554, %v460
    %v556 = vpop.permute.xlu0 %555
    %v557 = vperm.slane %v205, 2
    %v558 = vlaneseq
    %v559 = vshrl.u32 %v558, 7
    %561 = vset.pattern.permute.xlu0 %v559
    %562 = vperm.xlu0 %561, %v557
    %v563 = vpop.permute.xlu0 %562
    %v564 = vlaneseq
    %v565 = vshrl.u32 %v564, 7
    %v566 = vadd.s32 %v565, 8
    %567 = vset.pattern.permute.xlu0 %v566
    %568 = vperm.xlu0 %567, %v557
    %v569 = vpop.permute.xlu0 %568
    %v570 = vlaneseq
    %v571 = vshrl.u32 %v570, 7
    %v572 = vadd.s32 %v571, 16
    %573 = vset.pattern.permute.xlu0 %v572
    %574 = vperm.xlu0 %573, %v557
    %v575 = vpop.permute.xlu0 %574
    %v576 = vlaneseq
    %v577 = vshrl.u32 %v576, 7
    %v578 = vadd.s32 %v577, 24
    %579 = vset.pattern.permute.xlu0 %v578
    %580 = vperm.xlu0 %579, %v557
    %v581 = vpop.permute.xlu0 %580
    %v582 = vlaneseq
    %v583 = vshrl.u32 %v582, 7
    %v584 = vadd.s32 %v583, 32
    %585 = vset.pattern.permute.xlu0 %v584
    %586 = vperm.xlu0 %585, %v557
    %v587 = vpop.permute.xlu0 %586
    %v588 = vlaneseq
    %v589 = vshrl.u32 %v588, 7
    %v590 = vadd.s32 %v589, 40
    %591 = vset.pattern.permute.xlu0 %v590
    %592 = vperm.xlu0 %591, %v557
    %v593 = vpop.permute.xlu0 %592
    %v594 = vlaneseq
    %v595 = vshrl.u32 %v594, 7
    %v596 = vadd.s32 %v595, 48
    %597 = vset.pattern.permute.xlu0 %v596
    %598 = vperm.xlu0 %597, %v557
    %v599 = vpop.permute.xlu0 %598
    %v600 = vlaneseq
    %v601 = vshrl.u32 %v600, 7
    %v602 = vadd.s32 %v601, 56
    %603 = vset.pattern.permute.xlu0 %v602
    %604 = vperm.xlu0 %603, %v557
    %v605 = vpop.permute.xlu0 %604
    %v606 = vlaneseq
    %v607 = vshrl.u32 %v606, 7
    %v608 = vadd.s32 %v607, 64
    %609 = vset.pattern.permute.xlu0 %v608
    %610 = vperm.xlu0 %609, %v557
    %v611 = vpop.permute.xlu0 %610
    %v612 = vlaneseq
    %v613 = vshrl.u32 %v612, 7
    %v614 = vadd.s32 %v613, 72
    %615 = vset.pattern.permute.xlu0 %v614
    %616 = vperm.xlu0 %615, %v557
    %v617 = vpop.permute.xlu0 %616
    %v618 = vlaneseq
    %v619 = vshrl.u32 %v618, 7
    %v620 = vadd.s32 %v619, 80
    %621 = vset.pattern.permute.xlu0 %v620
    %622 = vperm.xlu0 %621, %v557
    %v623 = vpop.permute.xlu0 %622
    %v624 = vlaneseq
    %v625 = vshrl.u32 %v624, 7
    %v626 = vadd.s32 %v625, 88
    %627 = vset.pattern.permute.xlu0 %v626
    %628 = vperm.xlu0 %627, %v557
    %v629 = vpop.permute.xlu0 %628
    %v630 = vlaneseq
    %v631 = vshrl.u32 %v630, 7
    %v632 = vadd.s32 %v631, 96
    %633 = vset.pattern.permute.xlu0 %v632
    %634 = vperm.xlu0 %633, %v557
    %v635 = vpop.permute.xlu0 %634
    %v636 = vlaneseq
    %v637 = vshrl.u32 %v636, 7
    %v638 = vadd.s32 %v637, 104
    %639 = vset.pattern.permute.xlu0 %v638
    %640 = vperm.xlu0 %639, %v557
    %v641 = vpop.permute.xlu0 %640
    %v642 = vlaneseq
    %v643 = vshrl.u32 %v642, 7
    %v644 = vadd.s32 %v643, 112
    %645 = vset.pattern.permute.xlu0 %v644
    %646 = vperm.xlu0 %645, %v557
    %v647 = vpop.permute.xlu0 %646
    %v648 = vlaneseq
    %v649 = vshrl.u32 %v648, 7
    %v650 = vadd.s32 %v649, 120
    %651 = vset.pattern.permute.xlu0 %v650
    %652 = vperm.xlu0 %651, %v557
    %v653 = vpop.permute.xlu0 %652
    %v654 = vperm.slane %v205, 3
    %v655 = vlaneseq
    %v656 = vshrl.u32 %v655, 7
    %658 = vset.pattern.permute.xlu0 %v656
    %659 = vperm.xlu0 %658, %v654
    %v660 = vpop.permute.xlu0 %659
    %v661 = vlaneseq
    %v662 = vshrl.u32 %v661, 7
    %v663 = vadd.s32 %v662, 8
    %664 = vset.pattern.permute.xlu0 %v663
    %665 = vperm.xlu0 %664, %v654
    %v666 = vpop.permute.xlu0 %665
    %v667 = vlaneseq
    %v668 = vshrl.u32 %v667, 7
    %v669 = vadd.s32 %v668, 16
    %670 = vset.pattern.permute.xlu0 %v669
    %671 = vperm.xlu0 %670, %v654
    %v672 = vpop.permute.xlu0 %671
    %v673 = vlaneseq
    %v674 = vshrl.u32 %v673, 7
    %v675 = vadd.s32 %v674, 24
    %676 = vset.pattern.permute.xlu0 %v675
    %677 = vperm.xlu0 %676, %v654
    %v678 = vpop.permute.xlu0 %677
    %v679 = vlaneseq
    %v680 = vshrl.u32 %v679, 7
    %v681 = vadd.s32 %v680, 32
    %682 = vset.pattern.permute.xlu0 %v681
    %683 = vperm.xlu0 %682, %v654
    %v684 = vpop.permute.xlu0 %683
    %v685 = vlaneseq
    %v686 = vshrl.u32 %v685, 7
    %v687 = vadd.s32 %v686, 40
    %688 = vset.pattern.permute.xlu0 %v687
    %689 = vperm.xlu0 %688, %v654
    %v690 = vpop.permute.xlu0 %689
    %v691 = vlaneseq
    %v692 = vshrl.u32 %v691, 7
    %v693 = vadd.s32 %v692, 48
    %694 = vset.pattern.permute.xlu0 %v693
    %695 = vperm.xlu0 %694, %v654
    %v696 = vpop.permute.xlu0 %695
    %v697 = vlaneseq
    %v698 = vshrl.u32 %v697, 7
    %v699 = vadd.s32 %v698, 56
    %700 = vset.pattern.permute.xlu0 %v699
    %701 = vperm.xlu0 %700, %v654
    %v702 = vpop.permute.xlu0 %701
    %v703 = vlaneseq
    %v704 = vshrl.u32 %v703, 7
    %v705 = vadd.s32 %v704, 64
    %706 = vset.pattern.permute.xlu0 %v705
    %707 = vperm.xlu0 %706, %v654
    %v708 = vpop.permute.xlu0 %707
    %v709 = vlaneseq
    %v710 = vshrl.u32 %v709, 7
    %v711 = vadd.s32 %v710, 72
    %712 = vset.pattern.permute.xlu0 %v711
    %713 = vperm.xlu0 %712, %v654
    %v714 = vpop.permute.xlu0 %713
    %v715 = vlaneseq
    %v716 = vshrl.u32 %v715, 7
    %v717 = vadd.s32 %v716, 80
    %718 = vset.pattern.permute.xlu0 %v717
    %719 = vperm.xlu0 %718, %v654
    %v720 = vpop.permute.xlu0 %719
    %v721 = vlaneseq
    %v722 = vshrl.u32 %v721, 7
    %v723 = vadd.s32 %v722, 88
    %724 = vset.pattern.permute.xlu0 %v723
    %725 = vperm.xlu0 %724, %v654
    %v726 = vpop.permute.xlu0 %725
    %v727 = vlaneseq
    %v728 = vshrl.u32 %v727, 7
    %v729 = vadd.s32 %v728, 96
    %730 = vset.pattern.permute.xlu0 %v729
    %731 = vperm.xlu0 %730, %v654
    %v732 = vpop.permute.xlu0 %731
    %v733 = vlaneseq
    %v734 = vshrl.u32 %v733, 7
    %v735 = vadd.s32 %v734, 104
    %736 = vset.pattern.permute.xlu0 %v735
    %737 = vperm.xlu0 %736, %v654
    %v738 = vpop.permute.xlu0 %737
    %v739 = vlaneseq
    %v740 = vshrl.u32 %v739, 7
    %v741 = vadd.s32 %v740, 112
    %742 = vset.pattern.permute.xlu0 %v741
    %743 = vperm.xlu0 %742, %v654
    %v744 = vpop.permute.xlu0 %743
    %v745 = vlaneseq
    %v746 = vshrl.u32 %v745, 7
    %v747 = vadd.s32 %v746, 120
    %748 = vset.pattern.permute.xlu0 %v747
    %749 = vperm.xlu0 %748, %v654
    %v750 = vpop.permute.xlu0 %749
    %v751 = vperm.slane %v205, 4
    %v752 = vlaneseq
    %v753 = vshrl.u32 %v752, 7
    %755 = vset.pattern.permute.xlu0 %v753
    %756 = vperm.xlu0 %755, %v751
    %v757 = vpop.permute.xlu0 %756
    %v758 = vlaneseq
    %v759 = vshrl.u32 %v758, 7
    %v760 = vadd.s32 %v759, 8
    %761 = vset.pattern.permute.xlu0 %v760
    %762 = vperm.xlu0 %761, %v751
    %v763 = vpop.permute.xlu0 %762
    %v764 = vlaneseq
    %v765 = vshrl.u32 %v764, 7
    %v766 = vadd.s32 %v765, 16
    %767 = vset.pattern.permute.xlu0 %v766
    %768 = vperm.xlu0 %767, %v751
    %v769 = vpop.permute.xlu0 %768
    %v770 = vlaneseq
    %v771 = vshrl.u32 %v770, 7
    %v772 = vadd.s32 %v771, 24
    %773 = vset.pattern.permute.xlu0 %v772
    %774 = vperm.xlu0 %773, %v751
    %v775 = vpop.permute.xlu0 %774
    %v776 = vlaneseq
    %v777 = vshrl.u32 %v776, 7
    %v778 = vadd.s32 %v777, 32
    %779 = vset.pattern.permute.xlu0 %v778
    %780 = vperm.xlu0 %779, %v751
    %v781 = vpop.permute.xlu0 %780
    %v782 = vlaneseq
    %v783 = vshrl.u32 %v782, 7
    %v784 = vadd.s32 %v783, 40
    %785 = vset.pattern.permute.xlu0 %v784
    %786 = vperm.xlu0 %785, %v751
    %v787 = vpop.permute.xlu0 %786
    %v788 = vlaneseq
    %v789 = vshrl.u32 %v788, 7
    %v790 = vadd.s32 %v789, 48
    %791 = vset.pattern.permute.xlu0 %v790
    %792 = vperm.xlu0 %791, %v751
    %v793 = vpop.permute.xlu0 %792
    %v794 = vlaneseq
    %v795 = vshrl.u32 %v794, 7
    %v796 = vadd.s32 %v795, 56
    %797 = vset.pattern.permute.xlu0 %v796
    %798 = vperm.xlu0 %797, %v751
    %v799 = vpop.permute.xlu0 %798
    %v800 = vlaneseq
    %v801 = vshrl.u32 %v800, 7
    %v802 = vadd.s32 %v801, 64
    %803 = vset.pattern.permute.xlu0 %v802
    %804 = vperm.xlu0 %803, %v751
    %v805 = vpop.permute.xlu0 %804
    %v806 = vlaneseq
    %v807 = vshrl.u32 %v806, 7
    %v808 = vadd.s32 %v807, 72
    %809 = vset.pattern.permute.xlu0 %v808
    %810 = vperm.xlu0 %809, %v751
    %v811 = vpop.permute.xlu0 %810
    %v812 = vlaneseq
    %v813 = vshrl.u32 %v812, 7
    %v814 = vadd.s32 %v813, 80
    %815 = vset.pattern.permute.xlu0 %v814
    %816 = vperm.xlu0 %815, %v751
    %v817 = vpop.permute.xlu0 %816
    %v818 = vlaneseq
    %v819 = vshrl.u32 %v818, 7
    %v820 = vadd.s32 %v819, 88
    %821 = vset.pattern.permute.xlu0 %v820
    %822 = vperm.xlu0 %821, %v751
    %v823 = vpop.permute.xlu0 %822
    %v824 = vlaneseq
    %v825 = vshrl.u32 %v824, 7
    %v826 = vadd.s32 %v825, 96
    %827 = vset.pattern.permute.xlu0 %v826
    %828 = vperm.xlu0 %827, %v751
    %v829 = vpop.permute.xlu0 %828
    %v830 = vlaneseq
    %v831 = vshrl.u32 %v830, 7
    %v832 = vadd.s32 %v831, 104
    %833 = vset.pattern.permute.xlu0 %v832
    %834 = vperm.xlu0 %833, %v751
    %v835 = vpop.permute.xlu0 %834
    %v836 = vlaneseq
    %v837 = vshrl.u32 %v836, 7
    %v838 = vadd.s32 %v837, 112
    %839 = vset.pattern.permute.xlu0 %v838
    %840 = vperm.xlu0 %839, %v751
    %v841 = vpop.permute.xlu0 %840
    %v842 = vlaneseq
    %v843 = vshrl.u32 %v842, 7
    %v844 = vadd.s32 %v843, 120
    %845 = vset.pattern.permute.xlu0 %v844
    %846 = vperm.xlu0 %845, %v751
    %v847 = vpop.permute.xlu0 %846
    %v848 = vperm.slane %v205, 5
    %v849 = vlaneseq
    %v850 = vshrl.u32 %v849, 7
    %852 = vset.pattern.permute.xlu0 %v850
    %853 = vperm.xlu0 %852, %v848
    %v854 = vpop.permute.xlu0 %853
    %v855 = vlaneseq
    %v856 = vshrl.u32 %v855, 7
    %v857 = vadd.s32 %v856, 8
    %858 = vset.pattern.permute.xlu0 %v857
    %859 = vperm.xlu0 %858, %v848
    %v860 = vpop.permute.xlu0 %859
    %v861 = vlaneseq
    %v862 = vshrl.u32 %v861, 7
    %v863 = vadd.s32 %v862, 16
    %864 = vset.pattern.permute.xlu0 %v863
    %865 = vperm.xlu0 %864, %v848
    %v866 = vpop.permute.xlu0 %865
    %v867 = vlaneseq
    %v868 = vshrl.u32 %v867, 7
    %v869 = vadd.s32 %v868, 24
    %870 = vset.pattern.permute.xlu0 %v869
    %871 = vperm.xlu0 %870, %v848
    %v872 = vpop.permute.xlu0 %871
    %v873 = vlaneseq
    %v874 = vshrl.u32 %v873, 7
    %v875 = vadd.s32 %v874, 32
    %876 = vset.pattern.permute.xlu0 %v875
    %877 = vperm.xlu0 %876, %v848
    %v878 = vpop.permute.xlu0 %877
    %v879 = vlaneseq
    %v880 = vshrl.u32 %v879, 7
    %v881 = vadd.s32 %v880, 40
    %882 = vset.pattern.permute.xlu0 %v881
    %883 = vperm.xlu0 %882, %v848
    %v884 = vpop.permute.xlu0 %883
    %v885 = vlaneseq
    %v886 = vshrl.u32 %v885, 7
    %v887 = vadd.s32 %v886, 48
    %888 = vset.pattern.permute.xlu0 %v887
    %889 = vperm.xlu0 %888, %v848
    %v890 = vpop.permute.xlu0 %889
    %v891 = vlaneseq
    %v892 = vshrl.u32 %v891, 7
    %v893 = vadd.s32 %v892, 56
    %894 = vset.pattern.permute.xlu0 %v893
    %895 = vperm.xlu0 %894, %v848
    %v896 = vpop.permute.xlu0 %895
    %v897 = vlaneseq
    %v898 = vshrl.u32 %v897, 7
    %v899 = vadd.s32 %v898, 64
    %900 = vset.pattern.permute.xlu0 %v899
    %901 = vperm.xlu0 %900, %v848
    %v902 = vpop.permute.xlu0 %901
    %v903 = vlaneseq
    %v904 = vshrl.u32 %v903, 7
    %v905 = vadd.s32 %v904, 72
    %906 = vset.pattern.permute.xlu0 %v905
    %907 = vperm.xlu0 %906, %v848
    %v908 = vpop.permute.xlu0 %907
    %v909 = vlaneseq
    %v910 = vshrl.u32 %v909, 7
    %v911 = vadd.s32 %v910, 80
    %912 = vset.pattern.permute.xlu0 %v911
    %913 = vperm.xlu0 %912, %v848
    %v914 = vpop.permute.xlu0 %913
    %v915 = vlaneseq
    %v916 = vshrl.u32 %v915, 7
    %v917 = vadd.s32 %v916, 88
    %918 = vset.pattern.permute.xlu0 %v917
    %919 = vperm.xlu0 %918, %v848
    %v920 = vpop.permute.xlu0 %919
    %v921 = vlaneseq
    %v922 = vshrl.u32 %v921, 7
    %v923 = vadd.s32 %v922, 96
    %924 = vset.pattern.permute.xlu0 %v923
    %925 = vperm.xlu0 %924, %v848
    %v926 = vpop.permute.xlu0 %925
    %v927 = vlaneseq
    %v928 = vshrl.u32 %v927, 7
    %v929 = vadd.s32 %v928, 104
    %930 = vset.pattern.permute.xlu0 %v929
    %931 = vperm.xlu0 %930, %v848
    %v932 = vpop.permute.xlu0 %931
    %v933 = vlaneseq
    %v934 = vshrl.u32 %v933, 7
    %v935 = vadd.s32 %v934, 112
    %936 = vset.pattern.permute.xlu0 %v935
    %937 = vperm.xlu0 %936, %v848
    %v938 = vpop.permute.xlu0 %937
    %v939 = vlaneseq
    %v940 = vshrl.u32 %v939, 7
    %v941 = vadd.s32 %v940, 120
    %942 = vset.pattern.permute.xlu0 %v941
    %943 = vperm.xlu0 %942, %v848
    %v944 = vpop.permute.xlu0 %943
    %v945 = vperm.slane %v205, 6
    %v946 = vlaneseq
    %v947 = vshrl.u32 %v946, 7
    %949 = vset.pattern.permute.xlu0 %v947
    %950 = vperm.xlu0 %949, %v945
    %v951 = vpop.permute.xlu0 %950
    %v952 = vlaneseq
    %v953 = vshrl.u32 %v952, 7
    %v954 = vadd.s32 %v953, 8
    %955 = vset.pattern.permute.xlu0 %v954
    %956 = vperm.xlu0 %955, %v945
    %v957 = vpop.permute.xlu0 %956
    %v958 = vlaneseq
    %v959 = vshrl.u32 %v958, 7
    %v960 = vadd.s32 %v959, 16
    %961 = vset.pattern.permute.xlu0 %v960
    %962 = vperm.xlu0 %961, %v945
    %v963 = vpop.permute.xlu0 %962
    %v964 = vlaneseq
    %v965 = vshrl.u32 %v964, 7
    %v966 = vadd.s32 %v965, 24
    %967 = vset.pattern.permute.xlu0 %v966
    %968 = vperm.xlu0 %967, %v945
    %v969 = vpop.permute.xlu0 %968
    %v970 = vlaneseq
    %v971 = vshrl.u32 %v970, 7
    %v972 = vadd.s32 %v971, 32
    %973 = vset.pattern.permute.xlu0 %v972
    %974 = vperm.xlu0 %973, %v945
    %v975 = vpop.permute.xlu0 %974
    %v976 = vlaneseq
    %v977 = vshrl.u32 %v976, 7
    %v978 = vadd.s32 %v977, 40
    %979 = vset.pattern.permute.xlu0 %v978
    %980 = vperm.xlu0 %979, %v945
    %v981 = vpop.permute.xlu0 %980
    %v982 = vlaneseq
    %v983 = vshrl.u32 %v982, 7
    %v984 = vadd.s32 %v983, 48
    %985 = vset.pattern.permute.xlu0 %v984
    %986 = vperm.xlu0 %985, %v945
    %v987 = vpop.permute.xlu0 %986
    %v988 = vlaneseq
    %v989 = vshrl.u32 %v988, 7
    %v990 = vadd.s32 %v989, 56
    %991 = vset.pattern.permute.xlu0 %v990
    %992 = vperm.xlu0 %991, %v945
    %v993 = vpop.permute.xlu0 %992
    %v994 = vlaneseq
    %v995 = vshrl.u32 %v994, 7
    %v996 = vadd.s32 %v995, 64
    %997 = vset.pattern.permute.xlu0 %v996
    %998 = vperm.xlu0 %997, %v945
    %v999 = vpop.permute.xlu0 %998
    %v1000 = vlaneseq
    %v1001 = vshrl.u32 %v1000, 7
    %v1002 = vadd.s32 %v1001, 72
    %1003 = vset.pattern.permute.xlu0 %v1002
    %1004 = vperm.xlu0 %1003, %v945
    %v1005 = vpop.permute.xlu0 %1004
    %v1006 = vlaneseq
    %v1007 = vshrl.u32 %v1006, 7
    %v1008 = vadd.s32 %v1007, 80
    %1009 = vset.pattern.permute.xlu0 %v1008
    %1010 = vperm.xlu0 %1009, %v945
    %v1011 = vpop.permute.xlu0 %1010
    %v1012 = vlaneseq
    %v1013 = vshrl.u32 %v1012, 7
    %v1014 = vadd.s32 %v1013, 88
    %1015 = vset.pattern.permute.xlu0 %v1014
    %1016 = vperm.xlu0 %1015, %v945
    %v1017 = vpop.permute.xlu0 %1016
    %v1018 = vlaneseq
    %v1019 = vshrl.u32 %v1018, 7
    %v1020 = vadd.s32 %v1019, 96
    %1021 = vset.pattern.permute.xlu0 %v1020
    %1022 = vperm.xlu0 %1021, %v945
    %v1023 = vpop.permute.xlu0 %1022
    %v1024 = vlaneseq
    %v1025 = vshrl.u32 %v1024, 7
    %v1026 = vadd.s32 %v1025, 104
    %1027 = vset.pattern.permute.xlu0 %v1026
    %1028 = vperm.xlu0 %1027, %v945
    %v1029 = vpop.permute.xlu0 %1028
    %v1030 = vlaneseq
    %v1031 = vshrl.u32 %v1030, 7
    %v1032 = vadd.s32 %v1031, 112
    %1033 = vset.pattern.permute.xlu0 %v1032
    %1034 = vperm.xlu0 %1033, %v945
    %v1035 = vpop.permute.xlu0 %1034
    %v1036 = vlaneseq
    %v1037 = vshrl.u32 %v1036, 7
    %v1038 = vadd.s32 %v1037, 120
    %1039 = vset.pattern.permute.xlu0 %v1038
    %1040 = vperm.xlu0 %1039, %v945
    %v1041 = vpop.permute.xlu0 %1040
    %v1042 = vperm.slane %v205, 7
    %v1043 = vlaneseq
    %v1044 = vshrl.u32 %v1043, 7
    %1046 = vset.pattern.permute.xlu0 %v1044
    %1047 = vperm.xlu0 %1046, %v1042
    %v1048 = vpop.permute.xlu0 %1047
    %v1049 = vlaneseq
    %v1050 = vshrl.u32 %v1049, 7
    %v1051 = vadd.s32 %v1050, 8
    %1052 = vset.pattern.permute.xlu0 %v1051
    %1053 = vperm.xlu0 %1052, %v1042
    %v1054 = vpop.permute.xlu0 %1053
    %v1055 = vlaneseq
    %v1056 = vshrl.u32 %v1055, 7
    %v1057 = vadd.s32 %v1056, 16
    %1058 = vset.pattern.permute.xlu0 %v1057
    %1059 = vperm.xlu0 %1058, %v1042
    %v1060 = vpop.permute.xlu0 %1059
    %v1061 = vlaneseq
    %v1062 = vshrl.u32 %v1061, 7
    %v1063 = vadd.s32 %v1062, 24
    %1064 = vset.pattern.permute.xlu0 %v1063
    %1065 = vperm.xlu0 %1064, %v1042
    %v1066 = vpop.permute.xlu0 %1065
    %v1067 = vlaneseq
    %v1068 = vshrl.u32 %v1067, 7
    %v1069 = vadd.s32 %v1068, 32
    %1070 = vset.pattern.permute.xlu0 %v1069
    %1071 = vperm.xlu0 %1070, %v1042
    %v1072 = vpop.permute.xlu0 %1071
    %v1073 = vlaneseq
    %v1074 = vshrl.u32 %v1073, 7
    %v1075 = vadd.s32 %v1074, 40
    %1076 = vset.pattern.permute.xlu0 %v1075
    %1077 = vperm.xlu0 %1076, %v1042
    %v1078 = vpop.permute.xlu0 %1077
    %v1079 = vlaneseq
    %v1080 = vshrl.u32 %v1079, 7
    %v1081 = vadd.s32 %v1080, 48
    %1082 = vset.pattern.permute.xlu0 %v1081
    %1083 = vperm.xlu0 %1082, %v1042
    %v1084 = vpop.permute.xlu0 %1083
    %v1085 = vlaneseq
    %v1086 = vshrl.u32 %v1085, 7
    %v1087 = vadd.s32 %v1086, 56
    %1088 = vset.pattern.permute.xlu0 %v1087
    %1089 = vperm.xlu0 %1088, %v1042
    %v1090 = vpop.permute.xlu0 %1089
    %v1091 = vlaneseq
    %v1092 = vshrl.u32 %v1091, 7
    %v1093 = vadd.s32 %v1092, 64
    %1094 = vset.pattern.permute.xlu0 %v1093
    %1095 = vperm.xlu0 %1094, %v1042
    %v1096 = vpop.permute.xlu0 %1095
    %v1097 = vlaneseq
    %v1098 = vshrl.u32 %v1097, 7
    %v1099 = vadd.s32 %v1098, 72
    %1100 = vset.pattern.permute.xlu0 %v1099
    %1101 = vperm.xlu0 %1100, %v1042
    %v1102 = vpop.permute.xlu0 %1101
    %v1103 = vlaneseq
    %v1104 = vshrl.u32 %v1103, 7
    %v1105 = vadd.s32 %v1104, 80
    %1106 = vset.pattern.permute.xlu0 %v1105
    %1107 = vperm.xlu0 %1106, %v1042
    %v1108 = vpop.permute.xlu0 %1107
    %v1109 = vlaneseq
    %v1110 = vshrl.u32 %v1109, 7
    %v1111 = vadd.s32 %v1110, 88
    %1112 = vset.pattern.permute.xlu0 %v1111
    %1113 = vperm.xlu0 %1112, %v1042
    %v1114 = vpop.permute.xlu0 %1113
    %v1115 = vlaneseq
    %v1116 = vshrl.u32 %v1115, 7
    %v1117 = vadd.s32 %v1116, 96
    %1118 = vset.pattern.permute.xlu0 %v1117
    %1119 = vperm.xlu0 %1118, %v1042
    %v1120 = vpop.permute.xlu0 %1119
    %v1121 = vlaneseq
    %v1122 = vshrl.u32 %v1121, 7
    %v1123 = vadd.s32 %v1122, 104
    %1124 = vset.pattern.permute.xlu0 %v1123
    %1125 = vperm.xlu0 %1124, %v1042
    %v1126 = vpop.permute.xlu0 %1125
    %v1127 = vlaneseq
    %v1128 = vshrl.u32 %v1127, 7
    %v1129 = vadd.s32 %v1128, 112
    %1130 = vset.pattern.permute.xlu0 %v1129
    %1131 = vperm.xlu0 %1130, %v1042
    %v1132 = vpop.permute.xlu0 %1131
    %v1133 = vlaneseq
    %v1134 = vshrl.u32 %v1133, 7
    %v1135 = vadd.s32 %v1134, 120
    %1136 = vset.pattern.permute.xlu0 %v1135
    %1137 = vperm.xlu0 %1136, %v1042
    %v1138 = vpop.permute.xlu0 %1137
    %v1139 = vperm.slane %v362, 0
    %v1140 = vlaneseq
    %v1141 = vshrl.u32 %v1140, 7
    %1143 = vset.pattern.permute.xlu0 %v1141
    %1144 = vperm.xlu0 %1143, %v1139
    %v1145 = vpop.permute.xlu0 %1144
    %v1146 = vlaneseq
    %v1147 = vshrl.u32 %v1146, 7
    %v1148 = vadd.s32 %v1147, 8
    %1149 = vset.pattern.permute.xlu0 %v1148
    %1150 = vperm.xlu0 %1149, %v1139
    %v1151 = vpop.permute.xlu0 %1150
    %v1152 = vlaneseq
    %v1153 = vshrl.u32 %v1152, 7
    %v1154 = vadd.s32 %v1153, 16
    %1155 = vset.pattern.permute.xlu0 %v1154
    %1156 = vperm.xlu0 %1155, %v1139
    %v1157 = vpop.permute.xlu0 %1156
    %v1158 = vlaneseq
    %v1159 = vshrl.u32 %v1158, 7
    %v1160 = vadd.s32 %v1159, 24
    %1161 = vset.pattern.permute.xlu0 %v1160
    %1162 = vperm.xlu0 %1161, %v1139
    %v1163 = vpop.permute.xlu0 %1162
    %v1164 = vlaneseq
    %v1165 = vshrl.u32 %v1164, 7
    %v1166 = vadd.s32 %v1165, 32
    %1167 = vset.pattern.permute.xlu0 %v1166
    %1168 = vperm.xlu0 %1167, %v1139
    %v1169 = vpop.permute.xlu0 %1168
    %v1170 = vlaneseq
    %v1171 = vshrl.u32 %v1170, 7
    %v1172 = vadd.s32 %v1171, 40
    %1173 = vset.pattern.permute.xlu0 %v1172
    %1174 = vperm.xlu0 %1173, %v1139
    %v1175 = vpop.permute.xlu0 %1174
    %v1176 = vlaneseq
    %v1177 = vshrl.u32 %v1176, 7
    %v1178 = vadd.s32 %v1177, 48
    %1179 = vset.pattern.permute.xlu0 %v1178
    %1180 = vperm.xlu0 %1179, %v1139
    %v1181 = vpop.permute.xlu0 %1180
    %v1182 = vlaneseq
    %v1183 = vshrl.u32 %v1182, 7
    %v1184 = vadd.s32 %v1183, 56
    %1185 = vset.pattern.permute.xlu0 %v1184
    %1186 = vperm.xlu0 %1185, %v1139
    %v1187 = vpop.permute.xlu0 %1186
    %v1188 = vlaneseq
    %v1189 = vshrl.u32 %v1188, 7
    %v1190 = vadd.s32 %v1189, 64
    %1191 = vset.pattern.permute.xlu0 %v1190
    %1192 = vperm.xlu0 %1191, %v1139
    %v1193 = vpop.permute.xlu0 %1192
    %v1194 = vlaneseq
    %v1195 = vshrl.u32 %v1194, 7
    %v1196 = vadd.s32 %v1195, 72
    %1197 = vset.pattern.permute.xlu0 %v1196
    %1198 = vperm.xlu0 %1197, %v1139
    %v1199 = vpop.permute.xlu0 %1198
    %v1200 = vlaneseq
    %v1201 = vshrl.u32 %v1200, 7
    %v1202 = vadd.s32 %v1201, 80
    %1203 = vset.pattern.permute.xlu0 %v1202
    %1204 = vperm.xlu0 %1203, %v1139
    %v1205 = vpop.permute.xlu0 %1204
    %v1206 = vlaneseq
    %v1207 = vshrl.u32 %v1206, 7
    %v1208 = vadd.s32 %v1207, 88
    %1209 = vset.pattern.permute.xlu0 %v1208
    %1210 = vperm.xlu0 %1209, %v1139
    %v1211 = vpop.permute.xlu0 %1210
    %v1212 = vlaneseq
    %v1213 = vshrl.u32 %v1212, 7
    %v1214 = vadd.s32 %v1213, 96
    %1215 = vset.pattern.permute.xlu0 %v1214
    %1216 = vperm.xlu0 %1215, %v1139
    %v1217 = vpop.permute.xlu0 %1216
    %v1218 = vlaneseq
    %v1219 = vshrl.u32 %v1218, 7
    %v1220 = vadd.s32 %v1219, 104
    %1221 = vset.pattern.permute.xlu0 %v1220
    %1222 = vperm.xlu0 %1221, %v1139
    %v1223 = vpop.permute.xlu0 %1222
    %v1224 = vlaneseq
    %v1225 = vshrl.u32 %v1224, 7
    %v1226 = vadd.s32 %v1225, 112
    %1227 = vset.pattern.permute.xlu0 %v1226
    %1228 = vperm.xlu0 %1227, %v1139
    %v1229 = vpop.permute.xlu0 %1228
    %v1230 = vlaneseq
    %v1231 = vshrl.u32 %v1230, 7
    %v1232 = vadd.s32 %v1231, 120
    %1233 = vset.pattern.permute.xlu0 %v1232
    %1234 = vperm.xlu0 %1233, %v1139
    %v1235 = vpop.permute.xlu0 %1234
    %v1236 = vperm.slane %v362, 1
    %v1237 = vlaneseq
    %v1238 = vshrl.u32 %v1237, 7
    %1240 = vset.pattern.permute.xlu0 %v1238
    %1241 = vperm.xlu0 %1240, %v1236
    %v1242 = vpop.permute.xlu0 %1241
    %v1243 = vlaneseq
    %v1244 = vshrl.u32 %v1243, 7
    %v1245 = vadd.s32 %v1244, 8
    %1246 = vset.pattern.permute.xlu0 %v1245
    %1247 = vperm.xlu0 %1246, %v1236
    %v1248 = vpop.permute.xlu0 %1247
    %v1249 = vlaneseq
    %v1250 = vshrl.u32 %v1249, 7
    %v1251 = vadd.s32 %v1250, 16
    %1252 = vset.pattern.permute.xlu0 %v1251
    %1253 = vperm.xlu0 %1252, %v1236
    %v1254 = vpop.permute.xlu0 %1253
    %v1255 = vlaneseq
    %v1256 = vshrl.u32 %v1255, 7
    %v1257 = vadd.s32 %v1256, 24
    %1258 = vset.pattern.permute.xlu0 %v1257
    %1259 = vperm.xlu0 %1258, %v1236
    %v1260 = vpop.permute.xlu0 %1259
    %v1261 = vlaneseq
    %v1262 = vshrl.u32 %v1261, 7
    %v1263 = vadd.s32 %v1262, 32
    %1264 = vset.pattern.permute.xlu0 %v1263
    %1265 = vperm.xlu0 %1264, %v1236
    %v1266 = vpop.permute.xlu0 %1265
    %v1267 = vlaneseq
    %v1268 = vshrl.u32 %v1267, 7
    %v1269 = vadd.s32 %v1268, 40
    %1270 = vset.pattern.permute.xlu0 %v1269
    %1271 = vperm.xlu0 %1270, %v1236
    %v1272 = vpop.permute.xlu0 %1271
    %v1273 = vlaneseq
    %v1274 = vshrl.u32 %v1273, 7
    %v1275 = vadd.s32 %v1274, 48
    %1276 = vset.pattern.permute.xlu0 %v1275
    %1277 = vperm.xlu0 %1276, %v1236
    %v1278 = vpop.permute.xlu0 %1277
    %v1279 = vlaneseq
    %v1280 = vshrl.u32 %v1279, 7
    %v1281 = vadd.s32 %v1280, 56
    %1282 = vset.pattern.permute.xlu0 %v1281
    %1283 = vperm.xlu0 %1282, %v1236
    %v1284 = vpop.permute.xlu0 %1283
    %v1285 = vlaneseq
    %v1286 = vshrl.u32 %v1285, 7
    %v1287 = vadd.s32 %v1286, 64
    %1288 = vset.pattern.permute.xlu0 %v1287
    %1289 = vperm.xlu0 %1288, %v1236
    %v1290 = vpop.permute.xlu0 %1289
    %v1291 = vlaneseq
    %v1292 = vshrl.u32 %v1291, 7
    %v1293 = vadd.s32 %v1292, 72
    %1294 = vset.pattern.permute.xlu0 %v1293
    %1295 = vperm.xlu0 %1294, %v1236
    %v1296 = vpop.permute.xlu0 %1295
    %v1297 = vlaneseq
    %v1298 = vshrl.u32 %v1297, 7
    %v1299 = vadd.s32 %v1298, 80
    %1300 = vset.pattern.permute.xlu0 %v1299
    %1301 = vperm.xlu0 %1300, %v1236
    %v1302 = vpop.permute.xlu0 %1301
    %v1303 = vlaneseq
    %v1304 = vshrl.u32 %v1303, 7
    %v1305 = vadd.s32 %v1304, 88
    %1306 = vset.pattern.permute.xlu0 %v1305
    %1307 = vperm.xlu0 %1306, %v1236
    %v1308 = vpop.permute.xlu0 %1307
    %v1309 = vlaneseq
    %v1310 = vshrl.u32 %v1309, 7
    %v1311 = vadd.s32 %v1310, 96
    %1312 = vset.pattern.permute.xlu0 %v1311
    %1313 = vperm.xlu0 %1312, %v1236
    %v1314 = vpop.permute.xlu0 %1313
    %v1315 = vlaneseq
    %v1316 = vshrl.u32 %v1315, 7
    %v1317 = vadd.s32 %v1316, 104
    %1318 = vset.pattern.permute.xlu0 %v1317
    %1319 = vperm.xlu0 %1318, %v1236
    %v1320 = vpop.permute.xlu0 %1319
    %v1321 = vlaneseq
    %v1322 = vshrl.u32 %v1321, 7
    %v1323 = vadd.s32 %v1322, 112
    %1324 = vset.pattern.permute.xlu0 %v1323
    %1325 = vperm.xlu0 %1324, %v1236
    %v1326 = vpop.permute.xlu0 %1325
    %v1327 = vlaneseq
    %v1328 = vshrl.u32 %v1327, 7
    %v1329 = vadd.s32 %v1328, 120
    %1330 = vset.pattern.permute.xlu0 %v1329
    %1331 = vperm.xlu0 %1330, %v1236
    %v1332 = vpop.permute.xlu0 %1331
    %v1333 = vperm.slane %v362, 2
    %v1334 = vlaneseq
    %v1335 = vshrl.u32 %v1334, 7
    %1337 = vset.pattern.permute.xlu0 %v1335
    %1338 = vperm.xlu0 %1337, %v1333
    %v1339 = vpop.permute.xlu0 %1338
    %v1340 = vlaneseq
    %v1341 = vshrl.u32 %v1340, 7
    %v1342 = vadd.s32 %v1341, 8
    %1343 = vset.pattern.permute.xlu0 %v1342
    %1344 = vperm.xlu0 %1343, %v1333
    %v1345 = vpop.permute.xlu0 %1344
    %v1346 = vlaneseq
    %v1347 = vshrl.u32 %v1346, 7
    %v1348 = vadd.s32 %v1347, 16
    %1349 = vset.pattern.permute.xlu0 %v1348
    %1350 = vperm.xlu0 %1349, %v1333
    %v1351 = vpop.permute.xlu0 %1350
    %v1352 = vlaneseq
    %v1353 = vshrl.u32 %v1352, 7
    %v1354 = vadd.s32 %v1353, 24
    %1355 = vset.pattern.permute.xlu0 %v1354
    %1356 = vperm.xlu0 %1355, %v1333
    %v1357 = vpop.permute.xlu0 %1356
    %v1358 = vlaneseq
    %v1359 = vshrl.u32 %v1358, 7
    %v1360 = vadd.s32 %v1359, 32
    %1361 = vset.pattern.permute.xlu0 %v1360
    %1362 = vperm.xlu0 %1361, %v1333
    %v1363 = vpop.permute.xlu0 %1362
    %v1364 = vlaneseq
    %v1365 = vshrl.u32 %v1364, 7
    %v1366 = vadd.s32 %v1365, 40
    %1367 = vset.pattern.permute.xlu0 %v1366
    %1368 = vperm.xlu0 %1367, %v1333
    %v1369 = vpop.permute.xlu0 %1368
    %v1370 = vlaneseq
    %v1371 = vshrl.u32 %v1370, 7
    %v1372 = vadd.s32 %v1371, 48
    %1373 = vset.pattern.permute.xlu0 %v1372
    %1374 = vperm.xlu0 %1373, %v1333
    %v1375 = vpop.permute.xlu0 %1374
    %v1376 = vlaneseq
    %v1377 = vshrl.u32 %v1376, 7
    %v1378 = vadd.s32 %v1377, 56
    %1379 = vset.pattern.permute.xlu0 %v1378
    %1380 = vperm.xlu0 %1379, %v1333
    %v1381 = vpop.permute.xlu0 %1380
    %v1382 = vlaneseq
    %v1383 = vshrl.u32 %v1382, 7
    %v1384 = vadd.s32 %v1383, 64
    %1385 = vset.pattern.permute.xlu0 %v1384
    %1386 = vperm.xlu0 %1385, %v1333
    %v1387 = vpop.permute.xlu0 %1386
    %v1388 = vlaneseq
    %v1389 = vshrl.u32 %v1388, 7
    %v1390 = vadd.s32 %v1389, 72
    %1391 = vset.pattern.permute.xlu0 %v1390
    %1392 = vperm.xlu0 %1391, %v1333
    %v1393 = vpop.permute.xlu0 %1392
    %v1394 = vlaneseq
    %v1395 = vshrl.u32 %v1394, 7
    %v1396 = vadd.s32 %v1395, 80
    %1397 = vset.pattern.permute.xlu0 %v1396
    %1398 = vperm.xlu0 %1397, %v1333
    %v1399 = vpop.permute.xlu0 %1398
    %v1400 = vlaneseq
    %v1401 = vshrl.u32 %v1400, 7
    %v1402 = vadd.s32 %v1401, 88
    %1403 = vset.pattern.permute.xlu0 %v1402
    %1404 = vperm.xlu0 %1403, %v1333
    %v1405 = vpop.permute.xlu0 %1404
    %v1406 = vlaneseq
    %v1407 = vshrl.u32 %v1406, 7
    %v1408 = vadd.s32 %v1407, 96
    %1409 = vset.pattern.permute.xlu0 %v1408
    %1410 = vperm.xlu0 %1409, %v1333
    %v1411 = vpop.permute.xlu0 %1410
    %v1412 = vlaneseq
    %v1413 = vshrl.u32 %v1412, 7
    %v1414 = vadd.s32 %v1413, 104
    %1415 = vset.pattern.permute.xlu0 %v1414
    %1416 = vperm.xlu0 %1415, %v1333
    %v1417 = vpop.permute.xlu0 %1416
    %v1418 = vlaneseq
    %v1419 = vshrl.u32 %v1418, 7
    %v1420 = vadd.s32 %v1419, 112
    %1421 = vset.pattern.permute.xlu0 %v1420
    %1422 = vperm.xlu0 %1421, %v1333
    %v1423 = vpop.permute.xlu0 %1422
    %v1424 = vlaneseq
    %v1425 = vshrl.u32 %v1424, 7
    %v1426 = vadd.s32 %v1425, 120
    %1427 = vset.pattern.permute.xlu0 %v1426
    %1428 = vperm.xlu0 %1427, %v1333
    %v1429 = vpop.permute.xlu0 %1428
    %v1430 = vperm.slane %v362, 3
    %v1431 = vlaneseq
    %v1432 = vshrl.u32 %v1431, 7
    %1434 = vset.pattern.permute.xlu0 %v1432
    %1435 = vperm.xlu0 %1434, %v1430
    %v1436 = vpop.permute.xlu0 %1435
    %v1437 = vlaneseq
    %v1438 = vshrl.u32 %v1437, 7
    %v1439 = vadd.s32 %v1438, 8
    %1440 = vset.pattern.permute.xlu0 %v1439
    %1441 = vperm.xlu0 %1440, %v1430
    %v1442 = vpop.permute.xlu0 %1441
    %v1443 = vlaneseq
    %v1444 = vshrl.u32 %v1443, 7
    %v1445 = vadd.s32 %v1444, 16
    %1446 = vset.pattern.permute.xlu0 %v1445
    %1447 = vperm.xlu0 %1446, %v1430
    %v1448 = vpop.permute.xlu0 %1447
    %v1449 = vlaneseq
    %v1450 = vshrl.u32 %v1449, 7
    %v1451 = vadd.s32 %v1450, 24
    %1452 = vset.pattern.permute.xlu0 %v1451
    %1453 = vperm.xlu0 %1452, %v1430
    %v1454 = vpop.permute.xlu0 %1453
    %v1455 = vlaneseq
    %v1456 = vshrl.u32 %v1455, 7
    %v1457 = vadd.s32 %v1456, 32
    %1458 = vset.pattern.permute.xlu0 %v1457
    %1459 = vperm.xlu0 %1458, %v1430
    %v1460 = vpop.permute.xlu0 %1459
    %v1461 = vlaneseq
    %v1462 = vshrl.u32 %v1461, 7
    %v1463 = vadd.s32 %v1462, 40
    %1464 = vset.pattern.permute.xlu0 %v1463
    %1465 = vperm.xlu0 %1464, %v1430
    %v1466 = vpop.permute.xlu0 %1465
    %v1467 = vlaneseq
    %v1468 = vshrl.u32 %v1467, 7
    %v1469 = vadd.s32 %v1468, 48
    %1470 = vset.pattern.permute.xlu0 %v1469
    %1471 = vperm.xlu0 %1470, %v1430
    %v1472 = vpop.permute.xlu0 %1471
    %v1473 = vlaneseq
    %v1474 = vshrl.u32 %v1473, 7
    %v1475 = vadd.s32 %v1474, 56
    %1476 = vset.pattern.permute.xlu0 %v1475
    %1477 = vperm.xlu0 %1476, %v1430
    %v1478 = vpop.permute.xlu0 %1477
    %v1479 = vlaneseq
    %v1480 = vshrl.u32 %v1479, 7
    %v1481 = vadd.s32 %v1480, 64
    %1482 = vset.pattern.permute.xlu0 %v1481
    %1483 = vperm.xlu0 %1482, %v1430
    %v1484 = vpop.permute.xlu0 %1483
    %v1485 = vlaneseq
    %v1486 = vshrl.u32 %v1485, 7
    %v1487 = vadd.s32 %v1486, 72
    %1488 = vset.pattern.permute.xlu0 %v1487
    %1489 = vperm.xlu0 %1488, %v1430
    %v1490 = vpop.permute.xlu0 %1489
    %v1491 = vlaneseq
    %v1492 = vshrl.u32 %v1491, 7
    %v1493 = vadd.s32 %v1492, 80
    %1494 = vset.pattern.permute.xlu0 %v1493
    %1495 = vperm.xlu0 %1494, %v1430
    %v1496 = vpop.permute.xlu0 %1495
    %v1497 = vlaneseq
    %v1498 = vshrl.u32 %v1497, 7
    %v1499 = vadd.s32 %v1498, 88
    %1500 = vset.pattern.permute.xlu0 %v1499
    %1501 = vperm.xlu0 %1500, %v1430
    %v1502 = vpop.permute.xlu0 %1501
    %v1503 = vlaneseq
    %v1504 = vshrl.u32 %v1503, 7
    %v1505 = vadd.s32 %v1504, 96
    %1506 = vset.pattern.permute.xlu0 %v1505
    %1507 = vperm.xlu0 %1506, %v1430
    %v1508 = vpop.permute.xlu0 %1507
    %v1509 = vlaneseq
    %v1510 = vshrl.u32 %v1509, 7
    %v1511 = vadd.s32 %v1510, 104
    %1512 = vset.pattern.permute.xlu0 %v1511
    %1513 = vperm.xlu0 %1512, %v1430
    %v1514 = vpop.permute.xlu0 %1513
    %v1515 = vlaneseq
    %v1516 = vshrl.u32 %v1515, 7
    %v1517 = vadd.s32 %v1516, 112
    %1518 = vset.pattern.permute.xlu0 %v1517
    %1519 = vperm.xlu0 %1518, %v1430
    %v1520 = vpop.permute.xlu0 %1519
    %v1521 = vlaneseq
    %v1522 = vshrl.u32 %v1521, 7
    %v1523 = vadd.s32 %v1522, 120
    %1524 = vset.pattern.permute.xlu0 %v1523
    %1525 = vperm.xlu0 %1524, %v1430
    %v1526 = vpop.permute.xlu0 %1525
    %v1527 = vperm.slane %v362, 4
    %v1528 = vlaneseq
    %v1529 = vshrl.u32 %v1528, 7
    %1531 = vset.pattern.permute.xlu0 %v1529
    %1532 = vperm.xlu0 %1531, %v1527
    %v1533 = vpop.permute.xlu0 %1532
    %v1534 = vlaneseq
    %v1535 = vshrl.u32 %v1534, 7
    %v1536 = vadd.s32 %v1535, 8
    %1537 = vset.pattern.permute.xlu0 %v1536
    %1538 = vperm.xlu0 %1537, %v1527
    %v1539 = vpop.permute.xlu0 %1538
    %v1540 = vlaneseq
    %v1541 = vshrl.u32 %v1540, 7
    %v1542 = vadd.s32 %v1541, 16
    %1543 = vset.pattern.permute.xlu0 %v1542
    %1544 = vperm.xlu0 %1543, %v1527
    %v1545 = vpop.permute.xlu0 %1544
    %v1546 = vlaneseq
    %v1547 = vshrl.u32 %v1546, 7
    %v1548 = vadd.s32 %v1547, 24
    %1549 = vset.pattern.permute.xlu0 %v1548
    %1550 = vperm.xlu0 %1549, %v1527
    %v1551 = vpop.permute.xlu0 %1550
    %v1552 = vlaneseq
    %v1553 = vshrl.u32 %v1552, 7
    %v1554 = vadd.s32 %v1553, 32
    %1555 = vset.pattern.permute.xlu0 %v1554
    %1556 = vperm.xlu0 %1555, %v1527
    %v1557 = vpop.permute.xlu0 %1556
    %v1558 = vlaneseq
    %v1559 = vshrl.u32 %v1558, 7
    %v1560 = vadd.s32 %v1559, 40
    %1561 = vset.pattern.permute.xlu0 %v1560
    %1562 = vperm.xlu0 %1561, %v1527
    %v1563 = vpop.permute.xlu0 %1562
    %v1564 = vlaneseq
    %v1565 = vshrl.u32 %v1564, 7
    %v1566 = vadd.s32 %v1565, 48
    %1567 = vset.pattern.permute.xlu0 %v1566
    %1568 = vperm.xlu0 %1567, %v1527
    %v1569 = vpop.permute.xlu0 %1568
    %v1570 = vlaneseq
    %v1571 = vshrl.u32 %v1570, 7
    %v1572 = vadd.s32 %v1571, 56
    %1573 = vset.pattern.permute.xlu0 %v1572
    %1574 = vperm.xlu0 %1573, %v1527
    %v1575 = vpop.permute.xlu0 %1574
    %v1576 = vlaneseq
    %v1577 = vshrl.u32 %v1576, 7
    %v1578 = vadd.s32 %v1577, 64
    %1579 = vset.pattern.permute.xlu0 %v1578
    %1580 = vperm.xlu0 %1579, %v1527
    %v1581 = vpop.permute.xlu0 %1580
    %v1582 = vlaneseq
    %v1583 = vshrl.u32 %v1582, 7
    %v1584 = vadd.s32 %v1583, 72
    %1585 = vset.pattern.permute.xlu0 %v1584
    %1586 = vperm.xlu0 %1585, %v1527
    %v1587 = vpop.permute.xlu0 %1586
    %v1588 = vlaneseq
    %v1589 = vshrl.u32 %v1588, 7
    %v1590 = vadd.s32 %v1589, 80
    %1591 = vset.pattern.permute.xlu0 %v1590
    %1592 = vperm.xlu0 %1591, %v1527
    %v1593 = vpop.permute.xlu0 %1592
    %v1594 = vlaneseq
    %v1595 = vshrl.u32 %v1594, 7
    %v1596 = vadd.s32 %v1595, 88
    %1597 = vset.pattern.permute.xlu0 %v1596
    %1598 = vperm.xlu0 %1597, %v1527
    %v1599 = vpop.permute.xlu0 %1598
    %v1600 = vlaneseq
    %v1601 = vshrl.u32 %v1600, 7
    %v1602 = vadd.s32 %v1601, 96
    %1603 = vset.pattern.permute.xlu0 %v1602
    %1604 = vperm.xlu0 %1603, %v1527
    %v1605 = vpop.permute.xlu0 %1604
    %v1606 = vlaneseq
    %v1607 = vshrl.u32 %v1606, 7
    %v1608 = vadd.s32 %v1607, 104
    %1609 = vset.pattern.permute.xlu0 %v1608
    %1610 = vperm.xlu0 %1609, %v1527
    %v1611 = vpop.permute.xlu0 %1610
    %v1612 = vlaneseq
    %v1613 = vshrl.u32 %v1612, 7
    %v1614 = vadd.s32 %v1613, 112
    %1615 = vset.pattern.permute.xlu0 %v1614
    %1616 = vperm.xlu0 %1615, %v1527
    %v1617 = vpop.permute.xlu0 %1616
    %v1618 = vlaneseq
    %v1619 = vshrl.u32 %v1618, 7
    %v1620 = vadd.s32 %v1619, 120
    %1621 = vset.pattern.permute.xlu0 %v1620
    %1622 = vperm.xlu0 %1621, %v1527
    %v1623 = vpop.permute.xlu0 %1622
    %v1624 = vperm.slane %v362, 5
    %v1625 = vlaneseq
    %v1626 = vshrl.u32 %v1625, 7
    %1628 = vset.pattern.permute.xlu0 %v1626
    %1629 = vperm.xlu0 %1628, %v1624
    %v1630 = vpop.permute.xlu0 %1629
    %v1631 = vlaneseq
    %v1632 = vshrl.u32 %v1631, 7
    %v1633 = vadd.s32 %v1632, 8
    %1634 = vset.pattern.permute.xlu0 %v1633
    %1635 = vperm.xlu0 %1634, %v1624
    %v1636 = vpop.permute.xlu0 %1635
    %v1637 = vlaneseq
    %v1638 = vshrl.u32 %v1637, 7
    %v1639 = vadd.s32 %v1638, 16
    %1640 = vset.pattern.permute.xlu0 %v1639
    %1641 = vperm.xlu0 %1640, %v1624
    %v1642 = vpop.permute.xlu0 %1641
    %v1643 = vlaneseq
    %v1644 = vshrl.u32 %v1643, 7
    %v1645 = vadd.s32 %v1644, 24
    %1646 = vset.pattern.permute.xlu0 %v1645
    %1647 = vperm.xlu0 %1646, %v1624
    %v1648 = vpop.permute.xlu0 %1647
    %v1649 = vlaneseq
    %v1650 = vshrl.u32 %v1649, 7
    %v1651 = vadd.s32 %v1650, 32
    %1652 = vset.pattern.permute.xlu0 %v1651
    %1653 = vperm.xlu0 %1652, %v1624
    %v1654 = vpop.permute.xlu0 %1653
    %v1655 = vlaneseq
    %v1656 = vshrl.u32 %v1655, 7
    %v1657 = vadd.s32 %v1656, 40
    %1658 = vset.pattern.permute.xlu0 %v1657
    %1659 = vperm.xlu0 %1658, %v1624
    %v1660 = vpop.permute.xlu0 %1659
    %v1661 = vlaneseq
    %v1662 = vshrl.u32 %v1661, 7
    %v1663 = vadd.s32 %v1662, 48
    %1664 = vset.pattern.permute.xlu0 %v1663
    %1665 = vperm.xlu0 %1664, %v1624
    %v1666 = vpop.permute.xlu0 %1665
    %v1667 = vlaneseq
    %v1668 = vshrl.u32 %v1667, 7
    %v1669 = vadd.s32 %v1668, 56
    %1670 = vset.pattern.permute.xlu0 %v1669
    %1671 = vperm.xlu0 %1670, %v1624
    %v1672 = vpop.permute.xlu0 %1671
    %v1673 = vlaneseq
    %v1674 = vshrl.u32 %v1673, 7
    %v1675 = vadd.s32 %v1674, 64
    %1676 = vset.pattern.permute.xlu0 %v1675
    %1677 = vperm.xlu0 %1676, %v1624
    %v1678 = vpop.permute.xlu0 %1677
    %v1679 = vlaneseq
    %v1680 = vshrl.u32 %v1679, 7
    %v1681 = vadd.s32 %v1680, 72
    %1682 = vset.pattern.permute.xlu0 %v1681
    %1683 = vperm.xlu0 %1682, %v1624
    %v1684 = vpop.permute.xlu0 %1683
    %v1685 = vlaneseq
    %v1686 = vshrl.u32 %v1685, 7
    %v1687 = vadd.s32 %v1686, 80
    %1688 = vset.pattern.permute.xlu0 %v1687
    %1689 = vperm.xlu0 %1688, %v1624
    %v1690 = vpop.permute.xlu0 %1689
    %v1691 = vlaneseq
    %v1692 = vshrl.u32 %v1691, 7
    %v1693 = vadd.s32 %v1692, 88
    %1694 = vset.pattern.permute.xlu0 %v1693
    %1695 = vperm.xlu0 %1694, %v1624
    %v1696 = vpop.permute.xlu0 %1695
    %v1697 = vlaneseq
    %v1698 = vshrl.u32 %v1697, 7
    %v1699 = vadd.s32 %v1698, 96
    %1700 = vset.pattern.permute.xlu0 %v1699
    %1701 = vperm.xlu0 %1700, %v1624
    %v1702 = vpop.permute.xlu0 %1701
    %v1703 = vlaneseq
    %v1704 = vshrl.u32 %v1703, 7
    %v1705 = vadd.s32 %v1704, 104
    %1706 = vset.pattern.permute.xlu0 %v1705
    %1707 = vperm.xlu0 %1706, %v1624
    %v1708 = vpop.permute.xlu0 %1707
    %v1709 = vlaneseq
    %v1710 = vshrl.u32 %v1709, 7
    %v1711 = vadd.s32 %v1710, 112
    %1712 = vset.pattern.permute.xlu0 %v1711
    %1713 = vperm.xlu0 %1712, %v1624
    %v1714 = vpop.permute.xlu0 %1713
    %v1715 = vlaneseq
    %v1716 = vshrl.u32 %v1715, 7
    %v1717 = vadd.s32 %v1716, 120
    %1718 = vset.pattern.permute.xlu0 %v1717
    %1719 = vperm.xlu0 %1718, %v1624
    %v1720 = vpop.permute.xlu0 %1719
    %v1721 = vperm.slane %v362, 6
    %v1722 = vlaneseq
    %v1723 = vshrl.u32 %v1722, 7
    %1725 = vset.pattern.permute.xlu0 %v1723
    %1726 = vperm.xlu0 %1725, %v1721
    %v1727 = vpop.permute.xlu0 %1726
    %v1728 = vlaneseq
    %v1729 = vshrl.u32 %v1728, 7
    %v1730 = vadd.s32 %v1729, 8
    %1731 = vset.pattern.permute.xlu0 %v1730
    %1732 = vperm.xlu0 %1731, %v1721
    %v1733 = vpop.permute.xlu0 %1732
    %v1734 = vlaneseq
    %v1735 = vshrl.u32 %v1734, 7
    %v1736 = vadd.s32 %v1735, 16
    %1737 = vset.pattern.permute.xlu0 %v1736
    %1738 = vperm.xlu0 %1737, %v1721
    %v1739 = vpop.permute.xlu0 %1738
    %v1740 = vlaneseq
    %v1741 = vshrl.u32 %v1740, 7
    %v1742 = vadd.s32 %v1741, 24
    %1743 = vset.pattern.permute.xlu0 %v1742
    %1744 = vperm.xlu0 %1743, %v1721
    %v1745 = vpop.permute.xlu0 %1744
    %v1746 = vlaneseq
    %v1747 = vshrl.u32 %v1746, 7
    %v1748 = vadd.s32 %v1747, 32
    %1749 = vset.pattern.permute.xlu0 %v1748
    %1750 = vperm.xlu0 %1749, %v1721
    %v1751 = vpop.permute.xlu0 %1750
    %v1752 = vlaneseq
    %v1753 = vshrl.u32 %v1752, 7
    %v1754 = vadd.s32 %v1753, 40
    %1755 = vset.pattern.permute.xlu0 %v1754
    %1756 = vperm.xlu0 %1755, %v1721
    %v1757 = vpop.permute.xlu0 %1756
    %v1758 = vlaneseq
    %v1759 = vshrl.u32 %v1758, 7
    %v1760 = vadd.s32 %v1759, 48
    %1761 = vset.pattern.permute.xlu0 %v1760
    %1762 = vperm.xlu0 %1761, %v1721
    %v1763 = vpop.permute.xlu0 %1762
    %v1764 = vlaneseq
    %v1765 = vshrl.u32 %v1764, 7
    %v1766 = vadd.s32 %v1765, 56
    %1767 = vset.pattern.permute.xlu0 %v1766
    %1768 = vperm.xlu0 %1767, %v1721
    %v1769 = vpop.permute.xlu0 %1768
    %v1770 = vlaneseq
    %v1771 = vshrl.u32 %v1770, 7
    %v1772 = vadd.s32 %v1771, 64
    %1773 = vset.pattern.permute.xlu0 %v1772
    %1774 = vperm.xlu0 %1773, %v1721
    %v1775 = vpop.permute.xlu0 %1774
    %v1776 = vlaneseq
    %v1777 = vshrl.u32 %v1776, 7
    %v1778 = vadd.s32 %v1777, 72
    %1779 = vset.pattern.permute.xlu0 %v1778
    %1780 = vperm.xlu0 %1779, %v1721
    %v1781 = vpop.permute.xlu0 %1780
    %v1782 = vlaneseq
    %v1783 = vshrl.u32 %v1782, 7
    %v1784 = vadd.s32 %v1783, 80
    %1785 = vset.pattern.permute.xlu0 %v1784
    %1786 = vperm.xlu0 %1785, %v1721
    %v1787 = vpop.permute.xlu0 %1786
    %v1788 = vlaneseq
    %v1789 = vshrl.u32 %v1788, 7
    %v1790 = vadd.s32 %v1789, 88
    %1791 = vset.pattern.permute.xlu0 %v1790
    %1792 = vperm.xlu0 %1791, %v1721
    %v1793 = vpop.permute.xlu0 %1792
    %v1794 = vlaneseq
    %v1795 = vshrl.u32 %v1794, 7
    %v1796 = vadd.s32 %v1795, 96
    %1797 = vset.pattern.permute.xlu0 %v1796
    %1798 = vperm.xlu0 %1797, %v1721
    %v1799 = vpop.permute.xlu0 %1798
    %v1800 = vlaneseq
    %v1801 = vshrl.u32 %v1800, 7
    %v1802 = vadd.s32 %v1801, 104
    %1803 = vset.pattern.permute.xlu0 %v1802
    %1804 = vperm.xlu0 %1803, %v1721
    %v1805 = vpop.permute.xlu0 %1804
    %v1806 = vlaneseq
    %v1807 = vshrl.u32 %v1806, 7
    %v1808 = vadd.s32 %v1807, 112
    %1809 = vset.pattern.permute.xlu0 %v1808
    %1810 = vperm.xlu0 %1809, %v1721
    %v1811 = vpop.permute.xlu0 %1810
    %v1812 = vlaneseq
    %v1813 = vshrl.u32 %v1812, 7
    %v1814 = vadd.s32 %v1813, 120
    %1815 = vset.pattern.permute.xlu0 %v1814
    %1816 = vperm.xlu0 %1815, %v1721
    %v1817 = vpop.permute.xlu0 %1816
    %v1818 = vperm.slane %v362, 7
    %v1819 = vlaneseq
    %v1820 = vshrl.u32 %v1819, 7
    %1822 = vset.pattern.permute.xlu0 %v1820
    %1823 = vperm.xlu0 %1822, %v1818
    %v1824 = vpop.permute.xlu0 %1823
    %v1825 = vlaneseq
    %v1826 = vshrl.u32 %v1825, 7
    %v1827 = vadd.s32 %v1826, 8
    %1828 = vset.pattern.permute.xlu0 %v1827
    %1829 = vperm.xlu0 %1828, %v1818
    %v1830 = vpop.permute.xlu0 %1829
    %v1831 = vlaneseq
    %v1832 = vshrl.u32 %v1831, 7
    %v1833 = vadd.s32 %v1832, 16
    %1834 = vset.pattern.permute.xlu0 %v1833
    %1835 = vperm.xlu0 %1834, %v1818
    %v1836 = vpop.permute.xlu0 %1835
    %v1837 = vlaneseq
    %v1838 = vshrl.u32 %v1837, 7
    %v1839 = vadd.s32 %v1838, 24
    %1840 = vset.pattern.permute.xlu0 %v1839
    %1841 = vperm.xlu0 %1840, %v1818
    %v1842 = vpop.permute.xlu0 %1841
    %v1843 = vlaneseq
    %v1844 = vshrl.u32 %v1843, 7
    %v1845 = vadd.s32 %v1844, 32
    %1846 = vset.pattern.permute.xlu0 %v1845
    %1847 = vperm.xlu0 %1846, %v1818
    %v1848 = vpop.permute.xlu0 %1847
    %v1849 = vlaneseq
    %v1850 = vshrl.u32 %v1849, 7
    %v1851 = vadd.s32 %v1850, 40
    %1852 = vset.pattern.permute.xlu0 %v1851
    %1853 = vperm.xlu0 %1852, %v1818
    %v1854 = vpop.permute.xlu0 %1853
    %v1855 = vlaneseq
    %v1856 = vshrl.u32 %v1855, 7
    %v1857 = vadd.s32 %v1856, 48
    %1858 = vset.pattern.permute.xlu0 %v1857
    %1859 = vperm.xlu0 %1858, %v1818
    %v1860 = vpop.permute.xlu0 %1859
    %v1861 = vlaneseq
    %v1862 = vshrl.u32 %v1861, 7
    %v1863 = vadd.s32 %v1862, 56
    %1864 = vset.pattern.permute.xlu0 %v1863
    %1865 = vperm.xlu0 %1864, %v1818
    %v1866 = vpop.permute.xlu0 %1865
    %v1867 = vlaneseq
    %v1868 = vshrl.u32 %v1867, 7
    %v1869 = vadd.s32 %v1868, 64
    %1870 = vset.pattern.permute.xlu0 %v1869
    %1871 = vperm.xlu0 %1870, %v1818
    %v1872 = vpop.permute.xlu0 %1871
    %v1873 = vlaneseq
    %v1874 = vshrl.u32 %v1873, 7
    %v1875 = vadd.s32 %v1874, 72
    %1876 = vset.pattern.permute.xlu0 %v1875
    %1877 = vperm.xlu0 %1876, %v1818
    %v1878 = vpop.permute.xlu0 %1877
    %v1879 = vlaneseq
    %v1880 = vshrl.u32 %v1879, 7
    %v1881 = vadd.s32 %v1880, 80
    %1882 = vset.pattern.permute.xlu0 %v1881
    %1883 = vperm.xlu0 %1882, %v1818
    %v1884 = vpop.permute.xlu0 %1883
    %v1885 = vlaneseq
    %v1886 = vshrl.u32 %v1885, 7
    %v1887 = vadd.s32 %v1886, 88
    %1888 = vset.pattern.permute.xlu0 %v1887
    %1889 = vperm.xlu0 %1888, %v1818
    %v1890 = vpop.permute.xlu0 %1889
    %v1891 = vlaneseq
    %v1892 = vshrl.u32 %v1891, 7
    %v1893 = vadd.s32 %v1892, 96
    %1894 = vset.pattern.permute.xlu0 %v1893
    %1895 = vperm.xlu0 %1894, %v1818
    %v1896 = vpop.permute.xlu0 %1895
    %v1897 = vlaneseq
    %v1898 = vshrl.u32 %v1897, 7
    %v1899 = vadd.s32 %v1898, 104
    %1900 = vset.pattern.permute.xlu0 %v1899
    %1901 = vperm.xlu0 %1900, %v1818
    %v1902 = vpop.permute.xlu0 %1901
    %v1903 = vlaneseq
    %v1904 = vshrl.u32 %v1903, 7
    %v1905 = vadd.s32 %v1904, 112
    %1906 = vset.pattern.permute.xlu0 %v1905
    %1907 = vperm.xlu0 %1906, %v1818
    %v1908 = vpop.permute.xlu0 %1907
    %v1909 = vlaneseq
    %v1910 = vshrl.u32 %v1909, 7
    %v1911 = vadd.s32 %v1910, 120
    %1912 = vset.pattern.permute.xlu0 %v1911
    %1913 = vperm.xlu0 %1912, %v1818
    %v1914 = vpop.permute.xlu0 %1913
    %v1915 = vperm.slane %v47, 0
    %v1916 = vlaneseq
    %v1917 = vshrl.u32 %v1916, 7
    %1919 = vset.pattern.permute.xlu0 %v1917
    %1920 = vperm.xlu0 %1919, %v1915
    %v1921 = vpop.permute.xlu0 %1920
    %v1922 = vlaneseq
    %v1923 = vshrl.u32 %v1922, 7
    %v1924 = vadd.s32 %v1923, 8
    %1925 = vset.pattern.permute.xlu0 %v1924
    %1926 = vperm.xlu0 %1925, %v1915
    %v1927 = vpop.permute.xlu0 %1926
    %v1928 = vlaneseq
    %v1929 = vshrl.u32 %v1928, 7
    %v1930 = vadd.s32 %v1929, 16
    %1931 = vset.pattern.permute.xlu0 %v1930
    %1932 = vperm.xlu0 %1931, %v1915
    %v1933 = vpop.permute.xlu0 %1932
    %v1934 = vlaneseq
    %v1935 = vshrl.u32 %v1934, 7
    %v1936 = vadd.s32 %v1935, 24
    %1937 = vset.pattern.permute.xlu0 %v1936
    %1938 = vperm.xlu0 %1937, %v1915
    %v1939 = vpop.permute.xlu0 %1938
    %v1940 = vlaneseq
    %v1941 = vshrl.u32 %v1940, 7
    %v1942 = vadd.s32 %v1941, 32
    %1943 = vset.pattern.permute.xlu0 %v1942
    %1944 = vperm.xlu0 %1943, %v1915
    %v1945 = vpop.permute.xlu0 %1944
    %v1946 = vlaneseq
    %v1947 = vshrl.u32 %v1946, 7
    %v1948 = vadd.s32 %v1947, 40
    %1949 = vset.pattern.permute.xlu0 %v1948
    %1950 = vperm.xlu0 %1949, %v1915
    %v1951 = vpop.permute.xlu0 %1950
    %v1952 = vlaneseq
    %v1953 = vshrl.u32 %v1952, 7
    %v1954 = vadd.s32 %v1953, 48
    %1955 = vset.pattern.permute.xlu0 %v1954
    %1956 = vperm.xlu0 %1955, %v1915
    %v1957 = vpop.permute.xlu0 %1956
    %v1958 = vlaneseq
    %v1959 = vshrl.u32 %v1958, 7
    %v1960 = vadd.s32 %v1959, 56
    %1961 = vset.pattern.permute.xlu0 %v1960
    %1962 = vperm.xlu0 %1961, %v1915
    %v1963 = vpop.permute.xlu0 %1962
    %v1964 = vlaneseq
    %v1965 = vshrl.u32 %v1964, 7
    %v1966 = vadd.s32 %v1965, 64
    %1967 = vset.pattern.permute.xlu0 %v1966
    %1968 = vperm.xlu0 %1967, %v1915
    %v1969 = vpop.permute.xlu0 %1968
    %v1970 = vlaneseq
    %v1971 = vshrl.u32 %v1970, 7
    %v1972 = vadd.s32 %v1971, 72
    %1973 = vset.pattern.permute.xlu0 %v1972
    %1974 = vperm.xlu0 %1973, %v1915
    %v1975 = vpop.permute.xlu0 %1974
    %v1976 = vlaneseq
    %v1977 = vshrl.u32 %v1976, 7
    %v1978 = vadd.s32 %v1977, 80
    %1979 = vset.pattern.permute.xlu0 %v1978
    %1980 = vperm.xlu0 %1979, %v1915
    %v1981 = vpop.permute.xlu0 %1980
    %v1982 = vlaneseq
    %v1983 = vshrl.u32 %v1982, 7
    %v1984 = vadd.s32 %v1983, 88
    %1985 = vset.pattern.permute.xlu0 %v1984
    %1986 = vperm.xlu0 %1985, %v1915
    %v1987 = vpop.permute.xlu0 %1986
    %v1988 = vlaneseq
    %v1989 = vshrl.u32 %v1988, 7
    %v1990 = vadd.s32 %v1989, 96
    %1991 = vset.pattern.permute.xlu0 %v1990
    %1992 = vperm.xlu0 %1991, %v1915
    %v1993 = vpop.permute.xlu0 %1992
    %v1994 = vlaneseq
    %v1995 = vshrl.u32 %v1994, 7
    %v1996 = vadd.s32 %v1995, 104
    %1997 = vset.pattern.permute.xlu0 %v1996
    %1998 = vperm.xlu0 %1997, %v1915
    %v1999 = vpop.permute.xlu0 %1998
    %v2000 = vlaneseq
    %v2001 = vshrl.u32 %v2000, 7
    %v2002 = vadd.s32 %v2001, 112
    %2003 = vset.pattern.permute.xlu0 %v2002
    %2004 = vperm.xlu0 %2003, %v1915
    %v2005 = vpop.permute.xlu0 %2004
    %v2006 = vlaneseq
    %v2007 = vshrl.u32 %v2006, 7
    %v2008 = vadd.s32 %v2007, 120
    %2009 = vset.pattern.permute.xlu0 %v2008
    %2010 = vperm.xlu0 %2009, %v1915
    %v2011 = vpop.permute.xlu0 %2010
    %v2012 = vperm.slane %v47, 1
    %v2013 = vlaneseq
    %v2014 = vshrl.u32 %v2013, 7
    %2016 = vset.pattern.permute.xlu0 %v2014
    %2017 = vperm.xlu0 %2016, %v2012
    %v2018 = vpop.permute.xlu0 %2017
    %v2019 = vlaneseq
    %v2020 = vshrl.u32 %v2019, 7
    %v2021 = vadd.s32 %v2020, 8
    %2022 = vset.pattern.permute.xlu0 %v2021
    %2023 = vperm.xlu0 %2022, %v2012
    %v2024 = vpop.permute.xlu0 %2023
    %v2025 = vlaneseq
    %v2026 = vshrl.u32 %v2025, 7
    %v2027 = vadd.s32 %v2026, 16
    %2028 = vset.pattern.permute.xlu0 %v2027
    %2029 = vperm.xlu0 %2028, %v2012
    %v2030 = vpop.permute.xlu0 %2029
    %v2031 = vlaneseq
    %v2032 = vshrl.u32 %v2031, 7
    %v2033 = vadd.s32 %v2032, 24
    %2034 = vset.pattern.permute.xlu0 %v2033
    %2035 = vperm.xlu0 %2034, %v2012
    %v2036 = vpop.permute.xlu0 %2035
    %v2037 = vlaneseq
    %v2038 = vshrl.u32 %v2037, 7
    %v2039 = vadd.s32 %v2038, 32
    %2040 = vset.pattern.permute.xlu0 %v2039
    %2041 = vperm.xlu0 %2040, %v2012
    %v2042 = vpop.permute.xlu0 %2041
    %v2043 = vlaneseq
    %v2044 = vshrl.u32 %v2043, 7
    %v2045 = vadd.s32 %v2044, 40
    %2046 = vset.pattern.permute.xlu0 %v2045
    %2047 = vperm.xlu0 %2046, %v2012
    %v2048 = vpop.permute.xlu0 %2047
    %v2049 = vlaneseq
    %v2050 = vshrl.u32 %v2049, 7
    %v2051 = vadd.s32 %v2050, 48
    %2052 = vset.pattern.permute.xlu0 %v2051
    %2053 = vperm.xlu0 %2052, %v2012
    %v2054 = vpop.permute.xlu0 %2053
    %v2055 = vlaneseq
    %v2056 = vshrl.u32 %v2055, 7
    %v2057 = vadd.s32 %v2056, 56
    %2058 = vset.pattern.permute.xlu0 %v2057
    %2059 = vperm.xlu0 %2058, %v2012
    %v2060 = vpop.permute.xlu0 %2059
    %v2061 = vlaneseq
    %v2062 = vshrl.u32 %v2061, 7
    %v2063 = vadd.s32 %v2062, 64
    %2064 = vset.pattern.permute.xlu0 %v2063
    %2065 = vperm.xlu0 %2064, %v2012
    %v2066 = vpop.permute.xlu0 %2065
    %v2067 = vlaneseq
    %v2068 = vshrl.u32 %v2067, 7
    %v2069 = vadd.s32 %v2068, 72
    %2070 = vset.pattern.permute.xlu0 %v2069
    %2071 = vperm.xlu0 %2070, %v2012
    %v2072 = vpop.permute.xlu0 %2071
    %v2073 = vlaneseq
    %v2074 = vshrl.u32 %v2073, 7
    %v2075 = vadd.s32 %v2074, 80
    %2076 = vset.pattern.permute.xlu0 %v2075
    %2077 = vperm.xlu0 %2076, %v2012
    %v2078 = vpop.permute.xlu0 %2077
    %v2079 = vlaneseq
    %v2080 = vshrl.u32 %v2079, 7
    %v2081 = vadd.s32 %v2080, 88
    %2082 = vset.pattern.permute.xlu0 %v2081
    %2083 = vperm.xlu0 %2082, %v2012
    %v2084 = vpop.permute.xlu0 %2083
    %v2085 = vlaneseq
    %v2086 = vshrl.u32 %v2085, 7
    %v2087 = vadd.s32 %v2086, 96
    %2088 = vset.pattern.permute.xlu0 %v2087
    %2089 = vperm.xlu0 %2088, %v2012
    %v2090 = vpop.permute.xlu0 %2089
    %v2091 = vlaneseq
    %v2092 = vshrl.u32 %v2091, 7
    %v2093 = vadd.s32 %v2092, 104
    %2094 = vset.pattern.permute.xlu0 %v2093
    %2095 = vperm.xlu0 %2094, %v2012
    %v2096 = vpop.permute.xlu0 %2095
    %v2097 = vlaneseq
    %v2098 = vshrl.u32 %v2097, 7
    %v2099 = vadd.s32 %v2098, 112
    %2100 = vset.pattern.permute.xlu0 %v2099
    %2101 = vperm.xlu0 %2100, %v2012
    %v2102 = vpop.permute.xlu0 %2101
    %v2103 = vlaneseq
    %v2104 = vshrl.u32 %v2103, 7
    %v2105 = vadd.s32 %v2104, 120
    %2106 = vset.pattern.permute.xlu0 %v2105
    %2107 = vperm.xlu0 %2106, %v2012
    %v2108 = vpop.permute.xlu0 %2107
    %v2109 = vperm.slane %v47, 2
    %v2110 = vlaneseq
    %v2111 = vshrl.u32 %v2110, 7
    %2113 = vset.pattern.permute.xlu0 %v2111
    %2114 = vperm.xlu0 %2113, %v2109
    %v2115 = vpop.permute.xlu0 %2114
    %v2116 = vlaneseq
    %v2117 = vshrl.u32 %v2116, 7
    %v2118 = vadd.s32 %v2117, 8
    %2119 = vset.pattern.permute.xlu0 %v2118
    %2120 = vperm.xlu0 %2119, %v2109
    %v2121 = vpop.permute.xlu0 %2120
    %v2122 = vlaneseq
    %v2123 = vshrl.u32 %v2122, 7
    %v2124 = vadd.s32 %v2123, 16
    %2125 = vset.pattern.permute.xlu0 %v2124
    %2126 = vperm.xlu0 %2125, %v2109
    %v2127 = vpop.permute.xlu0 %2126
    %v2128 = vlaneseq
    %v2129 = vshrl.u32 %v2128, 7
    %v2130 = vadd.s32 %v2129, 24
    %2131 = vset.pattern.permute.xlu0 %v2130
    %2132 = vperm.xlu0 %2131, %v2109
    %v2133 = vpop.permute.xlu0 %2132
    %v2134 = vlaneseq
    %v2135 = vshrl.u32 %v2134, 7
    %v2136 = vadd.s32 %v2135, 32
    %2137 = vset.pattern.permute.xlu0 %v2136
    %2138 = vperm.xlu0 %2137, %v2109
    %v2139 = vpop.permute.xlu0 %2138
    %v2140 = vlaneseq
    %v2141 = vshrl.u32 %v2140, 7
    %v2142 = vadd.s32 %v2141, 40
    %2143 = vset.pattern.permute.xlu0 %v2142
    %2144 = vperm.xlu0 %2143, %v2109
    %v2145 = vpop.permute.xlu0 %2144
    %v2146 = vlaneseq
    %v2147 = vshrl.u32 %v2146, 7
    %v2148 = vadd.s32 %v2147, 48
    %2149 = vset.pattern.permute.xlu0 %v2148
    %2150 = vperm.xlu0 %2149, %v2109
    %v2151 = vpop.permute.xlu0 %2150
    %v2152 = vlaneseq
    %v2153 = vshrl.u32 %v2152, 7
    %v2154 = vadd.s32 %v2153, 56
    %2155 = vset.pattern.permute.xlu0 %v2154
    %2156 = vperm.xlu0 %2155, %v2109
    %v2157 = vpop.permute.xlu0 %2156
    %v2158 = vlaneseq
    %v2159 = vshrl.u32 %v2158, 7
    %v2160 = vadd.s32 %v2159, 64
    %2161 = vset.pattern.permute.xlu0 %v2160
    %2162 = vperm.xlu0 %2161, %v2109
    %v2163 = vpop.permute.xlu0 %2162
    %v2164 = vlaneseq
    %v2165 = vshrl.u32 %v2164, 7
    %v2166 = vadd.s32 %v2165, 72
    %2167 = vset.pattern.permute.xlu0 %v2166
    %2168 = vperm.xlu0 %2167, %v2109
    %v2169 = vpop.permute.xlu0 %2168
    %v2170 = vlaneseq
    %v2171 = vshrl.u32 %v2170, 7
    %v2172 = vadd.s32 %v2171, 80
    %2173 = vset.pattern.permute.xlu0 %v2172
    %2174 = vperm.xlu0 %2173, %v2109
    %v2175 = vpop.permute.xlu0 %2174
    %v2176 = vlaneseq
    %v2177 = vshrl.u32 %v2176, 7
    %v2178 = vadd.s32 %v2177, 88
    %2179 = vset.pattern.permute.xlu0 %v2178
    %2180 = vperm.xlu0 %2179, %v2109
    %v2181 = vpop.permute.xlu0 %2180
    %v2182 = vlaneseq
    %v2183 = vshrl.u32 %v2182, 7
    %v2184 = vadd.s32 %v2183, 96
    %2185 = vset.pattern.permute.xlu0 %v2184
    %2186 = vperm.xlu0 %2185, %v2109
    %v2187 = vpop.permute.xlu0 %2186
    %v2188 = vlaneseq
    %v2189 = vshrl.u32 %v2188, 7
    %v2190 = vadd.s32 %v2189, 104
    %2191 = vset.pattern.permute.xlu0 %v2190
    %2192 = vperm.xlu0 %2191, %v2109
    %v2193 = vpop.permute.xlu0 %2192
    %v2194 = vlaneseq
    %v2195 = vshrl.u32 %v2194, 7
    %v2196 = vadd.s32 %v2195, 112
    %2197 = vset.pattern.permute.xlu0 %v2196
    %2198 = vperm.xlu0 %2197, %v2109
    %v2199 = vpop.permute.xlu0 %2198
    %v2200 = vlaneseq
    %v2201 = vshrl.u32 %v2200, 7
    %v2202 = vadd.s32 %v2201, 120
    %2203 = vset.pattern.permute.xlu0 %v2202
    %2204 = vperm.xlu0 %2203, %v2109
    %v2205 = vpop.permute.xlu0 %2204
    %v2206 = vperm.slane %v47, 3
    %v2207 = vlaneseq
    %v2208 = vshrl.u32 %v2207, 7
    %2210 = vset.pattern.permute.xlu0 %v2208
    %2211 = vperm.xlu0 %2210, %v2206
    %v2212 = vpop.permute.xlu0 %2211
    %v2213 = vlaneseq
    %v2214 = vshrl.u32 %v2213, 7
    %v2215 = vadd.s32 %v2214, 8
    %2216 = vset.pattern.permute.xlu0 %v2215
    %2217 = vperm.xlu0 %2216, %v2206
    %v2218 = vpop.permute.xlu0 %2217
    %v2219 = vlaneseq
    %v2220 = vshrl.u32 %v2219, 7
    %v2221 = vadd.s32 %v2220, 16
    %2222 = vset.pattern.permute.xlu0 %v2221
    %2223 = vperm.xlu0 %2222, %v2206
    %v2224 = vpop.permute.xlu0 %2223
    %v2225 = vlaneseq
    %v2226 = vshrl.u32 %v2225, 7
    %v2227 = vadd.s32 %v2226, 24
    %2228 = vset.pattern.permute.xlu0 %v2227
    %2229 = vperm.xlu0 %2228, %v2206
    %v2230 = vpop.permute.xlu0 %2229
    %v2231 = vlaneseq
    %v2232 = vshrl.u32 %v2231, 7
    %v2233 = vadd.s32 %v2232, 32
    %2234 = vset.pattern.permute.xlu0 %v2233
    %2235 = vperm.xlu0 %2234, %v2206
    %v2236 = vpop.permute.xlu0 %2235
    %v2237 = vlaneseq
    %v2238 = vshrl.u32 %v2237, 7
    %v2239 = vadd.s32 %v2238, 40
    %2240 = vset.pattern.permute.xlu0 %v2239
    %2241 = vperm.xlu0 %2240, %v2206
    %v2242 = vpop.permute.xlu0 %2241
    %v2243 = vlaneseq
    %v2244 = vshrl.u32 %v2243, 7
    %v2245 = vadd.s32 %v2244, 48
    %2246 = vset.pattern.permute.xlu0 %v2245
    %2247 = vperm.xlu0 %2246, %v2206
    %v2248 = vpop.permute.xlu0 %2247
    %v2249 = vlaneseq
    %v2250 = vshrl.u32 %v2249, 7
    %v2251 = vadd.s32 %v2250, 56
    %2252 = vset.pattern.permute.xlu0 %v2251
    %2253 = vperm.xlu0 %2252, %v2206
    %v2254 = vpop.permute.xlu0 %2253
    %v2255 = vlaneseq
    %v2256 = vshrl.u32 %v2255, 7
    %v2257 = vadd.s32 %v2256, 64
    %2258 = vset.pattern.permute.xlu0 %v2257
    %2259 = vperm.xlu0 %2258, %v2206
    %v2260 = vpop.permute.xlu0 %2259
    %v2261 = vlaneseq
    %v2262 = vshrl.u32 %v2261, 7
    %v2263 = vadd.s32 %v2262, 72
    %2264 = vset.pattern.permute.xlu0 %v2263
    %2265 = vperm.xlu0 %2264, %v2206
    %v2266 = vpop.permute.xlu0 %2265
    %v2267 = vlaneseq
    %v2268 = vshrl.u32 %v2267, 7
    %v2269 = vadd.s32 %v2268, 80
    %2270 = vset.pattern.permute.xlu0 %v2269
    %2271 = vperm.xlu0 %2270, %v2206
    %v2272 = vpop.permute.xlu0 %2271
    %v2273 = vlaneseq
    %v2274 = vshrl.u32 %v2273, 7
    %v2275 = vadd.s32 %v2274, 88
    %2276 = vset.pattern.permute.xlu0 %v2275
    %2277 = vperm.xlu0 %2276, %v2206
    %v2278 = vpop.permute.xlu0 %2277
    %v2279 = vlaneseq
    %v2280 = vshrl.u32 %v2279, 7
    %v2281 = vadd.s32 %v2280, 96
    %2282 = vset.pattern.permute.xlu0 %v2281
    %2283 = vperm.xlu0 %2282, %v2206
    %v2284 = vpop.permute.xlu0 %2283
    %v2285 = vlaneseq
    %v2286 = vshrl.u32 %v2285, 7
    %v2287 = vadd.s32 %v2286, 104
    %2288 = vset.pattern.permute.xlu0 %v2287
    %2289 = vperm.xlu0 %2288, %v2206
    %v2290 = vpop.permute.xlu0 %2289
    %v2291 = vlaneseq
    %v2292 = vshrl.u32 %v2291, 7
    %v2293 = vadd.s32 %v2292, 112
    %2294 = vset.pattern.permute.xlu0 %v2293
    %2295 = vperm.xlu0 %2294, %v2206
    %v2296 = vpop.permute.xlu0 %2295
    %v2297 = vlaneseq
    %v2298 = vshrl.u32 %v2297, 7
    %v2299 = vadd.s32 %v2298, 120
    %2300 = vset.pattern.permute.xlu0 %v2299
    %2301 = vperm.xlu0 %2300, %v2206
    %v2302 = vpop.permute.xlu0 %2301
    %v2303 = vperm.slane %v47, 4
    %v2304 = vlaneseq
    %v2305 = vshrl.u32 %v2304, 7
    %2307 = vset.pattern.permute.xlu0 %v2305
    %2308 = vperm.xlu0 %2307, %v2303
    %v2309 = vpop.permute.xlu0 %2308
    %v2310 = vlaneseq
    %v2311 = vshrl.u32 %v2310, 7
    %v2312 = vadd.s32 %v2311, 8
    %2313 = vset.pattern.permute.xlu0 %v2312
    %2314 = vperm.xlu0 %2313, %v2303
    %v2315 = vpop.permute.xlu0 %2314
    %v2316 = vlaneseq
    %v2317 = vshrl.u32 %v2316, 7
    %v2318 = vadd.s32 %v2317, 16
    %2319 = vset.pattern.permute.xlu0 %v2318
    %2320 = vperm.xlu0 %2319, %v2303
    %v2321 = vpop.permute.xlu0 %2320
    %v2322 = vlaneseq
    %v2323 = vshrl.u32 %v2322, 7
    %v2324 = vadd.s32 %v2323, 24
    %2325 = vset.pattern.permute.xlu0 %v2324
    %2326 = vperm.xlu0 %2325, %v2303
    %v2327 = vpop.permute.xlu0 %2326
    %v2328 = vlaneseq
    %v2329 = vshrl.u32 %v2328, 7
    %v2330 = vadd.s32 %v2329, 32
    %2331 = vset.pattern.permute.xlu0 %v2330
    %2332 = vperm.xlu0 %2331, %v2303
    %v2333 = vpop.permute.xlu0 %2332
    %v2334 = vlaneseq
    %v2335 = vshrl.u32 %v2334, 7
    %v2336 = vadd.s32 %v2335, 40
    %2337 = vset.pattern.permute.xlu0 %v2336
    %2338 = vperm.xlu0 %2337, %v2303
    %v2339 = vpop.permute.xlu0 %2338
    %v2340 = vlaneseq
    %v2341 = vshrl.u32 %v2340, 7
    %v2342 = vadd.s32 %v2341, 48
    %2343 = vset.pattern.permute.xlu0 %v2342
    %2344 = vperm.xlu0 %2343, %v2303
    %v2345 = vpop.permute.xlu0 %2344
    %v2346 = vlaneseq
    %v2347 = vshrl.u32 %v2346, 7
    %v2348 = vadd.s32 %v2347, 56
    %2349 = vset.pattern.permute.xlu0 %v2348
    %2350 = vperm.xlu0 %2349, %v2303
    %v2351 = vpop.permute.xlu0 %2350
    %v2352 = vlaneseq
    %v2353 = vshrl.u32 %v2352, 7
    %v2354 = vadd.s32 %v2353, 64
    %2355 = vset.pattern.permute.xlu0 %v2354
    %2356 = vperm.xlu0 %2355, %v2303
    %v2357 = vpop.permute.xlu0 %2356
    %v2358 = vlaneseq
    %v2359 = vshrl.u32 %v2358, 7
    %v2360 = vadd.s32 %v2359, 72
    %2361 = vset.pattern.permute.xlu0 %v2360
    %2362 = vperm.xlu0 %2361, %v2303
    %v2363 = vpop.permute.xlu0 %2362
    %v2364 = vlaneseq
    %v2365 = vshrl.u32 %v2364, 7
    %v2366 = vadd.s32 %v2365, 80
    %2367 = vset.pattern.permute.xlu0 %v2366
    %2368 = vperm.xlu0 %2367, %v2303
    %v2369 = vpop.permute.xlu0 %2368
    %v2370 = vlaneseq
    %v2371 = vshrl.u32 %v2370, 7
    %v2372 = vadd.s32 %v2371, 88
    %2373 = vset.pattern.permute.xlu0 %v2372
    %2374 = vperm.xlu0 %2373, %v2303
    %v2375 = vpop.permute.xlu0 %2374
    %v2376 = vlaneseq
    %v2377 = vshrl.u32 %v2376, 7
    %v2378 = vadd.s32 %v2377, 96
    %2379 = vset.pattern.permute.xlu0 %v2378
    %2380 = vperm.xlu0 %2379, %v2303
    %v2381 = vpop.permute.xlu0 %2380
    %v2382 = vlaneseq
    %v2383 = vshrl.u32 %v2382, 7
    %v2384 = vadd.s32 %v2383, 104
    %2385 = vset.pattern.permute.xlu0 %v2384
    %2386 = vperm.xlu0 %2385, %v2303
    %v2387 = vpop.permute.xlu0 %2386
    %v2388 = vlaneseq
    %v2389 = vshrl.u32 %v2388, 7
    %v2390 = vadd.s32 %v2389, 112
    %2391 = vset.pattern.permute.xlu0 %v2390
    %2392 = vperm.xlu0 %2391, %v2303
    %v2393 = vpop.permute.xlu0 %2392
    %v2394 = vlaneseq
    %v2395 = vshrl.u32 %v2394, 7
    %v2396 = vadd.s32 %v2395, 120
    %2397 = vset.pattern.permute.xlu0 %v2396
    %2398 = vperm.xlu0 %2397, %v2303
    %v2399 = vpop.permute.xlu0 %2398
    %v2400 = vperm.slane %v47, 5
    %v2401 = vlaneseq
    %v2402 = vshrl.u32 %v2401, 7
    %2404 = vset.pattern.permute.xlu0 %v2402
    %2405 = vperm.xlu0 %2404, %v2400
    %v2406 = vpop.permute.xlu0 %2405
    %v2407 = vlaneseq
    %v2408 = vshrl.u32 %v2407, 7
    %v2409 = vadd.s32 %v2408, 8
    %2410 = vset.pattern.permute.xlu0 %v2409
    %2411 = vperm.xlu0 %2410, %v2400
    %v2412 = vpop.permute.xlu0 %2411
    %v2413 = vlaneseq
    %v2414 = vshrl.u32 %v2413, 7
    %v2415 = vadd.s32 %v2414, 16
    %2416 = vset.pattern.permute.xlu0 %v2415
    %2417 = vperm.xlu0 %2416, %v2400
    %v2418 = vpop.permute.xlu0 %2417
    %v2419 = vlaneseq
    %v2420 = vshrl.u32 %v2419, 7
    %v2421 = vadd.s32 %v2420, 24
    %2422 = vset.pattern.permute.xlu0 %v2421
    %2423 = vperm.xlu0 %2422, %v2400
    %v2424 = vpop.permute.xlu0 %2423
    %v2425 = vlaneseq
    %v2426 = vshrl.u32 %v2425, 7
    %v2427 = vadd.s32 %v2426, 32
    %2428 = vset.pattern.permute.xlu0 %v2427
    %2429 = vperm.xlu0 %2428, %v2400
    %v2430 = vpop.permute.xlu0 %2429
    %v2431 = vlaneseq
    %v2432 = vshrl.u32 %v2431, 7
    %v2433 = vadd.s32 %v2432, 40
    %2434 = vset.pattern.permute.xlu0 %v2433
    %2435 = vperm.xlu0 %2434, %v2400
    %v2436 = vpop.permute.xlu0 %2435
    %v2437 = vlaneseq
    %v2438 = vshrl.u32 %v2437, 7
    %v2439 = vadd.s32 %v2438, 48
    %2440 = vset.pattern.permute.xlu0 %v2439
    %2441 = vperm.xlu0 %2440, %v2400
    %v2442 = vpop.permute.xlu0 %2441
    %v2443 = vlaneseq
    %v2444 = vshrl.u32 %v2443, 7
    %v2445 = vadd.s32 %v2444, 56
    %2446 = vset.pattern.permute.xlu0 %v2445
    %2447 = vperm.xlu0 %2446, %v2400
    %v2448 = vpop.permute.xlu0 %2447
    %v2449 = vlaneseq
    %v2450 = vshrl.u32 %v2449, 7
    %v2451 = vadd.s32 %v2450, 64
    %2452 = vset.pattern.permute.xlu0 %v2451
    %2453 = vperm.xlu0 %2452, %v2400
    %v2454 = vpop.permute.xlu0 %2453
    %v2455 = vlaneseq
    %v2456 = vshrl.u32 %v2455, 7
    %v2457 = vadd.s32 %v2456, 72
    %2458 = vset.pattern.permute.xlu0 %v2457
    %2459 = vperm.xlu0 %2458, %v2400
    %v2460 = vpop.permute.xlu0 %2459
    %v2461 = vlaneseq
    %v2462 = vshrl.u32 %v2461, 7
    %v2463 = vadd.s32 %v2462, 80
    %2464 = vset.pattern.permute.xlu0 %v2463
    %2465 = vperm.xlu0 %2464, %v2400
    %v2466 = vpop.permute.xlu0 %2465
    %v2467 = vlaneseq
    %v2468 = vshrl.u32 %v2467, 7
    %v2469 = vadd.s32 %v2468, 88
    %2470 = vset.pattern.permute.xlu0 %v2469
    %2471 = vperm.xlu0 %2470, %v2400
    %v2472 = vpop.permute.xlu0 %2471
    %v2473 = vlaneseq
    %v2474 = vshrl.u32 %v2473, 7
    %v2475 = vadd.s32 %v2474, 96
    %2476 = vset.pattern.permute.xlu0 %v2475
    %2477 = vperm.xlu0 %2476, %v2400
    %v2478 = vpop.permute.xlu0 %2477
    %v2479 = vlaneseq
    %v2480 = vshrl.u32 %v2479, 7
    %v2481 = vadd.s32 %v2480, 104
    %2482 = vset.pattern.permute.xlu0 %v2481
    %2483 = vperm.xlu0 %2482, %v2400
    %v2484 = vpop.permute.xlu0 %2483
    %v2485 = vlaneseq
    %v2486 = vshrl.u32 %v2485, 7
    %v2487 = vadd.s32 %v2486, 112
    %2488 = vset.pattern.permute.xlu0 %v2487
    %2489 = vperm.xlu0 %2488, %v2400
    %v2490 = vpop.permute.xlu0 %2489
    %v2491 = vlaneseq
    %v2492 = vshrl.u32 %v2491, 7
    %v2493 = vadd.s32 %v2492, 120
    %2494 = vset.pattern.permute.xlu0 %v2493
    %2495 = vperm.xlu0 %2494, %v2400
    %v2496 = vpop.permute.xlu0 %2495
    %v2497 = vperm.slane %v47, 6
    %v2498 = vlaneseq
    %v2499 = vshrl.u32 %v2498, 7
    %2501 = vset.pattern.permute.xlu0 %v2499
    %2502 = vperm.xlu0 %2501, %v2497
    %v2503 = vpop.permute.xlu0 %2502
    %v2504 = vlaneseq
    %v2505 = vshrl.u32 %v2504, 7
    %v2506 = vadd.s32 %v2505, 8
    %2507 = vset.pattern.permute.xlu0 %v2506
    %2508 = vperm.xlu0 %2507, %v2497
    %v2509 = vpop.permute.xlu0 %2508
    %v2510 = vlaneseq
    %v2511 = vshrl.u32 %v2510, 7
    %v2512 = vadd.s32 %v2511, 16
    %2513 = vset.pattern.permute.xlu0 %v2512
    %2514 = vperm.xlu0 %2513, %v2497
    %v2515 = vpop.permute.xlu0 %2514
    %v2516 = vlaneseq
    %v2517 = vshrl.u32 %v2516, 7
    %v2518 = vadd.s32 %v2517, 24
    %2519 = vset.pattern.permute.xlu0 %v2518
    %2520 = vperm.xlu0 %2519, %v2497
    %v2521 = vpop.permute.xlu0 %2520
    %v2522 = vlaneseq
    %v2523 = vshrl.u32 %v2522, 7
    %v2524 = vadd.s32 %v2523, 32
    %2525 = vset.pattern.permute.xlu0 %v2524
    %2526 = vperm.xlu0 %2525, %v2497
    %v2527 = vpop.permute.xlu0 %2526
    %v2528 = vlaneseq
    %v2529 = vshrl.u32 %v2528, 7
    %v2530 = vadd.s32 %v2529, 40
    %2531 = vset.pattern.permute.xlu0 %v2530
    %2532 = vperm.xlu0 %2531, %v2497
    %v2533 = vpop.permute.xlu0 %2532
    %v2534 = vlaneseq
    %v2535 = vshrl.u32 %v2534, 7
    %v2536 = vadd.s32 %v2535, 48
    %2537 = vset.pattern.permute.xlu0 %v2536
    %2538 = vperm.xlu0 %2537, %v2497
    %v2539 = vpop.permute.xlu0 %2538
    %v2540 = vlaneseq
    %v2541 = vshrl.u32 %v2540, 7
    %v2542 = vadd.s32 %v2541, 56
    %2543 = vset.pattern.permute.xlu0 %v2542
    %2544 = vperm.xlu0 %2543, %v2497
    %v2545 = vpop.permute.xlu0 %2544
    %v2546 = vlaneseq
    %v2547 = vshrl.u32 %v2546, 7
    %v2548 = vadd.s32 %v2547, 64
    %2549 = vset.pattern.permute.xlu0 %v2548
    %2550 = vperm.xlu0 %2549, %v2497
    %v2551 = vpop.permute.xlu0 %2550
    %v2552 = vlaneseq
    %v2553 = vshrl.u32 %v2552, 7
    %v2554 = vadd.s32 %v2553, 72
    %2555 = vset.pattern.permute.xlu0 %v2554
    %2556 = vperm.xlu0 %2555, %v2497
    %v2557 = vpop.permute.xlu0 %2556
    %v2558 = vlaneseq
    %v2559 = vshrl.u32 %v2558, 7
    %v2560 = vadd.s32 %v2559, 80
    %2561 = vset.pattern.permute.xlu0 %v2560
    %2562 = vperm.xlu0 %2561, %v2497
    %v2563 = vpop.permute.xlu0 %2562
    %v2564 = vlaneseq
    %v2565 = vshrl.u32 %v2564, 7
    %v2566 = vadd.s32 %v2565, 88
    %2567 = vset.pattern.permute.xlu0 %v2566
    %2568 = vperm.xlu0 %2567, %v2497
    %v2569 = vpop.permute.xlu0 %2568
    %v2570 = vlaneseq
    %v2571 = vshrl.u32 %v2570, 7
    %v2572 = vadd.s32 %v2571, 96
    %2573 = vset.pattern.permute.xlu0 %v2572
    %2574 = vperm.xlu0 %2573, %v2497
    %v2575 = vpop.permute.xlu0 %2574
    %v2576 = vlaneseq
    %v2577 = vshrl.u32 %v2576, 7
    %v2578 = vadd.s32 %v2577, 104
    %2579 = vset.pattern.permute.xlu0 %v2578
    %2580 = vperm.xlu0 %2579, %v2497
    %v2581 = vpop.permute.xlu0 %2580
    %v2582 = vlaneseq
    %v2583 = vshrl.u32 %v2582, 7
    %v2584 = vadd.s32 %v2583, 112
    %2585 = vset.pattern.permute.xlu0 %v2584
    %2586 = vperm.xlu0 %2585, %v2497
    %v2587 = vpop.permute.xlu0 %2586
    %v2588 = vlaneseq
    %v2589 = vshrl.u32 %v2588, 7
    %v2590 = vadd.s32 %v2589, 120
    %2591 = vset.pattern.permute.xlu0 %v2590
    %2592 = vperm.xlu0 %2591, %v2497
    %v2593 = vpop.permute.xlu0 %2592
    %v2594 = vperm.slane %v47, 7
    %v2595 = vlaneseq
    %v2596 = vshrl.u32 %v2595, 7
    %2598 = vset.pattern.permute.xlu0 %v2596
    %2599 = vperm.xlu0 %2598, %v2594
    %v2600 = vpop.permute.xlu0 %2599
    %v2601 = vlaneseq
    %v2602 = vshrl.u32 %v2601, 7
    %v2603 = vadd.s32 %v2602, 8
    %2604 = vset.pattern.permute.xlu0 %v2603
    %2605 = vperm.xlu0 %2604, %v2594
    %v2606 = vpop.permute.xlu0 %2605
    %v2607 = vlaneseq
    %v2608 = vshrl.u32 %v2607, 7
    %v2609 = vadd.s32 %v2608, 16
    %2610 = vset.pattern.permute.xlu0 %v2609
    %2611 = vperm.xlu0 %2610, %v2594
    %v2612 = vpop.permute.xlu0 %2611
    %v2613 = vlaneseq
    %v2614 = vshrl.u32 %v2613, 7
    %v2615 = vadd.s32 %v2614, 24
    %2616 = vset.pattern.permute.xlu0 %v2615
    %2617 = vperm.xlu0 %2616, %v2594
    %v2618 = vpop.permute.xlu0 %2617
    %v2619 = vlaneseq
    %v2620 = vshrl.u32 %v2619, 7
    %v2621 = vadd.s32 %v2620, 32
    %2622 = vset.pattern.permute.xlu0 %v2621
    %2623 = vperm.xlu0 %2622, %v2594
    %v2624 = vpop.permute.xlu0 %2623
    %v2625 = vlaneseq
    %v2626 = vshrl.u32 %v2625, 7
    %v2627 = vadd.s32 %v2626, 40
    %2628 = vset.pattern.permute.xlu0 %v2627
    %2629 = vperm.xlu0 %2628, %v2594
    %v2630 = vpop.permute.xlu0 %2629
    %v2631 = vlaneseq
    %v2632 = vshrl.u32 %v2631, 7
    %v2633 = vadd.s32 %v2632, 48
    %2634 = vset.pattern.permute.xlu0 %v2633
    %2635 = vperm.xlu0 %2634, %v2594
    %v2636 = vpop.permute.xlu0 %2635
    %v2637 = vlaneseq
    %v2638 = vshrl.u32 %v2637, 7
    %v2639 = vadd.s32 %v2638, 56
    %2640 = vset.pattern.permute.xlu0 %v2639
    %2641 = vperm.xlu0 %2640, %v2594
    %v2642 = vpop.permute.xlu0 %2641
    %v2643 = vlaneseq
    %v2644 = vshrl.u32 %v2643, 7
    %v2645 = vadd.s32 %v2644, 64
    %2646 = vset.pattern.permute.xlu0 %v2645
    %2647 = vperm.xlu0 %2646, %v2594
    %v2648 = vpop.permute.xlu0 %2647
    %v2649 = vlaneseq
    %v2650 = vshrl.u32 %v2649, 7
    %v2651 = vadd.s32 %v2650, 72
    %2652 = vset.pattern.permute.xlu0 %v2651
    %2653 = vperm.xlu0 %2652, %v2594
    %v2654 = vpop.permute.xlu0 %2653
    %v2655 = vlaneseq
    %v2656 = vshrl.u32 %v2655, 7
    %v2657 = vadd.s32 %v2656, 80
    %2658 = vset.pattern.permute.xlu0 %v2657
    %2659 = vperm.xlu0 %2658, %v2594
    %v2660 = vpop.permute.xlu0 %2659
    %v2661 = vlaneseq
    %v2662 = vshrl.u32 %v2661, 7
    %v2663 = vadd.s32 %v2662, 88
    %2664 = vset.pattern.permute.xlu0 %v2663
    %2665 = vperm.xlu0 %2664, %v2594
    %v2666 = vpop.permute.xlu0 %2665
    %v2667 = vlaneseq
    %v2668 = vshrl.u32 %v2667, 7
    %v2669 = vadd.s32 %v2668, 96
    %2670 = vset.pattern.permute.xlu0 %v2669
    %2671 = vperm.xlu0 %2670, %v2594
    %v2672 = vpop.permute.xlu0 %2671
    %v2673 = vlaneseq
    %v2674 = vshrl.u32 %v2673, 7
    %v2675 = vadd.s32 %v2674, 104
    %2676 = vset.pattern.permute.xlu0 %v2675
    %2677 = vperm.xlu0 %2676, %v2594
    %v2678 = vpop.permute.xlu0 %2677
    %v2679 = vlaneseq
    %v2680 = vshrl.u32 %v2679, 7
    %v2681 = vadd.s32 %v2680, 112
    %2682 = vset.pattern.permute.xlu0 %v2681
    %2683 = vperm.xlu0 %2682, %v2594
    %v2684 = vpop.permute.xlu0 %2683
    %v2685 = vlaneseq
    %v2686 = vshrl.u32 %v2685, 7
    %v2687 = vadd.s32 %v2686, 120
    %2688 = vset.pattern.permute.xlu0 %v2687
    %2689 = vperm.xlu0 %2688, %v2594
    %v2690 = vpop.permute.xlu0 %2689
    %vm2691 = vcmask 7168
    %v2692 = vsel %vm2691, %v369, %v1145
    %v2693 = vsel %vm2691, %v375, %v1151
    %v2694 = vsel %vm2691, %v381, %v1157
    %v2695 = vsel %vm2691, %v387, %v1163
    %v2696 = vsel %vm2691, %v393, %v1169
    %v2697 = vsel %vm2691, %v399, %v1175
    %v2698 = vsel %vm2691, %v405, %v1181
    %v2699 = vsel %vm2691, %v411, %v1187
    %v2700 = vsel %vm2691, %v417, %v1193
    %v2701 = vsel %vm2691, %v423, %v1199
    %v2702 = vsel %vm2691, %v429, %v1205
    %v2703 = vsel %vm2691, %v435, %v1211
    %v2704 = vsel %vm2691, %v441, %v1217
    %v2705 = vsel %vm2691, %v447, %v1223
    %v2706 = vsel %vm2691, %v453, %v1229
    %v2707 = vsel %vm2691, %v459, %v1235
    %v2708 = vsel %vm2691, %v466, %v1242
    %v2709 = vsel %vm2691, %v472, %v1248
    %v2710 = vsel %vm2691, %v478, %v1254
    %v2711 = vsel %vm2691, %v484, %v1260
    %v2712 = vsel %vm2691, %v490, %v1266
    %v2713 = vsel %vm2691, %v496, %v1272
    %v2714 = vsel %vm2691, %v502, %v1278
    %v2715 = vsel %vm2691, %v508, %v1284
    %v2716 = vsel %vm2691, %v514, %v1290
    %v2717 = vsel %vm2691, %v520, %v1296
    %v2718 = vsel %vm2691, %v526, %v1302
    %v2719 = vsel %vm2691, %v532, %v1308
    %v2720 = vsel %vm2691, %v538, %v1314
    %v2721 = vsel %vm2691, %v544, %v1320
    %v2722 = vsel %vm2691, %v550, %v1326
    %v2723 = vsel %vm2691, %v556, %v1332
    %v2724 = vsel %vm2691, %v563, %v1339
    %v2725 = vsel %vm2691, %v569, %v1345
    %v2726 = vsel %vm2691, %v575, %v1351
    %v2727 = vsel %vm2691, %v581, %v1357
    %v2728 = vsel %vm2691, %v587, %v1363
    %v2729 = vsel %vm2691, %v593, %v1369
    %v2730 = vsel %vm2691, %v599, %v1375
    %v2731 = vsel %vm2691, %v605, %v1381
    %v2732 = vsel %vm2691, %v611, %v1387
    %v2733 = vsel %vm2691, %v617, %v1393
    %v2734 = vsel %vm2691, %v623, %v1399
    %v2735 = vsel %vm2691, %v629, %v1405
    %v2736 = vsel %vm2691, %v635, %v1411
    %v2737 = vsel %vm2691, %v641, %v1417
    %v2738 = vsel %vm2691, %v647, %v1423
    %v2739 = vsel %vm2691, %v653, %v1429
    %v2740 = vsel %vm2691, %v660, %v1436
    %v2741 = vsel %vm2691, %v666, %v1442
    %v2742 = vsel %vm2691, %v672, %v1448
    %v2743 = vsel %vm2691, %v678, %v1454
    %v2744 = vsel %vm2691, %v684, %v1460
    %v2745 = vsel %vm2691, %v690, %v1466
    %v2746 = vsel %vm2691, %v696, %v1472
    %v2747 = vsel %vm2691, %v702, %v1478
    %v2748 = vsel %vm2691, %v708, %v1484
    %v2749 = vsel %vm2691, %v714, %v1490
    %v2750 = vsel %vm2691, %v720, %v1496
    %v2751 = vsel %vm2691, %v726, %v1502
    %v2752 = vsel %vm2691, %v732, %v1508
    %v2753 = vsel %vm2691, %v738, %v1514
    %v2754 = vsel %vm2691, %v744, %v1520
    %v2755 = vsel %vm2691, %v750, %v1526
    %v2756 = vsel %vm2691, %v757, %v1533
    %v2757 = vsel %vm2691, %v763, %v1539
    %v2758 = vsel %vm2691, %v769, %v1545
    %v2759 = vsel %vm2691, %v775, %v1551
    %v2760 = vsel %vm2691, %v781, %v1557
    %v2761 = vsel %vm2691, %v787, %v1563
    %v2762 = vsel %vm2691, %v793, %v1569
    %v2763 = vsel %vm2691, %v799, %v1575
    %v2764 = vsel %vm2691, %v805, %v1581
    %v2765 = vsel %vm2691, %v811, %v1587
    %v2766 = vsel %vm2691, %v817, %v1593
    %v2767 = vsel %vm2691, %v823, %v1599
    %v2768 = vsel %vm2691, %v829, %v1605
    %v2769 = vsel %vm2691, %v835, %v1611
    %v2770 = vsel %vm2691, %v841, %v1617
    %v2771 = vsel %vm2691, %v847, %v1623
    %v2772 = vsel %vm2691, %v854, %v1630
    %v2773 = vsel %vm2691, %v860, %v1636
    %v2774 = vsel %vm2691, %v866, %v1642
    %v2775 = vsel %vm2691, %v872, %v1648
    %v2776 = vsel %vm2691, %v878, %v1654
    %v2777 = vsel %vm2691, %v884, %v1660
    %v2778 = vsel %vm2691, %v890, %v1666
    %v2779 = vsel %vm2691, %v896, %v1672
    %v2780 = vsel %vm2691, %v902, %v1678
    %v2781 = vsel %vm2691, %v908, %v1684
    %v2782 = vsel %vm2691, %v914, %v1690
    %v2783 = vsel %vm2691, %v920, %v1696
    %v2784 = vsel %vm2691, %v926, %v1702
    %v2785 = vsel %vm2691, %v932, %v1708
    %v2786 = vsel %vm2691, %v938, %v1714
    %v2787 = vsel %vm2691, %v944, %v1720
    %v2788 = vsel %vm2691, %v951, %v1727
    %v2789 = vsel %vm2691, %v957, %v1733
    %v2790 = vsel %vm2691, %v963, %v1739
    %v2791 = vsel %vm2691, %v969, %v1745
    %v2792 = vsel %vm2691, %v975, %v1751
    %v2793 = vsel %vm2691, %v981, %v1757
    %v2794 = vsel %vm2691, %v987, %v1763
    %v2795 = vsel %vm2691, %v993, %v1769
    %v2796 = vsel %vm2691, %v999, %v1775
    %v2797 = vsel %vm2691, %v1005, %v1781
    %v2798 = vsel %vm2691, %v1011, %v1787
    %v2799 = vsel %vm2691, %v1017, %v1793
    %v2800 = vsel %vm2691, %v1023, %v1799
    %v2801 = vsel %vm2691, %v1029, %v1805
    %v2802 = vsel %vm2691, %v1035, %v1811
    %v2803 = vsel %vm2691, %v1041, %v1817
    %v2804 = vsel %vm2691, %v1048, %v1824
    %v2805 = vsel %vm2691, %v1054, %v1830
    %v2806 = vsel %vm2691, %v1060, %v1836
    %v2807 = vsel %vm2691, %v1066, %v1842
    %v2808 = vsel %vm2691, %v1072, %v1848
    %v2809 = vsel %vm2691, %v1078, %v1854
    %v2810 = vsel %vm2691, %v1084, %v1860
    %v2811 = vsel %vm2691, %v1090, %v1866
    %v2812 = vsel %vm2691, %v1096, %v1872
    %v2813 = vsel %vm2691, %v1102, %v1878
    %v2814 = vsel %vm2691, %v1108, %v1884
    %v2815 = vsel %vm2691, %v1114, %v1890
    %v2816 = vsel %vm2691, %v1120, %v1896
    %v2817 = vsel %vm2691, %v1126, %v1902
    %v2818 = vsel %vm2691, %v1132, %v1908
    %v2819 = vsel %vm2691, %v1138, %v1914
    %vm2820 = vcmask 15360
    %v2821 = vsel %vm2820, %v2692, %v1921
    %v2822 = vsel %vm2820, %v2693, %v1927
    %v2823 = vsel %vm2820, %v2694, %v1933
    %v2824 = vsel %vm2820, %v2695, %v1939
    %v2825 = vsel %vm2820, %v2696, %v1945
    %v2826 = vsel %vm2820, %v2697, %v1951
    %v2827 = vsel %vm2820, %v2698, %v1957
    %v2828 = vsel %vm2820, %v2699, %v1963
    %v2829 = vsel %vm2820, %v2700, %v1969
    %v2830 = vsel %vm2820, %v2701, %v1975
    %v2831 = vsel %vm2820, %v2702, %v1981
    %v2832 = vsel %vm2820, %v2703, %v1987
    %v2833 = vsel %vm2820, %v2704, %v1993
    %v2834 = vsel %vm2820, %v2705, %v1999
    %v2835 = vsel %vm2820, %v2706, %v2005
    %v2836 = vsel %vm2820, %v2707, %v2011
    %v2837 = vsel %vm2820, %v2708, %v2018
    %v2838 = vsel %vm2820, %v2709, %v2024
    %v2839 = vsel %vm2820, %v2710, %v2030
    %v2840 = vsel %vm2820, %v2711, %v2036
    %v2841 = vsel %vm2820, %v2712, %v2042
    %v2842 = vsel %vm2820, %v2713, %v2048
    %v2843 = vsel %vm2820, %v2714, %v2054
    %v2844 = vsel %vm2820, %v2715, %v2060
    %v2845 = vsel %vm2820, %v2716, %v2066
    %v2846 = vsel %vm2820, %v2717, %v2072
    %v2847 = vsel %vm2820, %v2718, %v2078
    %v2848 = vsel %vm2820, %v2719, %v2084
    %v2849 = vsel %vm2820, %v2720, %v2090
    %v2850 = vsel %vm2820, %v2721, %v2096
    %v2851 = vsel %vm2820, %v2722, %v2102
    %v2852 = vsel %vm2820, %v2723, %v2108
    %v2853 = vsel %vm2820, %v2724, %v2115
    %v2854 = vsel %vm2820, %v2725, %v2121
    %v2855 = vsel %vm2820, %v2726, %v2127
    %v2856 = vsel %vm2820, %v2727, %v2133
    %v2857 = vsel %vm2820, %v2728, %v2139
    %v2858 = vsel %vm2820, %v2729, %v2145
    %v2859 = vsel %vm2820, %v2730, %v2151
    %v2860 = vsel %vm2820, %v2731, %v2157
    %v2861 = vsel %vm2820, %v2732, %v2163
    %v2862 = vsel %vm2820, %v2733, %v2169
    %v2863 = vsel %vm2820, %v2734, %v2175
    %v2864 = vsel %vm2820, %v2735, %v2181
    %v2865 = vsel %vm2820, %v2736, %v2187
    %v2866 = vsel %vm2820, %v2737, %v2193
    %v2867 = vsel %vm2820, %v2738, %v2199
    %v2868 = vsel %vm2820, %v2739, %v2205
    %v2869 = vsel %vm2820, %v2740, %v2212
    %v2870 = vsel %vm2820, %v2741, %v2218
    %v2871 = vsel %vm2820, %v2742, %v2224
    %v2872 = vsel %vm2820, %v2743, %v2230
    %v2873 = vsel %vm2820, %v2744, %v2236
    %v2874 = vsel %vm2820, %v2745, %v2242
    %v2875 = vsel %vm2820, %v2746, %v2248
    %v2876 = vsel %vm2820, %v2747, %v2254
    %v2877 = vsel %vm2820, %v2748, %v2260
    %v2878 = vsel %vm2820, %v2749, %v2266
    %v2879 = vsel %vm2820, %v2750, %v2272
    %v2880 = vsel %vm2820, %v2751, %v2278
    %v2881 = vsel %vm2820, %v2752, %v2284
    %v2882 = vsel %vm2820, %v2753, %v2290
    %v2883 = vsel %vm2820, %v2754, %v2296
    %v2884 = vsel %vm2820, %v2755, %v2302
    %v2885 = vsel %vm2820, %v2756, %v2309
    %v2886 = vsel %vm2820, %v2757, %v2315
    %v2887 = vsel %vm2820, %v2758, %v2321
    %v2888 = vsel %vm2820, %v2759, %v2327
    %v2889 = vsel %vm2820, %v2760, %v2333
    %v2890 = vsel %vm2820, %v2761, %v2339
    %v2891 = vsel %vm2820, %v2762, %v2345
    %v2892 = vsel %vm2820, %v2763, %v2351
    %v2893 = vsel %vm2820, %v2764, %v2357
    %v2894 = vsel %vm2820, %v2765, %v2363
    %v2895 = vsel %vm2820, %v2766, %v2369
    %v2896 = vsel %vm2820, %v2767, %v2375
    %v2897 = vsel %vm2820, %v2768, %v2381
    %v2898 = vsel %vm2820, %v2769, %v2387
    %v2899 = vsel %vm2820, %v2770, %v2393
    %v2900 = vsel %vm2820, %v2771, %v2399
    %v2901 = vsel %vm2820, %v2772, %v2406
    %v2902 = vsel %vm2820, %v2773, %v2412
    %v2903 = vsel %vm2820, %v2774, %v2418
    %v2904 = vsel %vm2820, %v2775, %v2424
    %v2905 = vsel %vm2820, %v2776, %v2430
    %v2906 = vsel %vm2820, %v2777, %v2436
    %v2907 = vsel %vm2820, %v2778, %v2442
    %v2908 = vsel %vm2820, %v2779, %v2448
    %v2909 = vsel %vm2820, %v2780, %v2454
    %v2910 = vsel %vm2820, %v2781, %v2460
    %v2911 = vsel %vm2820, %v2782, %v2466
    %v2912 = vsel %vm2820, %v2783, %v2472
    %v2913 = vsel %vm2820, %v2784, %v2478
    %v2914 = vsel %vm2820, %v2785, %v2484
    %v2915 = vsel %vm2820, %v2786, %v2490
    %v2916 = vsel %vm2820, %v2787, %v2496
    %v2917 = vsel %vm2820, %v2788, %v2503
    %v2918 = vsel %vm2820, %v2789, %v2509
    %v2919 = vsel %vm2820, %v2790, %v2515
    %v2920 = vsel %vm2820, %v2791, %v2521
    %v2921 = vsel %vm2820, %v2792, %v2527
    %v2922 = vsel %vm2820, %v2793, %v2533
    %v2923 = vsel %vm2820, %v2794, %v2539
    %v2924 = vsel %vm2820, %v2795, %v2545
    %v2925 = vsel %vm2820, %v2796, %v2551
    %v2926 = vsel %vm2820, %v2797, %v2557
    %v2927 = vsel %vm2820, %v2798, %v2563
    %v2928 = vsel %vm2820, %v2799, %v2569
    %v2929 = vsel %vm2820, %v2800, %v2575
    %v2930 = vsel %vm2820, %v2801, %v2581
    %v2931 = vsel %vm2820, %v2802, %v2587
    %v2932 = vsel %vm2820, %v2803, %v2593
    %v2933 = vsel %vm2820, %v2804, %v2600
    %v2934 = vsel %vm2820, %v2805, %v2606
    %v2935 = vsel %vm2820, %v2806, %v2612
    %v2936 = vsel %vm2820, %v2807, %v2618
    %v2937 = vsel %vm2820, %v2808, %v2624
    %v2938 = vsel %vm2820, %v2809, %v2630
    %v2939 = vsel %vm2820, %v2810, %v2636
    %v2940 = vsel %vm2820, %v2811, %v2642
    %v2941 = vsel %vm2820, %v2812, %v2648
    %v2942 = vsel %vm2820, %v2813, %v2654
    %v2943 = vsel %vm2820, %v2814, %v2660
    %v2944 = vsel %vm2820, %v2815, %v2666
    %v2945 = vsel %vm2820, %v2816, %v2672
    %v2946 = vsel %vm2820, %v2817, %v2678
    %v2947 = vsel %vm2820, %v2818, %v2684
    %v2948 = vsel %vm2820, %v2819, %v2690
    %v2949 = vrot.slane %v2853, 4
    %vm2950 = vcmask 1047556
    %v2951 = vsel %vm2950, %v2949, %v2821
    %v2952 = vrot.slane %v2821, 4
    %v2953 = vsel %vm2950, %v2853, %v2952
    %v2955 = vunpack.c.l.s4 1983009808
    %v2956 = vunpack.c.0.s8 %v2955
    %v2957 = vperm.slane %v2951, %v2956
    %v2959 = vunpack.c.l.s4 1983009808
    %v2960 = vunpack.c.0.s8 %v2959
    %v2961 = vperm.slane %v2953, %v2960
    %v2962 = vrot.slane %v2869, 4
    %v2963 = vsel %vm2950, %v2962, %v2837
    %v2964 = vrot.slane %v2837, 4
    %v2965 = vsel %vm2950, %v2869, %v2964
    %v2967 = vunpack.c.l.s4 1983009808
    %v2968 = vunpack.c.0.s8 %v2967
    %v2969 = vperm.slane %v2963, %v2968
    %v2971 = vunpack.c.l.s4 1983009808
    %v2972 = vunpack.c.0.s8 %v2971
    %v2973 = vperm.slane %v2965, %v2972
    %v2974 = vrot.slane %v2917, 4
    %v2975 = vsel %vm2950, %v2974, %v2885
    %v2976 = vrot.slane %v2885, 4
    %v2977 = vsel %vm2950, %v2917, %v2976
    %v2979 = vunpack.c.l.s4 1983009808
    %v2980 = vunpack.c.0.s8 %v2979
    %v2981 = vperm.slane %v2975, %v2980
    %v2983 = vunpack.c.l.s4 1983009808
    %v2984 = vunpack.c.0.s8 %v2983
    %v2985 = vperm.slane %v2977, %v2984
    %v2986 = vrot.slane %v2933, 4
    %v2987 = vsel %vm2950, %v2986, %v2901
    %v2988 = vrot.slane %v2901, 4
    %v2989 = vsel %vm2950, %v2933, %v2988
    %v2991 = vunpack.c.l.s4 1983009808
    %v2992 = vunpack.c.0.s8 %v2991
    %v2993 = vperm.slane %v2987, %v2992
    %v2995 = vunpack.c.l.s4 1983009808
    %v2996 = vunpack.c.0.s8 %v2995
    %v2997 = vperm.slane %v2989, %v2996
    %v2998 = vrot.slane %v2969, 4
    %v2999 = vsel %vm2950, %v2998, %v2957
    %v3000 = vrot.slane %v2957, 4
    %v3001 = vsel %vm2950, %v2969, %v3000
    %v3003 = vunpack.c.l.s4 1934713408
    %v3004 = vunpack.c.0.s8 %v3003
    %v3005 = vperm.slane %v2999, %v3004
    %v3007 = vunpack.c.l.s4 1934713408
    %v3008 = vunpack.c.0.s8 %v3007
    %v3009 = vperm.slane %v3001, %v3008
    %v3010 = vrot.slane %v2973, 4
    %v3011 = vsel %vm2950, %v3010, %v2961
    %v3012 = vrot.slane %v2961, 4
    %v3013 = vsel %vm2950, %v2973, %v3012
    %v3015 = vunpack.c.l.s4 1934713408
    %v3016 = vunpack.c.0.s8 %v3015
    %v3017 = vperm.slane %v3011, %v3016
    %v3019 = vunpack.c.l.s4 1934713408
    %v3020 = vunpack.c.0.s8 %v3019
    %v3021 = vperm.slane %v3013, %v3020
    %v3022 = vrot.slane %v2993, 4
    %v3023 = vsel %vm2950, %v3022, %v2981
    %v3024 = vrot.slane %v2981, 4
    %v3025 = vsel %vm2950, %v2993, %v3024
    %v3027 = vunpack.c.l.s4 1934713408
    %v3028 = vunpack.c.0.s8 %v3027
    %v3029 = vperm.slane %v3023, %v3028
    %v3031 = vunpack.c.l.s4 1934713408
    %v3032 = vunpack.c.0.s8 %v3031
    %v3033 = vperm.slane %v3025, %v3032
    %v3034 = vrot.slane %v2997, 4
    %v3035 = vsel %vm2950, %v3034, %v2985
    %v3036 = vrot.slane %v2985, 4
    %v3037 = vsel %vm2950, %v2997, %v3036
    %v3039 = vunpack.c.l.s4 1934713408
    %v3040 = vunpack.c.0.s8 %v3039
    %v3041 = vperm.slane %v3035, %v3040
    %v3043 = vunpack.c.l.s4 1934713408
    %v3044 = vunpack.c.0.s8 %v3043
    %v3045 = vperm.slane %v3037, %v3044
    %v3046 = vrot.slane %v3029, 4
    %v3047 = vsel %vm2950, %v3046, %v3005
    %v3048 = vrot.slane %v3005, 4
    %v3049 = vsel %vm2950, %v3029, %v3048
    %v3050 = vrot.slane %v3033, 4
    %v3051 = vsel %vm2950, %v3050, %v3009
    %v3052 = vrot.slane %v3009, 4
    %v3053 = vsel %vm2950, %v3033, %v3052
    %v3054 = vrot.slane %v3041, 4
    %v3055 = vsel %vm2950, %v3054, %v3017
    %v3056 = vrot.slane %v3017, 4
    %v3057 = vsel %vm2950, %v3041, %v3056
    %v3058 = vrot.slane %v3045, 4
    %v3059 = vsel %vm2950, %v3058, %v3021
    %v3060 = vrot.slane %v3021, 4
    %v3061 = vsel %vm2950, %v3045, %v3060
    %v3062 = vrot.slane %v2854, 4
    %v3063 = vsel %vm2950, %v3062, %v2822
    %v3064 = vrot.slane %v2822, 4
    %v3065 = vsel %vm2950, %v2854, %v3064
    %v3067 = vunpack.c.l.s4 1983009808
    %v3068 = vunpack.c.0.s8 %v3067
    %v3069 = vperm.slane %v3063, %v3068
    %v3071 = vunpack.c.l.s4 1983009808
    %v3072 = vunpack.c.0.s8 %v3071
    %v3073 = vperm.slane %v3065, %v3072
    %v3074 = vrot.slane %v2870, 4
    %v3075 = vsel %vm2950, %v3074, %v2838
    %v3076 = vrot.slane %v2838, 4
    %v3077 = vsel %vm2950, %v2870, %v3076
    %v3079 = vunpack.c.l.s4 1983009808
    %v3080 = vunpack.c.0.s8 %v3079
    %v3081 = vperm.slane %v3075, %v3080
    %v3083 = vunpack.c.l.s4 1983009808
    %v3084 = vunpack.c.0.s8 %v3083
    %v3085 = vperm.slane %v3077, %v3084
    %v3086 = vrot.slane %v2918, 4
    %v3087 = vsel %vm2950, %v3086, %v2886
    %v3088 = vrot.slane %v2886, 4
    %v3089 = vsel %vm2950, %v2918, %v3088
    %v3091 = vunpack.c.l.s4 1983009808
    %v3092 = vunpack.c.0.s8 %v3091
    %v3093 = vperm.slane %v3087, %v3092
    %v3095 = vunpack.c.l.s4 1983009808
    %v3096 = vunpack.c.0.s8 %v3095
    %v3097 = vperm.slane %v3089, %v3096
    %v3098 = vrot.slane %v2934, 4
    %v3099 = vsel %vm2950, %v3098, %v2902
    %v3100 = vrot.slane %v2902, 4
    %v3101 = vsel %vm2950, %v2934, %v3100
    %v3103 = vunpack.c.l.s4 1983009808
    %v3104 = vunpack.c.0.s8 %v3103
    %v3105 = vperm.slane %v3099, %v3104
    %v3107 = vunpack.c.l.s4 1983009808
    %v3108 = vunpack.c.0.s8 %v3107
    %v3109 = vperm.slane %v3101, %v3108
    %v3110 = vrot.slane %v3081, 4
    %v3111 = vsel %vm2950, %v3110, %v3069
    %v3112 = vrot.slane %v3069, 4
    %v3113 = vsel %vm2950, %v3081, %v3112
    %v3115 = vunpack.c.l.s4 1934713408
    %v3116 = vunpack.c.0.s8 %v3115
    %v3117 = vperm.slane %v3111, %v3116
    %v3119 = vunpack.c.l.s4 1934713408
    %v3120 = vunpack.c.0.s8 %v3119
    %v3121 = vperm.slane %v3113, %v3120
    %v3122 = vrot.slane %v3085, 4
    %v3123 = vsel %vm2950, %v3122, %v3073
    %v3124 = vrot.slane %v3073, 4
    %v3125 = vsel %vm2950, %v3085, %v3124
    %v3127 = vunpack.c.l.s4 1934713408
    %v3128 = vunpack.c.0.s8 %v3127
    %v3129 = vperm.slane %v3123, %v3128
    %v3131 = vunpack.c.l.s4 1934713408
    %v3132 = vunpack.c.0.s8 %v3131
    %v3133 = vperm.slane %v3125, %v3132
    %v3134 = vrot.slane %v3105, 4
    %v3135 = vsel %vm2950, %v3134, %v3093
    %v3136 = vrot.slane %v3093, 4
    %v3137 = vsel %vm2950, %v3105, %v3136
    %v3139 = vunpack.c.l.s4 1934713408
    %v3140 = vunpack.c.0.s8 %v3139
    %v3141 = vperm.slane %v3135, %v3140
    %v3143 = vunpack.c.l.s4 1934713408
    %v3144 = vunpack.c.0.s8 %v3143
    %v3145 = vperm.slane %v3137, %v3144
    %v3146 = vrot.slane %v3109, 4
    %v3147 = vsel %vm2950, %v3146, %v3097
    %v3148 = vrot.slane %v3097, 4
    %v3149 = vsel %vm2950, %v3109, %v3148
    %v3151 = vunpack.c.l.s4 1934713408
    %v3152 = vunpack.c.0.s8 %v3151
    %v3153 = vperm.slane %v3147, %v3152
    %v3155 = vunpack.c.l.s4 1934713408
    %v3156 = vunpack.c.0.s8 %v3155
    %v3157 = vperm.slane %v3149, %v3156
    %v3158 = vrot.slane %v3141, 4
    %v3159 = vsel %vm2950, %v3158, %v3117
    %v3160 = vrot.slane %v3117, 4
    %v3161 = vsel %vm2950, %v3141, %v3160
    %v3162 = vrot.slane %v3145, 4
    %v3163 = vsel %vm2950, %v3162, %v3121
    %v3164 = vrot.slane %v3121, 4
    %v3165 = vsel %vm2950, %v3145, %v3164
    %v3166 = vrot.slane %v3153, 4
    %v3167 = vsel %vm2950, %v3166, %v3129
    %v3168 = vrot.slane %v3129, 4
    %v3169 = vsel %vm2950, %v3153, %v3168
    %v3170 = vrot.slane %v3157, 4
    %v3171 = vsel %vm2950, %v3170, %v3133
    %v3172 = vrot.slane %v3133, 4
    %v3173 = vsel %vm2950, %v3157, %v3172
    %v3174 = vrot.slane %v2855, 4
    %v3175 = vsel %vm2950, %v3174, %v2823
    %v3176 = vrot.slane %v2823, 4
    %v3177 = vsel %vm2950, %v2855, %v3176
    %v3179 = vunpack.c.l.s4 1983009808
    %v3180 = vunpack.c.0.s8 %v3179
    %v3181 = vperm.slane %v3175, %v3180
    %v3183 = vunpack.c.l.s4 1983009808
    %v3184 = vunpack.c.0.s8 %v3183
    %v3185 = vperm.slane %v3177, %v3184
    %v3186 = vrot.slane %v2871, 4
    %v3187 = vsel %vm2950, %v3186, %v2839
    %v3188 = vrot.slane %v2839, 4
    %v3189 = vsel %vm2950, %v2871, %v3188
    %v3191 = vunpack.c.l.s4 1983009808
    %v3192 = vunpack.c.0.s8 %v3191
    %v3193 = vperm.slane %v3187, %v3192
    %v3195 = vunpack.c.l.s4 1983009808
    %v3196 = vunpack.c.0.s8 %v3195
    %v3197 = vperm.slane %v3189, %v3196
    %v3198 = vrot.slane %v2919, 4
    %v3199 = vsel %vm2950, %v3198, %v2887
    %v3200 = vrot.slane %v2887, 4
    %v3201 = vsel %vm2950, %v2919, %v3200
    %v3203 = vunpack.c.l.s4 1983009808
    %v3204 = vunpack.c.0.s8 %v3203
    %v3205 = vperm.slane %v3199, %v3204
    %v3207 = vunpack.c.l.s4 1983009808
    %v3208 = vunpack.c.0.s8 %v3207
    %v3209 = vperm.slane %v3201, %v3208
    %v3210 = vrot.slane %v2935, 4
    %v3211 = vsel %vm2950, %v3210, %v2903
    %v3212 = vrot.slane %v2903, 4
    %v3213 = vsel %vm2950, %v2935, %v3212
    %v3215 = vunpack.c.l.s4 1983009808
    %v3216 = vunpack.c.0.s8 %v3215
    %v3217 = vperm.slane %v3211, %v3216
    %v3219 = vunpack.c.l.s4 1983009808
    %v3220 = vunpack.c.0.s8 %v3219
    %v3221 = vperm.slane %v3213, %v3220
    %v3222 = vrot.slane %v3193, 4
    %v3223 = vsel %vm2950, %v3222, %v3181
    %v3224 = vrot.slane %v3181, 4
    %v3225 = vsel %vm2950, %v3193, %v3224
    %v3227 = vunpack.c.l.s4 1934713408
    %v3228 = vunpack.c.0.s8 %v3227
    %v3229 = vperm.slane %v3223, %v3228
    %v3231 = vunpack.c.l.s4 1934713408
    %v3232 = vunpack.c.0.s8 %v3231
    %v3233 = vperm.slane %v3225, %v3232
    %v3234 = vrot.slane %v3197, 4
    %v3235 = vsel %vm2950, %v3234, %v3185
    %v3236 = vrot.slane %v3185, 4
    %v3237 = vsel %vm2950, %v3197, %v3236
    %v3239 = vunpack.c.l.s4 1934713408
    %v3240 = vunpack.c.0.s8 %v3239
    %v3241 = vperm.slane %v3235, %v3240
    %v3243 = vunpack.c.l.s4 1934713408
    %v3244 = vunpack.c.0.s8 %v3243
    %v3245 = vperm.slane %v3237, %v3244
    %v3246 = vrot.slane %v3217, 4
    %v3247 = vsel %vm2950, %v3246, %v3205
    %v3248 = vrot.slane %v3205, 4
    %v3249 = vsel %vm2950, %v3217, %v3248
    %v3251 = vunpack.c.l.s4 1934713408
    %v3252 = vunpack.c.0.s8 %v3251
    %v3253 = vperm.slane %v3247, %v3252
    %v3255 = vunpack.c.l.s4 1934713408
    %v3256 = vunpack.c.0.s8 %v3255
    %v3257 = vperm.slane %v3249, %v3256
    %v3258 = vrot.slane %v3221, 4
    %v3259 = vsel %vm2950, %v3258, %v3209
    %v3260 = vrot.slane %v3209, 4
    %v3261 = vsel %vm2950, %v3221, %v3260
    %v3263 = vunpack.c.l.s4 1934713408
    %v3264 = vunpack.c.0.s8 %v3263
    %v3265 = vperm.slane %v3259, %v3264
    %v3267 = vunpack.c.l.s4 1934713408
    %v3268 = vunpack.c.0.s8 %v3267
    %v3269 = vperm.slane %v3261, %v3268
    %v3270 = vrot.slane %v3253, 4
    %v3271 = vsel %vm2950, %v3270, %v3229
    %v3272 = vrot.slane %v3229, 4
    %v3273 = vsel %vm2950, %v3253, %v3272
    %v3274 = vrot.slane %v3257, 4
    %v3275 = vsel %vm2950, %v3274, %v3233
    %v3276 = vrot.slane %v3233, 4
    %v3277 = vsel %vm2950, %v3257, %v3276
    %v3278 = vrot.slane %v3265, 4
    %v3279 = vsel %vm2950, %v3278, %v3241
    %v3280 = vrot.slane %v3241, 4
    %v3281 = vsel %vm2950, %v3265, %v3280
    %v3282 = vrot.slane %v3269, 4
    %v3283 = vsel %vm2950, %v3282, %v3245
    %v3284 = vrot.slane %v3245, 4
    %v3285 = vsel %vm2950, %v3269, %v3284
    %v3286 = vrot.slane %v2856, 4
    %v3287 = vsel %vm2950, %v3286, %v2824
    %v3288 = vrot.slane %v2824, 4
    %v3289 = vsel %vm2950, %v2856, %v3288
    %v3291 = vunpack.c.l.s4 1983009808
    %v3292 = vunpack.c.0.s8 %v3291
    %v3293 = vperm.slane %v3287, %v3292
    %v3295 = vunpack.c.l.s4 1983009808
    %v3296 = vunpack.c.0.s8 %v3295
    %v3297 = vperm.slane %v3289, %v3296
    %v3298 = vrot.slane %v2872, 4
    %v3299 = vsel %vm2950, %v3298, %v2840
    %v3300 = vrot.slane %v2840, 4
    %v3301 = vsel %vm2950, %v2872, %v3300
    %v3303 = vunpack.c.l.s4 1983009808
    %v3304 = vunpack.c.0.s8 %v3303
    %v3305 = vperm.slane %v3299, %v3304
    %v3307 = vunpack.c.l.s4 1983009808
    %v3308 = vunpack.c.0.s8 %v3307
    %v3309 = vperm.slane %v3301, %v3308
    %v3310 = vrot.slane %v2920, 4
    %v3311 = vsel %vm2950, %v3310, %v2888
    %v3312 = vrot.slane %v2888, 4
    %v3313 = vsel %vm2950, %v2920, %v3312
    %v3315 = vunpack.c.l.s4 1983009808
    %v3316 = vunpack.c.0.s8 %v3315
    %v3317 = vperm.slane %v3311, %v3316
    %v3319 = vunpack.c.l.s4 1983009808
    %v3320 = vunpack.c.0.s8 %v3319
    %v3321 = vperm.slane %v3313, %v3320
    %v3322 = vrot.slane %v2936, 4
    %v3323 = vsel %vm2950, %v3322, %v2904
    %v3324 = vrot.slane %v2904, 4
    %v3325 = vsel %vm2950, %v2936, %v3324
    %v3327 = vunpack.c.l.s4 1983009808
    %v3328 = vunpack.c.0.s8 %v3327
    %v3329 = vperm.slane %v3323, %v3328
    %v3331 = vunpack.c.l.s4 1983009808
    %v3332 = vunpack.c.0.s8 %v3331
    %v3333 = vperm.slane %v3325, %v3332
    %v3334 = vrot.slane %v3305, 4
    %v3335 = vsel %vm2950, %v3334, %v3293
    %v3336 = vrot.slane %v3293, 4
    %v3337 = vsel %vm2950, %v3305, %v3336
    %v3339 = vunpack.c.l.s4 1934713408
    %v3340 = vunpack.c.0.s8 %v3339
    %v3341 = vperm.slane %v3335, %v3340
    %v3343 = vunpack.c.l.s4 1934713408
    %v3344 = vunpack.c.0.s8 %v3343
    %v3345 = vperm.slane %v3337, %v3344
    %v3346 = vrot.slane %v3309, 4
    %v3347 = vsel %vm2950, %v3346, %v3297
    %v3348 = vrot.slane %v3297, 4
    %v3349 = vsel %vm2950, %v3309, %v3348
    %v3351 = vunpack.c.l.s4 1934713408
    %v3352 = vunpack.c.0.s8 %v3351
    %v3353 = vperm.slane %v3347, %v3352
    %v3355 = vunpack.c.l.s4 1934713408
    %v3356 = vunpack.c.0.s8 %v3355
    %v3357 = vperm.slane %v3349, %v3356
    %v3358 = vrot.slane %v3329, 4
    %v3359 = vsel %vm2950, %v3358, %v3317
    %v3360 = vrot.slane %v3317, 4
    %v3361 = vsel %vm2950, %v3329, %v3360
    %v3363 = vunpack.c.l.s4 1934713408
    %v3364 = vunpack.c.0.s8 %v3363
    %v3365 = vperm.slane %v3359, %v3364
    %v3367 = vunpack.c.l.s4 1934713408
    %v3368 = vunpack.c.0.s8 %v3367
    %v3369 = vperm.slane %v3361, %v3368
    %v3370 = vrot.slane %v3333, 4
    %v3371 = vsel %vm2950, %v3370, %v3321
    %v3372 = vrot.slane %v3321, 4
    %v3373 = vsel %vm2950, %v3333, %v3372
    %v3375 = vunpack.c.l.s4 1934713408
    %v3376 = vunpack.c.0.s8 %v3375
    %v3377 = vperm.slane %v3371, %v3376
    %v3379 = vunpack.c.l.s4 1934713408
    %v3380 = vunpack.c.0.s8 %v3379
    %v3381 = vperm.slane %v3373, %v3380
    %v3382 = vrot.slane %v3365, 4
    %v3383 = vsel %vm2950, %v3382, %v3341
    %v3384 = vrot.slane %v3341, 4
    %v3385 = vsel %vm2950, %v3365, %v3384
    %v3386 = vrot.slane %v3369, 4
    %v3387 = vsel %vm2950, %v3386, %v3345
    %v3388 = vrot.slane %v3345, 4
    %v3389 = vsel %vm2950, %v3369, %v3388
    %v3390 = vrot.slane %v3377, 4
    %v3391 = vsel %vm2950, %v3390, %v3353
    %v3392 = vrot.slane %v3353, 4
    %v3393 = vsel %vm2950, %v3377, %v3392
    %v3394 = vrot.slane %v3381, 4
    %v3395 = vsel %vm2950, %v3394, %v3357
    %v3396 = vrot.slane %v3357, 4
    %v3397 = vsel %vm2950, %v3381, %v3396
    %v3398 = vrot.slane %v2857, 4
    %v3399 = vsel %vm2950, %v3398, %v2825
    %v3400 = vrot.slane %v2825, 4
    %v3401 = vsel %vm2950, %v2857, %v3400
    %v3403 = vunpack.c.l.s4 1983009808
    %v3404 = vunpack.c.0.s8 %v3403
    %v3405 = vperm.slane %v3399, %v3404
    %v3407 = vunpack.c.l.s4 1983009808
    %v3408 = vunpack.c.0.s8 %v3407
    %v3409 = vperm.slane %v3401, %v3408
    %v3410 = vrot.slane %v2873, 4
    %v3411 = vsel %vm2950, %v3410, %v2841
    %v3412 = vrot.slane %v2841, 4
    %v3413 = vsel %vm2950, %v2873, %v3412
    %v3415 = vunpack.c.l.s4 1983009808
    %v3416 = vunpack.c.0.s8 %v3415
    %v3417 = vperm.slane %v3411, %v3416
    %v3419 = vunpack.c.l.s4 1983009808
    %v3420 = vunpack.c.0.s8 %v3419
    %v3421 = vperm.slane %v3413, %v3420
    %v3422 = vrot.slane %v2921, 4
    %v3423 = vsel %vm2950, %v3422, %v2889
    %v3424 = vrot.slane %v2889, 4
    %v3425 = vsel %vm2950, %v2921, %v3424
    %v3427 = vunpack.c.l.s4 1983009808
    %v3428 = vunpack.c.0.s8 %v3427
    %v3429 = vperm.slane %v3423, %v3428
    %v3431 = vunpack.c.l.s4 1983009808
    %v3432 = vunpack.c.0.s8 %v3431
    %v3433 = vperm.slane %v3425, %v3432
    %v3434 = vrot.slane %v2937, 4
    %v3435 = vsel %vm2950, %v3434, %v2905
    %v3436 = vrot.slane %v2905, 4
    %v3437 = vsel %vm2950, %v2937, %v3436
    %v3439 = vunpack.c.l.s4 1983009808
    %v3440 = vunpack.c.0.s8 %v3439
    %v3441 = vperm.slane %v3435, %v3440
    %v3443 = vunpack.c.l.s4 1983009808
    %v3444 = vunpack.c.0.s8 %v3443
    %v3445 = vperm.slane %v3437, %v3444
    %v3446 = vrot.slane %v3417, 4
    %v3447 = vsel %vm2950, %v3446, %v3405
    %v3448 = vrot.slane %v3405, 4
    %v3449 = vsel %vm2950, %v3417, %v3448
    %v3451 = vunpack.c.l.s4 1934713408
    %v3452 = vunpack.c.0.s8 %v3451
    %v3453 = vperm.slane %v3447, %v3452
    %v3455 = vunpack.c.l.s4 1934713408
    %v3456 = vunpack.c.0.s8 %v3455
    %v3457 = vperm.slane %v3449, %v3456
    %v3458 = vrot.slane %v3421, 4
    %v3459 = vsel %vm2950, %v3458, %v3409
    %v3460 = vrot.slane %v3409, 4
    %v3461 = vsel %vm2950, %v3421, %v3460
    %v3463 = vunpack.c.l.s4 1934713408
    %v3464 = vunpack.c.0.s8 %v3463
    %v3465 = vperm.slane %v3459, %v3464
    %v3467 = vunpack.c.l.s4 1934713408
    %v3468 = vunpack.c.0.s8 %v3467
    %v3469 = vperm.slane %v3461, %v3468
    %v3470 = vrot.slane %v3441, 4
    %v3471 = vsel %vm2950, %v3470, %v3429
    %v3472 = vrot.slane %v3429, 4
    %v3473 = vsel %vm2950, %v3441, %v3472
    %v3475 = vunpack.c.l.s4 1934713408
    %v3476 = vunpack.c.0.s8 %v3475
    %v3477 = vperm.slane %v3471, %v3476
    %v3479 = vunpack.c.l.s4 1934713408
    %v3480 = vunpack.c.0.s8 %v3479
    %v3481 = vperm.slane %v3473, %v3480
    %v3482 = vrot.slane %v3445, 4
    %v3483 = vsel %vm2950, %v3482, %v3433
    %v3484 = vrot.slane %v3433, 4
    %v3485 = vsel %vm2950, %v3445, %v3484
    %v3487 = vunpack.c.l.s4 1934713408
    %v3488 = vunpack.c.0.s8 %v3487
    %v3489 = vperm.slane %v3483, %v3488
    %v3491 = vunpack.c.l.s4 1934713408
    %v3492 = vunpack.c.0.s8 %v3491
    %v3493 = vperm.slane %v3485, %v3492
    %v3494 = vrot.slane %v3477, 4
    %v3495 = vsel %vm2950, %v3494, %v3453
    %v3496 = vrot.slane %v3453, 4
    %v3497 = vsel %vm2950, %v3477, %v3496
    %v3498 = vrot.slane %v3481, 4
    %v3499 = vsel %vm2950, %v3498, %v3457
    %v3500 = vrot.slane %v3457, 4
    %v3501 = vsel %vm2950, %v3481, %v3500
    %v3502 = vrot.slane %v3489, 4
    %v3503 = vsel %vm2950, %v3502, %v3465
    %v3504 = vrot.slane %v3465, 4
    %v3505 = vsel %vm2950, %v3489, %v3504
    %v3506 = vrot.slane %v3493, 4
    %v3507 = vsel %vm2950, %v3506, %v3469
    %v3508 = vrot.slane %v3469, 4
    %v3509 = vsel %vm2950, %v3493, %v3508
    %v3510 = vrot.slane %v2858, 4
    %v3511 = vsel %vm2950, %v3510, %v2826
    %v3512 = vrot.slane %v2826, 4
    %v3513 = vsel %vm2950, %v2858, %v3512
    %v3515 = vunpack.c.l.s4 1983009808
    %v3516 = vunpack.c.0.s8 %v3515
    %v3517 = vperm.slane %v3511, %v3516
    %v3519 = vunpack.c.l.s4 1983009808
    %v3520 = vunpack.c.0.s8 %v3519
    %v3521 = vperm.slane %v3513, %v3520
    %v3522 = vrot.slane %v2874, 4
    %v3523 = vsel %vm2950, %v3522, %v2842
    %v3524 = vrot.slane %v2842, 4
    %v3525 = vsel %vm2950, %v2874, %v3524
    %v3527 = vunpack.c.l.s4 1983009808
    %v3528 = vunpack.c.0.s8 %v3527
    %v3529 = vperm.slane %v3523, %v3528
    %v3531 = vunpack.c.l.s4 1983009808
    %v3532 = vunpack.c.0.s8 %v3531
    %v3533 = vperm.slane %v3525, %v3532
    %v3534 = vrot.slane %v2922, 4
    %v3535 = vsel %vm2950, %v3534, %v2890
    %v3536 = vrot.slane %v2890, 4
    %v3537 = vsel %vm2950, %v2922, %v3536
    %v3539 = vunpack.c.l.s4 1983009808
    %v3540 = vunpack.c.0.s8 %v3539
    %v3541 = vperm.slane %v3535, %v3540
    %v3543 = vunpack.c.l.s4 1983009808
    %v3544 = vunpack.c.0.s8 %v3543
    %v3545 = vperm.slane %v3537, %v3544
    %v3546 = vrot.slane %v2938, 4
    %v3547 = vsel %vm2950, %v3546, %v2906
    %v3548 = vrot.slane %v2906, 4
    %v3549 = vsel %vm2950, %v2938, %v3548
    %v3551 = vunpack.c.l.s4 1983009808
    %v3552 = vunpack.c.0.s8 %v3551
    %v3553 = vperm.slane %v3547, %v3552
    %v3555 = vunpack.c.l.s4 1983009808
    %v3556 = vunpack.c.0.s8 %v3555
    %v3557 = vperm.slane %v3549, %v3556
    %v3558 = vrot.slane %v3529, 4
    %v3559 = vsel %vm2950, %v3558, %v3517
    %v3560 = vrot.slane %v3517, 4
    %v3561 = vsel %vm2950, %v3529, %v3560
    %v3563 = vunpack.c.l.s4 1934713408
    %v3564 = vunpack.c.0.s8 %v3563
    %v3565 = vperm.slane %v3559, %v3564
    %v3567 = vunpack.c.l.s4 1934713408
    %v3568 = vunpack.c.0.s8 %v3567
    %v3569 = vperm.slane %v3561, %v3568
    %v3570 = vrot.slane %v3533, 4
    %v3571 = vsel %vm2950, %v3570, %v3521
    %v3572 = vrot.slane %v3521, 4
    %v3573 = vsel %vm2950, %v3533, %v3572
    %v3575 = vunpack.c.l.s4 1934713408
    %v3576 = vunpack.c.0.s8 %v3575
    %v3577 = vperm.slane %v3571, %v3576
    %v3579 = vunpack.c.l.s4 1934713408
    %v3580 = vunpack.c.0.s8 %v3579
    %v3581 = vperm.slane %v3573, %v3580
    %v3582 = vrot.slane %v3553, 4
    %v3583 = vsel %vm2950, %v3582, %v3541
    %v3584 = vrot.slane %v3541, 4
    %v3585 = vsel %vm2950, %v3553, %v3584
    %v3587 = vunpack.c.l.s4 1934713408
    %v3588 = vunpack.c.0.s8 %v3587
    %v3589 = vperm.slane %v3583, %v3588
    %v3591 = vunpack.c.l.s4 1934713408
    %v3592 = vunpack.c.0.s8 %v3591
    %v3593 = vperm.slane %v3585, %v3592
    %v3594 = vrot.slane %v3557, 4
    %v3595 = vsel %vm2950, %v3594, %v3545
    %v3596 = vrot.slane %v3545, 4
    %v3597 = vsel %vm2950, %v3557, %v3596
    %v3599 = vunpack.c.l.s4 1934713408
    %v3600 = vunpack.c.0.s8 %v3599
    %v3601 = vperm.slane %v3595, %v3600
    %v3603 = vunpack.c.l.s4 1934713408
    %v3604 = vunpack.c.0.s8 %v3603
    %v3605 = vperm.slane %v3597, %v3604
    %v3606 = vrot.slane %v3589, 4
    %v3607 = vsel %vm2950, %v3606, %v3565
    %v3608 = vrot.slane %v3565, 4
    %v3609 = vsel %vm2950, %v3589, %v3608
    %v3610 = vrot.slane %v3593, 4
    %v3611 = vsel %vm2950, %v3610, %v3569
    %v3612 = vrot.slane %v3569, 4
    %v3613 = vsel %vm2950, %v3593, %v3612
    %v3614 = vrot.slane %v3601, 4
    %v3615 = vsel %vm2950, %v3614, %v3577
    %v3616 = vrot.slane %v3577, 4
    %v3617 = vsel %vm2950, %v3601, %v3616
    %v3618 = vrot.slane %v3605, 4
    %v3619 = vsel %vm2950, %v3618, %v3581
    %v3620 = vrot.slane %v3581, 4
    %v3621 = vsel %vm2950, %v3605, %v3620
    %v3622 = vrot.slane %v2859, 4
    %v3623 = vsel %vm2950, %v3622, %v2827
    %v3624 = vrot.slane %v2827, 4
    %v3625 = vsel %vm2950, %v2859, %v3624
    %v3627 = vunpack.c.l.s4 1983009808
    %v3628 = vunpack.c.0.s8 %v3627
    %v3629 = vperm.slane %v3623, %v3628
    %v3631 = vunpack.c.l.s4 1983009808
    %v3632 = vunpack.c.0.s8 %v3631
    %v3633 = vperm.slane %v3625, %v3632
    %v3634 = vrot.slane %v2875, 4
    %v3635 = vsel %vm2950, %v3634, %v2843
    %v3636 = vrot.slane %v2843, 4
    %v3637 = vsel %vm2950, %v2875, %v3636
    %v3639 = vunpack.c.l.s4 1983009808
    %v3640 = vunpack.c.0.s8 %v3639
    %v3641 = vperm.slane %v3635, %v3640
    %v3643 = vunpack.c.l.s4 1983009808
    %v3644 = vunpack.c.0.s8 %v3643
    %v3645 = vperm.slane %v3637, %v3644
    %v3646 = vrot.slane %v2923, 4
    %v3647 = vsel %vm2950, %v3646, %v2891
    %v3648 = vrot.slane %v2891, 4
    %v3649 = vsel %vm2950, %v2923, %v3648
    %v3651 = vunpack.c.l.s4 1983009808
    %v3652 = vunpack.c.0.s8 %v3651
    %v3653 = vperm.slane %v3647, %v3652
    %v3655 = vunpack.c.l.s4 1983009808
    %v3656 = vunpack.c.0.s8 %v3655
    %v3657 = vperm.slane %v3649, %v3656
    %v3658 = vrot.slane %v2939, 4
    %v3659 = vsel %vm2950, %v3658, %v2907
    %v3660 = vrot.slane %v2907, 4
    %v3661 = vsel %vm2950, %v2939, %v3660
    %v3663 = vunpack.c.l.s4 1983009808
    %v3664 = vunpack.c.0.s8 %v3663
    %v3665 = vperm.slane %v3659, %v3664
    %v3667 = vunpack.c.l.s4 1983009808
    %v3668 = vunpack.c.0.s8 %v3667
    %v3669 = vperm.slane %v3661, %v3668
    %v3670 = vrot.slane %v3641, 4
    %v3671 = vsel %vm2950, %v3670, %v3629
    %v3672 = vrot.slane %v3629, 4
    %v3673 = vsel %vm2950, %v3641, %v3672
    %v3675 = vunpack.c.l.s4 1934713408
    %v3676 = vunpack.c.0.s8 %v3675
    %v3677 = vperm.slane %v3671, %v3676
    %v3679 = vunpack.c.l.s4 1934713408
    %v3680 = vunpack.c.0.s8 %v3679
    %v3681 = vperm.slane %v3673, %v3680
    %v3682 = vrot.slane %v3645, 4
    %v3683 = vsel %vm2950, %v3682, %v3633
    %v3684 = vrot.slane %v3633, 4
    %v3685 = vsel %vm2950, %v3645, %v3684
    %v3687 = vunpack.c.l.s4 1934713408
    %v3688 = vunpack.c.0.s8 %v3687
    %v3689 = vperm.slane %v3683, %v3688
    %v3691 = vunpack.c.l.s4 1934713408
    %v3692 = vunpack.c.0.s8 %v3691
    %v3693 = vperm.slane %v3685, %v3692
    %v3694 = vrot.slane %v3665, 4
    %v3695 = vsel %vm2950, %v3694, %v3653
    %v3696 = vrot.slane %v3653, 4
    %v3697 = vsel %vm2950, %v3665, %v3696
    %v3699 = vunpack.c.l.s4 1934713408
    %v3700 = vunpack.c.0.s8 %v3699
    %v3701 = vperm.slane %v3695, %v3700
    %v3703 = vunpack.c.l.s4 1934713408
    %v3704 = vunpack.c.0.s8 %v3703
    %v3705 = vperm.slane %v3697, %v3704
    %v3706 = vrot.slane %v3669, 4
    %v3707 = vsel %vm2950, %v3706, %v3657
    %v3708 = vrot.slane %v3657, 4
    %v3709 = vsel %vm2950, %v3669, %v3708
    %v3711 = vunpack.c.l.s4 1934713408
    %v3712 = vunpack.c.0.s8 %v3711
    %v3713 = vperm.slane %v3707, %v3712
    %v3715 = vunpack.c.l.s4 1934713408
    %v3716 = vunpack.c.0.s8 %v3715
    %v3717 = vperm.slane %v3709, %v3716
    %v3718 = vrot.slane %v3701, 4
    %v3719 = vsel %vm2950, %v3718, %v3677
    %v3720 = vrot.slane %v3677, 4
    %v3721 = vsel %vm2950, %v3701, %v3720
    %v3722 = vrot.slane %v3705, 4
    %v3723 = vsel %vm2950, %v3722, %v3681
    %v3724 = vrot.slane %v3681, 4
    %v3725 = vsel %vm2950, %v3705, %v3724
    %v3726 = vrot.slane %v3713, 4
    %v3727 = vsel %vm2950, %v3726, %v3689
    %v3728 = vrot.slane %v3689, 4
    %v3729 = vsel %vm2950, %v3713, %v3728
    %v3730 = vrot.slane %v3717, 4
    %v3731 = vsel %vm2950, %v3730, %v3693
    %v3732 = vrot.slane %v3693, 4
    %v3733 = vsel %vm2950, %v3717, %v3732
    %v3734 = vrot.slane %v2860, 4
    %v3735 = vsel %vm2950, %v3734, %v2828
    %v3736 = vrot.slane %v2828, 4
    %v3737 = vsel %vm2950, %v2860, %v3736
    %v3739 = vunpack.c.l.s4 1983009808
    %v3740 = vunpack.c.0.s8 %v3739
    %v3741 = vperm.slane %v3735, %v3740
    %v3743 = vunpack.c.l.s4 1983009808
    %v3744 = vunpack.c.0.s8 %v3743
    %v3745 = vperm.slane %v3737, %v3744
    %v3746 = vrot.slane %v2876, 4
    %v3747 = vsel %vm2950, %v3746, %v2844
    %v3748 = vrot.slane %v2844, 4
    %v3749 = vsel %vm2950, %v2876, %v3748
    %v3751 = vunpack.c.l.s4 1983009808
    %v3752 = vunpack.c.0.s8 %v3751
    %v3753 = vperm.slane %v3747, %v3752
    %v3755 = vunpack.c.l.s4 1983009808
    %v3756 = vunpack.c.0.s8 %v3755
    %v3757 = vperm.slane %v3749, %v3756
    %v3758 = vrot.slane %v2924, 4
    %v3759 = vsel %vm2950, %v3758, %v2892
    %v3760 = vrot.slane %v2892, 4
    %v3761 = vsel %vm2950, %v2924, %v3760
    %v3763 = vunpack.c.l.s4 1983009808
    %v3764 = vunpack.c.0.s8 %v3763
    %v3765 = vperm.slane %v3759, %v3764
    %v3767 = vunpack.c.l.s4 1983009808
    %v3768 = vunpack.c.0.s8 %v3767
    %v3769 = vperm.slane %v3761, %v3768
    %v3770 = vrot.slane %v2940, 4
    %v3771 = vsel %vm2950, %v3770, %v2908
    %v3772 = vrot.slane %v2908, 4
    %v3773 = vsel %vm2950, %v2940, %v3772
    %v3775 = vunpack.c.l.s4 1983009808
    %v3776 = vunpack.c.0.s8 %v3775
    %v3777 = vperm.slane %v3771, %v3776
    %v3779 = vunpack.c.l.s4 1983009808
    %v3780 = vunpack.c.0.s8 %v3779
    %v3781 = vperm.slane %v3773, %v3780
    %v3782 = vrot.slane %v3753, 4
    %v3783 = vsel %vm2950, %v3782, %v3741
    %v3784 = vrot.slane %v3741, 4
    %v3785 = vsel %vm2950, %v3753, %v3784
    %v3787 = vunpack.c.l.s4 1934713408
    %v3788 = vunpack.c.0.s8 %v3787
    %v3789 = vperm.slane %v3783, %v3788
    %v3791 = vunpack.c.l.s4 1934713408
    %v3792 = vunpack.c.0.s8 %v3791
    %v3793 = vperm.slane %v3785, %v3792
    %v3794 = vrot.slane %v3757, 4
    %v3795 = vsel %vm2950, %v3794, %v3745
    %v3796 = vrot.slane %v3745, 4
    %v3797 = vsel %vm2950, %v3757, %v3796
    %v3799 = vunpack.c.l.s4 1934713408
    %v3800 = vunpack.c.0.s8 %v3799
    %v3801 = vperm.slane %v3795, %v3800
    %v3803 = vunpack.c.l.s4 1934713408
    %v3804 = vunpack.c.0.s8 %v3803
    %v3805 = vperm.slane %v3797, %v3804
    %v3806 = vrot.slane %v3777, 4
    %v3807 = vsel %vm2950, %v3806, %v3765
    %v3808 = vrot.slane %v3765, 4
    %v3809 = vsel %vm2950, %v3777, %v3808
    %v3811 = vunpack.c.l.s4 1934713408
    %v3812 = vunpack.c.0.s8 %v3811
    %v3813 = vperm.slane %v3807, %v3812
    %v3815 = vunpack.c.l.s4 1934713408
    %v3816 = vunpack.c.0.s8 %v3815
    %v3817 = vperm.slane %v3809, %v3816
    %v3818 = vrot.slane %v3781, 4
    %v3819 = vsel %vm2950, %v3818, %v3769
    %v3820 = vrot.slane %v3769, 4
    %v3821 = vsel %vm2950, %v3781, %v3820
    %v3823 = vunpack.c.l.s4 1934713408
    %v3824 = vunpack.c.0.s8 %v3823
    %v3825 = vperm.slane %v3819, %v3824
    %v3827 = vunpack.c.l.s4 1934713408
    %v3828 = vunpack.c.0.s8 %v3827
    %v3829 = vperm.slane %v3821, %v3828
    %v3830 = vrot.slane %v3813, 4
    %v3831 = vsel %vm2950, %v3830, %v3789
    %v3832 = vrot.slane %v3789, 4
    %v3833 = vsel %vm2950, %v3813, %v3832
    %v3834 = vrot.slane %v3817, 4
    %v3835 = vsel %vm2950, %v3834, %v3793
    %v3836 = vrot.slane %v3793, 4
    %v3837 = vsel %vm2950, %v3817, %v3836
    %v3838 = vrot.slane %v3825, 4
    %v3839 = vsel %vm2950, %v3838, %v3801
    %v3840 = vrot.slane %v3801, 4
    %v3841 = vsel %vm2950, %v3825, %v3840
    %v3842 = vrot.slane %v3829, 4
    %v3843 = vsel %vm2950, %v3842, %v3805
    %v3844 = vrot.slane %v3805, 4
    %v3845 = vsel %vm2950, %v3829, %v3844
    %v3846 = vrot.slane %v2861, 4
    %v3847 = vsel %vm2950, %v3846, %v2829
    %v3848 = vrot.slane %v2829, 4
    %v3849 = vsel %vm2950, %v2861, %v3848
    %v3851 = vunpack.c.l.s4 1983009808
    %v3852 = vunpack.c.0.s8 %v3851
    %v3853 = vperm.slane %v3847, %v3852
    %v3855 = vunpack.c.l.s4 1983009808
    %v3856 = vunpack.c.0.s8 %v3855
    %v3857 = vperm.slane %v3849, %v3856
    %v3858 = vrot.slane %v2877, 4
    %v3859 = vsel %vm2950, %v3858, %v2845
    %v3860 = vrot.slane %v2845, 4
    %v3861 = vsel %vm2950, %v2877, %v3860
    %v3863 = vunpack.c.l.s4 1983009808
    %v3864 = vunpack.c.0.s8 %v3863
    %v3865 = vperm.slane %v3859, %v3864
    %v3867 = vunpack.c.l.s4 1983009808
    %v3868 = vunpack.c.0.s8 %v3867
    %v3869 = vperm.slane %v3861, %v3868
    %v3870 = vrot.slane %v2925, 4
    %v3871 = vsel %vm2950, %v3870, %v2893
    %v3872 = vrot.slane %v2893, 4
    %v3873 = vsel %vm2950, %v2925, %v3872
    %v3875 = vunpack.c.l.s4 1983009808
    %v3876 = vunpack.c.0.s8 %v3875
    %v3877 = vperm.slane %v3871, %v3876
    %v3879 = vunpack.c.l.s4 1983009808
    %v3880 = vunpack.c.0.s8 %v3879
    %v3881 = vperm.slane %v3873, %v3880
    %v3882 = vrot.slane %v2941, 4
    %v3883 = vsel %vm2950, %v3882, %v2909
    %v3884 = vrot.slane %v2909, 4
    %v3885 = vsel %vm2950, %v2941, %v3884
    %v3887 = vunpack.c.l.s4 1983009808
    %v3888 = vunpack.c.0.s8 %v3887
    %v3889 = vperm.slane %v3883, %v3888
    %v3891 = vunpack.c.l.s4 1983009808
    %v3892 = vunpack.c.0.s8 %v3891
    %v3893 = vperm.slane %v3885, %v3892
    %v3894 = vrot.slane %v3865, 4
    %v3895 = vsel %vm2950, %v3894, %v3853
    %v3896 = vrot.slane %v3853, 4
    %v3897 = vsel %vm2950, %v3865, %v3896
    %v3899 = vunpack.c.l.s4 1934713408
    %v3900 = vunpack.c.0.s8 %v3899
    %v3901 = vperm.slane %v3895, %v3900
    %v3903 = vunpack.c.l.s4 1934713408
    %v3904 = vunpack.c.0.s8 %v3903
    %v3905 = vperm.slane %v3897, %v3904
    %v3906 = vrot.slane %v3869, 4
    %v3907 = vsel %vm2950, %v3906, %v3857
    %v3908 = vrot.slane %v3857, 4
    %v3909 = vsel %vm2950, %v3869, %v3908
    %v3911 = vunpack.c.l.s4 1934713408
    %v3912 = vunpack.c.0.s8 %v3911
    %v3913 = vperm.slane %v3907, %v3912
    %v3915 = vunpack.c.l.s4 1934713408
    %v3916 = vunpack.c.0.s8 %v3915
    %v3917 = vperm.slane %v3909, %v3916
    %v3918 = vrot.slane %v3889, 4
    %v3919 = vsel %vm2950, %v3918, %v3877
    %v3920 = vrot.slane %v3877, 4
    %v3921 = vsel %vm2950, %v3889, %v3920
    %v3923 = vunpack.c.l.s4 1934713408
    %v3924 = vunpack.c.0.s8 %v3923
    %v3925 = vperm.slane %v3919, %v3924
    %v3927 = vunpack.c.l.s4 1934713408
    %v3928 = vunpack.c.0.s8 %v3927
    %v3929 = vperm.slane %v3921, %v3928
    %v3930 = vrot.slane %v3893, 4
    %v3931 = vsel %vm2950, %v3930, %v3881
    %v3932 = vrot.slane %v3881, 4
    %v3933 = vsel %vm2950, %v3893, %v3932
    %v3935 = vunpack.c.l.s4 1934713408
    %v3936 = vunpack.c.0.s8 %v3935
    %v3937 = vperm.slane %v3931, %v3936
    %v3939 = vunpack.c.l.s4 1934713408
    %v3940 = vunpack.c.0.s8 %v3939
    %v3941 = vperm.slane %v3933, %v3940
    %v3942 = vrot.slane %v3925, 4
    %v3943 = vsel %vm2950, %v3942, %v3901
    %v3944 = vrot.slane %v3901, 4
    %v3945 = vsel %vm2950, %v3925, %v3944
    %v3946 = vrot.slane %v3929, 4
    %v3947 = vsel %vm2950, %v3946, %v3905
    %v3948 = vrot.slane %v3905, 4
    %v3949 = vsel %vm2950, %v3929, %v3948
    %v3950 = vrot.slane %v3937, 4
    %v3951 = vsel %vm2950, %v3950, %v3913
    %v3952 = vrot.slane %v3913, 4
    %v3953 = vsel %vm2950, %v3937, %v3952
    %v3954 = vrot.slane %v3941, 4
    %v3955 = vsel %vm2950, %v3954, %v3917
    %v3956 = vrot.slane %v3917, 4
    %v3957 = vsel %vm2950, %v3941, %v3956
    %v3958 = vrot.slane %v2862, 4
    %v3959 = vsel %vm2950, %v3958, %v2830
    %v3960 = vrot.slane %v2830, 4
    %v3961 = vsel %vm2950, %v2862, %v3960
    %v3963 = vunpack.c.l.s4 1983009808
    %v3964 = vunpack.c.0.s8 %v3963
    %v3965 = vperm.slane %v3959, %v3964
    %v3967 = vunpack.c.l.s4 1983009808
    %v3968 = vunpack.c.0.s8 %v3967
    %v3969 = vperm.slane %v3961, %v3968
    %v3970 = vrot.slane %v2878, 4
    %v3971 = vsel %vm2950, %v3970, %v2846
    %v3972 = vrot.slane %v2846, 4
    %v3973 = vsel %vm2950, %v2878, %v3972
    %v3975 = vunpack.c.l.s4 1983009808
    %v3976 = vunpack.c.0.s8 %v3975
    %v3977 = vperm.slane %v3971, %v3976
    %v3979 = vunpack.c.l.s4 1983009808
    %v3980 = vunpack.c.0.s8 %v3979
    %v3981 = vperm.slane %v3973, %v3980
    %v3982 = vrot.slane %v2926, 4
    %v3983 = vsel %vm2950, %v3982, %v2894
    %v3984 = vrot.slane %v2894, 4
    %v3985 = vsel %vm2950, %v2926, %v3984
    %v3987 = vunpack.c.l.s4 1983009808
    %v3988 = vunpack.c.0.s8 %v3987
    %v3989 = vperm.slane %v3983, %v3988
    %v3991 = vunpack.c.l.s4 1983009808
    %v3992 = vunpack.c.0.s8 %v3991
    %v3993 = vperm.slane %v3985, %v3992
    %v3994 = vrot.slane %v2942, 4
    %v3995 = vsel %vm2950, %v3994, %v2910
    %v3996 = vrot.slane %v2910, 4
    %v3997 = vsel %vm2950, %v2942, %v3996
    %v3999 = vunpack.c.l.s4 1983009808
    %v4000 = vunpack.c.0.s8 %v3999
    %v4001 = vperm.slane %v3995, %v4000
    %v4003 = vunpack.c.l.s4 1983009808
    %v4004 = vunpack.c.0.s8 %v4003
    %v4005 = vperm.slane %v3997, %v4004
    %v4006 = vrot.slane %v3977, 4
    %v4007 = vsel %vm2950, %v4006, %v3965
    %v4008 = vrot.slane %v3965, 4
    %v4009 = vsel %vm2950, %v3977, %v4008
    %v4011 = vunpack.c.l.s4 1934713408
    %v4012 = vunpack.c.0.s8 %v4011
    %v4013 = vperm.slane %v4007, %v4012
    %v4015 = vunpack.c.l.s4 1934713408
    %v4016 = vunpack.c.0.s8 %v4015
    %v4017 = vperm.slane %v4009, %v4016
    %v4018 = vrot.slane %v3981, 4
    %v4019 = vsel %vm2950, %v4018, %v3969
    %v4020 = vrot.slane %v3969, 4
    %v4021 = vsel %vm2950, %v3981, %v4020
    %v4023 = vunpack.c.l.s4 1934713408
    %v4024 = vunpack.c.0.s8 %v4023
    %v4025 = vperm.slane %v4019, %v4024
    %v4027 = vunpack.c.l.s4 1934713408
    %v4028 = vunpack.c.0.s8 %v4027
    %v4029 = vperm.slane %v4021, %v4028
    %v4030 = vrot.slane %v4001, 4
    %v4031 = vsel %vm2950, %v4030, %v3989
    %v4032 = vrot.slane %v3989, 4
    %v4033 = vsel %vm2950, %v4001, %v4032
    %v4035 = vunpack.c.l.s4 1934713408
    %v4036 = vunpack.c.0.s8 %v4035
    %v4037 = vperm.slane %v4031, %v4036
    %v4039 = vunpack.c.l.s4 1934713408
    %v4040 = vunpack.c.0.s8 %v4039
    %v4041 = vperm.slane %v4033, %v4040
    %v4042 = vrot.slane %v4005, 4
    %v4043 = vsel %vm2950, %v4042, %v3993
    %v4044 = vrot.slane %v3993, 4
    %v4045 = vsel %vm2950, %v4005, %v4044
    %v4047 = vunpack.c.l.s4 1934713408
    %v4048 = vunpack.c.0.s8 %v4047
    %v4049 = vperm.slane %v4043, %v4048
    %v4051 = vunpack.c.l.s4 1934713408
    %v4052 = vunpack.c.0.s8 %v4051
    %v4053 = vperm.slane %v4045, %v4052
    %v4054 = vrot.slane %v4037, 4
    %v4055 = vsel %vm2950, %v4054, %v4013
    %v4056 = vrot.slane %v4013, 4
    %v4057 = vsel %vm2950, %v4037, %v4056
    %v4058 = vrot.slane %v4041, 4
    %v4059 = vsel %vm2950, %v4058, %v4017
    %v4060 = vrot.slane %v4017, 4
    %v4061 = vsel %vm2950, %v4041, %v4060
    %v4062 = vrot.slane %v4049, 4
    %v4063 = vsel %vm2950, %v4062, %v4025
    %v4064 = vrot.slane %v4025, 4
    %v4065 = vsel %vm2950, %v4049, %v4064
    %v4066 = vrot.slane %v4053, 4
    %v4067 = vsel %vm2950, %v4066, %v4029
    %v4068 = vrot.slane %v4029, 4
    %v4069 = vsel %vm2950, %v4053, %v4068
    %v4070 = vrot.slane %v2863, 4
    %v4071 = vsel %vm2950, %v4070, %v2831
    %v4072 = vrot.slane %v2831, 4
    %v4073 = vsel %vm2950, %v2863, %v4072
    %v4075 = vunpack.c.l.s4 1983009808
    %v4076 = vunpack.c.0.s8 %v4075
    %v4077 = vperm.slane %v4071, %v4076
    %v4079 = vunpack.c.l.s4 1983009808
    %v4080 = vunpack.c.0.s8 %v4079
    %v4081 = vperm.slane %v4073, %v4080
    %v4082 = vrot.slane %v2879, 4
    %v4083 = vsel %vm2950, %v4082, %v2847
    %v4084 = vrot.slane %v2847, 4
    %v4085 = vsel %vm2950, %v2879, %v4084
    %v4087 = vunpack.c.l.s4 1983009808
    %v4088 = vunpack.c.0.s8 %v4087
    %v4089 = vperm.slane %v4083, %v4088
    %v4091 = vunpack.c.l.s4 1983009808
    %v4092 = vunpack.c.0.s8 %v4091
    %v4093 = vperm.slane %v4085, %v4092
    %v4094 = vrot.slane %v2927, 4
    %v4095 = vsel %vm2950, %v4094, %v2895
    %v4096 = vrot.slane %v2895, 4
    %v4097 = vsel %vm2950, %v2927, %v4096
    %v4099 = vunpack.c.l.s4 1983009808
    %v4100 = vunpack.c.0.s8 %v4099
    %v4101 = vperm.slane %v4095, %v4100
    %v4103 = vunpack.c.l.s4 1983009808
    %v4104 = vunpack.c.0.s8 %v4103
    %v4105 = vperm.slane %v4097, %v4104
    %v4106 = vrot.slane %v2943, 4
    %v4107 = vsel %vm2950, %v4106, %v2911
    %v4108 = vrot.slane %v2911, 4
    %v4109 = vsel %vm2950, %v2943, %v4108
    %v4111 = vunpack.c.l.s4 1983009808
    %v4112 = vunpack.c.0.s8 %v4111
    %v4113 = vperm.slane %v4107, %v4112
    %v4115 = vunpack.c.l.s4 1983009808
    %v4116 = vunpack.c.0.s8 %v4115
    %v4117 = vperm.slane %v4109, %v4116
    %v4118 = vrot.slane %v4089, 4
    %v4119 = vsel %vm2950, %v4118, %v4077
    %v4120 = vrot.slane %v4077, 4
    %v4121 = vsel %vm2950, %v4089, %v4120
    %v4123 = vunpack.c.l.s4 1934713408
    %v4124 = vunpack.c.0.s8 %v4123
    %v4125 = vperm.slane %v4119, %v4124
    %v4127 = vunpack.c.l.s4 1934713408
    %v4128 = vunpack.c.0.s8 %v4127
    %v4129 = vperm.slane %v4121, %v4128
    %v4130 = vrot.slane %v4093, 4
    %v4131 = vsel %vm2950, %v4130, %v4081
    %v4132 = vrot.slane %v4081, 4
    %v4133 = vsel %vm2950, %v4093, %v4132
    %v4135 = vunpack.c.l.s4 1934713408
    %v4136 = vunpack.c.0.s8 %v4135
    %v4137 = vperm.slane %v4131, %v4136
    %v4139 = vunpack.c.l.s4 1934713408
    %v4140 = vunpack.c.0.s8 %v4139
    %v4141 = vperm.slane %v4133, %v4140
    %v4142 = vrot.slane %v4113, 4
    %v4143 = vsel %vm2950, %v4142, %v4101
    %v4144 = vrot.slane %v4101, 4
    %v4145 = vsel %vm2950, %v4113, %v4144
    %v4147 = vunpack.c.l.s4 1934713408
    %v4148 = vunpack.c.0.s8 %v4147
    %v4149 = vperm.slane %v4143, %v4148
    %v4151 = vunpack.c.l.s4 1934713408
    %v4152 = vunpack.c.0.s8 %v4151
    %v4153 = vperm.slane %v4145, %v4152
    %v4154 = vrot.slane %v4117, 4
    %v4155 = vsel %vm2950, %v4154, %v4105
    %v4156 = vrot.slane %v4105, 4
    %v4157 = vsel %vm2950, %v4117, %v4156
    %v4159 = vunpack.c.l.s4 1934713408
    %v4160 = vunpack.c.0.s8 %v4159
    %v4161 = vperm.slane %v4155, %v4160
    %v4163 = vunpack.c.l.s4 1934713408
    %v4164 = vunpack.c.0.s8 %v4163
    %v4165 = vperm.slane %v4157, %v4164
    %v4166 = vrot.slane %v4149, 4
    %v4167 = vsel %vm2950, %v4166, %v4125
    %v4168 = vrot.slane %v4125, 4
    %v4169 = vsel %vm2950, %v4149, %v4168
    %v4170 = vrot.slane %v4153, 4
    %v4171 = vsel %vm2950, %v4170, %v4129
    %v4172 = vrot.slane %v4129, 4
    %v4173 = vsel %vm2950, %v4153, %v4172
    %v4174 = vrot.slane %v4161, 4
    %v4175 = vsel %vm2950, %v4174, %v4137
    %v4176 = vrot.slane %v4137, 4
    %v4177 = vsel %vm2950, %v4161, %v4176
    %v4178 = vrot.slane %v4165, 4
    %v4179 = vsel %vm2950, %v4178, %v4141
    %v4180 = vrot.slane %v4141, 4
    %v4181 = vsel %vm2950, %v4165, %v4180
    %v4182 = vrot.slane %v2864, 4
    %v4183 = vsel %vm2950, %v4182, %v2832
    %v4184 = vrot.slane %v2832, 4
    %v4185 = vsel %vm2950, %v2864, %v4184
    %v4187 = vunpack.c.l.s4 1983009808
    %v4188 = vunpack.c.0.s8 %v4187
    %v4189 = vperm.slane %v4183, %v4188
    %v4191 = vunpack.c.l.s4 1983009808
    %v4192 = vunpack.c.0.s8 %v4191
    %v4193 = vperm.slane %v4185, %v4192
    %v4194 = vrot.slane %v2880, 4
    %v4195 = vsel %vm2950, %v4194, %v2848
    %v4196 = vrot.slane %v2848, 4
    %v4197 = vsel %vm2950, %v2880, %v4196
    %v4199 = vunpack.c.l.s4 1983009808
    %v4200 = vunpack.c.0.s8 %v4199
    %v4201 = vperm.slane %v4195, %v4200
    %v4203 = vunpack.c.l.s4 1983009808
    %v4204 = vunpack.c.0.s8 %v4203
    %v4205 = vperm.slane %v4197, %v4204
    %v4206 = vrot.slane %v2928, 4
    %v4207 = vsel %vm2950, %v4206, %v2896
    %v4208 = vrot.slane %v2896, 4
    %v4209 = vsel %vm2950, %v2928, %v4208
    %v4211 = vunpack.c.l.s4 1983009808
    %v4212 = vunpack.c.0.s8 %v4211
    %v4213 = vperm.slane %v4207, %v4212
    %v4215 = vunpack.c.l.s4 1983009808
    %v4216 = vunpack.c.0.s8 %v4215
    %v4217 = vperm.slane %v4209, %v4216
    %v4218 = vrot.slane %v2944, 4
    %v4219 = vsel %vm2950, %v4218, %v2912
    %v4220 = vrot.slane %v2912, 4
    %v4221 = vsel %vm2950, %v2944, %v4220
    %v4223 = vunpack.c.l.s4 1983009808
    %v4224 = vunpack.c.0.s8 %v4223
    %v4225 = vperm.slane %v4219, %v4224
    %v4227 = vunpack.c.l.s4 1983009808
    %v4228 = vunpack.c.0.s8 %v4227
    %v4229 = vperm.slane %v4221, %v4228
    %v4230 = vrot.slane %v4201, 4
    %v4231 = vsel %vm2950, %v4230, %v4189
    %v4232 = vrot.slane %v4189, 4
    %v4233 = vsel %vm2950, %v4201, %v4232
    %v4235 = vunpack.c.l.s4 1934713408
    %v4236 = vunpack.c.0.s8 %v4235
    %v4237 = vperm.slane %v4231, %v4236
    %v4239 = vunpack.c.l.s4 1934713408
    %v4240 = vunpack.c.0.s8 %v4239
    %v4241 = vperm.slane %v4233, %v4240
    %v4242 = vrot.slane %v4205, 4
    %v4243 = vsel %vm2950, %v4242, %v4193
    %v4244 = vrot.slane %v4193, 4
    %v4245 = vsel %vm2950, %v4205, %v4244
    %v4247 = vunpack.c.l.s4 1934713408
    %v4248 = vunpack.c.0.s8 %v4247
    %v4249 = vperm.slane %v4243, %v4248
    %v4251 = vunpack.c.l.s4 1934713408
    %v4252 = vunpack.c.0.s8 %v4251
    %v4253 = vperm.slane %v4245, %v4252
    %v4254 = vrot.slane %v4225, 4
    %v4255 = vsel %vm2950, %v4254, %v4213
    %v4256 = vrot.slane %v4213, 4
    %v4257 = vsel %vm2950, %v4225, %v4256
    %v4259 = vunpack.c.l.s4 1934713408
    %v4260 = vunpack.c.0.s8 %v4259
    %v4261 = vperm.slane %v4255, %v4260
    %v4263 = vunpack.c.l.s4 1934713408
    %v4264 = vunpack.c.0.s8 %v4263
    %v4265 = vperm.slane %v4257, %v4264
    %v4266 = vrot.slane %v4229, 4
    %v4267 = vsel %vm2950, %v4266, %v4217
    %v4268 = vrot.slane %v4217, 4
    %v4269 = vsel %vm2950, %v4229, %v4268
    %v4271 = vunpack.c.l.s4 1934713408
    %v4272 = vunpack.c.0.s8 %v4271
    %v4273 = vperm.slane %v4267, %v4272
    %v4275 = vunpack.c.l.s4 1934713408
    %v4276 = vunpack.c.0.s8 %v4275
    %v4277 = vperm.slane %v4269, %v4276
    %v4278 = vrot.slane %v4261, 4
    %v4279 = vsel %vm2950, %v4278, %v4237
    %v4280 = vrot.slane %v4237, 4
    %v4281 = vsel %vm2950, %v4261, %v4280
    %v4282 = vrot.slane %v4265, 4
    %v4283 = vsel %vm2950, %v4282, %v4241
    %v4284 = vrot.slane %v4241, 4
    %v4285 = vsel %vm2950, %v4265, %v4284
    %v4286 = vrot.slane %v4273, 4
    %v4287 = vsel %vm2950, %v4286, %v4249
    %v4288 = vrot.slane %v4249, 4
    %v4289 = vsel %vm2950, %v4273, %v4288
    %v4290 = vrot.slane %v4277, 4
    %v4291 = vsel %vm2950, %v4290, %v4253
    %v4292 = vrot.slane %v4253, 4
    %v4293 = vsel %vm2950, %v4277, %v4292
    %v4294 = vrot.slane %v2865, 4
    %v4295 = vsel %vm2950, %v4294, %v2833
    %v4296 = vrot.slane %v2833, 4
    %v4297 = vsel %vm2950, %v2865, %v4296
    %v4299 = vunpack.c.l.s4 1983009808
    %v4300 = vunpack.c.0.s8 %v4299
    %v4301 = vperm.slane %v4295, %v4300
    %v4303 = vunpack.c.l.s4 1983009808
    %v4304 = vunpack.c.0.s8 %v4303
    %v4305 = vperm.slane %v4297, %v4304
    %v4306 = vrot.slane %v2881, 4
    %v4307 = vsel %vm2950, %v4306, %v2849
    %v4308 = vrot.slane %v2849, 4
    %v4309 = vsel %vm2950, %v2881, %v4308
    %v4311 = vunpack.c.l.s4 1983009808
    %v4312 = vunpack.c.0.s8 %v4311
    %v4313 = vperm.slane %v4307, %v4312
    %v4315 = vunpack.c.l.s4 1983009808
    %v4316 = vunpack.c.0.s8 %v4315
    %v4317 = vperm.slane %v4309, %v4316
    %v4318 = vrot.slane %v2929, 4
    %v4319 = vsel %vm2950, %v4318, %v2897
    %v4320 = vrot.slane %v2897, 4
    %v4321 = vsel %vm2950, %v2929, %v4320
    %v4323 = vunpack.c.l.s4 1983009808
    %v4324 = vunpack.c.0.s8 %v4323
    %v4325 = vperm.slane %v4319, %v4324
    %v4327 = vunpack.c.l.s4 1983009808
    %v4328 = vunpack.c.0.s8 %v4327
    %v4329 = vperm.slane %v4321, %v4328
    %v4330 = vrot.slane %v2945, 4
    %v4331 = vsel %vm2950, %v4330, %v2913
    %v4332 = vrot.slane %v2913, 4
    %v4333 = vsel %vm2950, %v2945, %v4332
    %v4335 = vunpack.c.l.s4 1983009808
    %v4336 = vunpack.c.0.s8 %v4335
    %v4337 = vperm.slane %v4331, %v4336
    %v4339 = vunpack.c.l.s4 1983009808
    %v4340 = vunpack.c.0.s8 %v4339
    %v4341 = vperm.slane %v4333, %v4340
    %v4342 = vrot.slane %v4313, 4
    %v4343 = vsel %vm2950, %v4342, %v4301
    %v4344 = vrot.slane %v4301, 4
    %v4345 = vsel %vm2950, %v4313, %v4344
    %v4347 = vunpack.c.l.s4 1934713408
    %v4348 = vunpack.c.0.s8 %v4347
    %v4349 = vperm.slane %v4343, %v4348
    %v4351 = vunpack.c.l.s4 1934713408
    %v4352 = vunpack.c.0.s8 %v4351
    %v4353 = vperm.slane %v4345, %v4352
    %v4354 = vrot.slane %v4317, 4
    %v4355 = vsel %vm2950, %v4354, %v4305
    %v4356 = vrot.slane %v4305, 4
    %v4357 = vsel %vm2950, %v4317, %v4356
    %v4359 = vunpack.c.l.s4 1934713408
    %v4360 = vunpack.c.0.s8 %v4359
    %v4361 = vperm.slane %v4355, %v4360
    %v4363 = vunpack.c.l.s4 1934713408
    %v4364 = vunpack.c.0.s8 %v4363
    %v4365 = vperm.slane %v4357, %v4364
    %v4366 = vrot.slane %v4337, 4
    %v4367 = vsel %vm2950, %v4366, %v4325
    %v4368 = vrot.slane %v4325, 4
    %v4369 = vsel %vm2950, %v4337, %v4368
    %v4371 = vunpack.c.l.s4 1934713408
    %v4372 = vunpack.c.0.s8 %v4371
    %v4373 = vperm.slane %v4367, %v4372
    %v4375 = vunpack.c.l.s4 1934713408
    %v4376 = vunpack.c.0.s8 %v4375
    %v4377 = vperm.slane %v4369, %v4376
    %v4378 = vrot.slane %v4341, 4
    %v4379 = vsel %vm2950, %v4378, %v4329
    %v4380 = vrot.slane %v4329, 4
    %v4381 = vsel %vm2950, %v4341, %v4380
    %v4383 = vunpack.c.l.s4 1934713408
    %v4384 = vunpack.c.0.s8 %v4383
    %v4385 = vperm.slane %v4379, %v4384
    %v4387 = vunpack.c.l.s4 1934713408
    %v4388 = vunpack.c.0.s8 %v4387
    %v4389 = vperm.slane %v4381, %v4388
    %v4390 = vrot.slane %v4373, 4
    %v4391 = vsel %vm2950, %v4390, %v4349
    %v4392 = vrot.slane %v4349, 4
    %v4393 = vsel %vm2950, %v4373, %v4392
    %v4394 = vrot.slane %v4377, 4
    %v4395 = vsel %vm2950, %v4394, %v4353
    %v4396 = vrot.slane %v4353, 4
    %v4397 = vsel %vm2950, %v4377, %v4396
    %v4398 = vrot.slane %v4385, 4
    %v4399 = vsel %vm2950, %v4398, %v4361
    %v4400 = vrot.slane %v4361, 4
    %v4401 = vsel %vm2950, %v4385, %v4400
    %v4402 = vrot.slane %v4389, 4
    %v4403 = vsel %vm2950, %v4402, %v4365
    %v4404 = vrot.slane %v4365, 4
    %v4405 = vsel %vm2950, %v4389, %v4404
    %v4406 = vrot.slane %v2866, 4
    %v4407 = vsel %vm2950, %v4406, %v2834
    %v4408 = vrot.slane %v2834, 4
    %v4409 = vsel %vm2950, %v2866, %v4408
    %v4411 = vunpack.c.l.s4 1983009808
    %v4412 = vunpack.c.0.s8 %v4411
    %v4413 = vperm.slane %v4407, %v4412
    %v4415 = vunpack.c.l.s4 1983009808
    %v4416 = vunpack.c.0.s8 %v4415
    %v4417 = vperm.slane %v4409, %v4416
    %v4418 = vrot.slane %v2882, 4
    %v4419 = vsel %vm2950, %v4418, %v2850
    %v4420 = vrot.slane %v2850, 4
    %v4421 = vsel %vm2950, %v2882, %v4420
    %v4423 = vunpack.c.l.s4 1983009808
    %v4424 = vunpack.c.0.s8 %v4423
    %v4425 = vperm.slane %v4419, %v4424
    %v4427 = vunpack.c.l.s4 1983009808
    %v4428 = vunpack.c.0.s8 %v4427
    %v4429 = vperm.slane %v4421, %v4428
    %v4430 = vrot.slane %v2930, 4
    %v4431 = vsel %vm2950, %v4430, %v2898
    %v4432 = vrot.slane %v2898, 4
    %v4433 = vsel %vm2950, %v2930, %v4432
    %v4435 = vunpack.c.l.s4 1983009808
    %v4436 = vunpack.c.0.s8 %v4435
    %v4437 = vperm.slane %v4431, %v4436
    %v4439 = vunpack.c.l.s4 1983009808
    %v4440 = vunpack.c.0.s8 %v4439
    %v4441 = vperm.slane %v4433, %v4440
    %v4442 = vrot.slane %v2946, 4
    %v4443 = vsel %vm2950, %v4442, %v2914
    %v4444 = vrot.slane %v2914, 4
    %v4445 = vsel %vm2950, %v2946, %v4444
    %v4447 = vunpack.c.l.s4 1983009808
    %v4448 = vunpack.c.0.s8 %v4447
    %v4449 = vperm.slane %v4443, %v4448
    %v4451 = vunpack.c.l.s4 1983009808
    %v4452 = vunpack.c.0.s8 %v4451
    %v4453 = vperm.slane %v4445, %v4452
    %v4454 = vrot.slane %v4425, 4
    %v4455 = vsel %vm2950, %v4454, %v4413
    %v4456 = vrot.slane %v4413, 4
    %v4457 = vsel %vm2950, %v4425, %v4456
    %v4459 = vunpack.c.l.s4 1934713408
    %v4460 = vunpack.c.0.s8 %v4459
    %v4461 = vperm.slane %v4455, %v4460
    %v4463 = vunpack.c.l.s4 1934713408
    %v4464 = vunpack.c.0.s8 %v4463
    %v4465 = vperm.slane %v4457, %v4464
    %v4466 = vrot.slane %v4429, 4
    %v4467 = vsel %vm2950, %v4466, %v4417
    %v4468 = vrot.slane %v4417, 4
    %v4469 = vsel %vm2950, %v4429, %v4468
    %v4471 = vunpack.c.l.s4 1934713408
    %v4472 = vunpack.c.0.s8 %v4471
    %v4473 = vperm.slane %v4467, %v4472
    %v4475 = vunpack.c.l.s4 1934713408
    %v4476 = vunpack.c.0.s8 %v4475
    %v4477 = vperm.slane %v4469, %v4476
    %v4478 = vrot.slane %v4449, 4
    %v4479 = vsel %vm2950, %v4478, %v4437
    %v4480 = vrot.slane %v4437, 4
    %v4481 = vsel %vm2950, %v4449, %v4480
    %v4483 = vunpack.c.l.s4 1934713408
    %v4484 = vunpack.c.0.s8 %v4483
    %v4485 = vperm.slane %v4479, %v4484
    %v4487 = vunpack.c.l.s4 1934713408
    %v4488 = vunpack.c.0.s8 %v4487
    %v4489 = vperm.slane %v4481, %v4488
    %v4490 = vrot.slane %v4453, 4
    %v4491 = vsel %vm2950, %v4490, %v4441
    %v4492 = vrot.slane %v4441, 4
    %v4493 = vsel %vm2950, %v4453, %v4492
    %v4495 = vunpack.c.l.s4 1934713408
    %v4496 = vunpack.c.0.s8 %v4495
    %v4497 = vperm.slane %v4491, %v4496
    %v4499 = vunpack.c.l.s4 1934713408
    %v4500 = vunpack.c.0.s8 %v4499
    %v4501 = vperm.slane %v4493, %v4500
    %v4502 = vrot.slane %v4485, 4
    %v4503 = vsel %vm2950, %v4502, %v4461
    %v4504 = vrot.slane %v4461, 4
    %v4505 = vsel %vm2950, %v4485, %v4504
    %v4506 = vrot.slane %v4489, 4
    %v4507 = vsel %vm2950, %v4506, %v4465
    %v4508 = vrot.slane %v4465, 4
    %v4509 = vsel %vm2950, %v4489, %v4508
    %v4510 = vrot.slane %v4497, 4
    %v4511 = vsel %vm2950, %v4510, %v4473
    %v4512 = vrot.slane %v4473, 4
    %v4513 = vsel %vm2950, %v4497, %v4512
    %v4514 = vrot.slane %v4501, 4
    %v4515 = vsel %vm2950, %v4514, %v4477
    %v4516 = vrot.slane %v4477, 4
    %v4517 = vsel %vm2950, %v4501, %v4516
    %v4518 = vrot.slane %v2867, 4
    %v4519 = vsel %vm2950, %v4518, %v2835
    %v4520 = vrot.slane %v2835, 4
    %v4521 = vsel %vm2950, %v2867, %v4520
    %v4523 = vunpack.c.l.s4 1983009808
    %v4524 = vunpack.c.0.s8 %v4523
    %v4525 = vperm.slane %v4519, %v4524
    %v4527 = vunpack.c.l.s4 1983009808
    %v4528 = vunpack.c.0.s8 %v4527
    %v4529 = vperm.slane %v4521, %v4528
    %v4530 = vrot.slane %v2883, 4
    %v4531 = vsel %vm2950, %v4530, %v2851
    %v4532 = vrot.slane %v2851, 4
    %v4533 = vsel %vm2950, %v2883, %v4532
    %v4535 = vunpack.c.l.s4 1983009808
    %v4536 = vunpack.c.0.s8 %v4535
    %v4537 = vperm.slane %v4531, %v4536
    %v4539 = vunpack.c.l.s4 1983009808
    %v4540 = vunpack.c.0.s8 %v4539
    %v4541 = vperm.slane %v4533, %v4540
    %v4542 = vrot.slane %v2931, 4
    %v4543 = vsel %vm2950, %v4542, %v2899
    %v4544 = vrot.slane %v2899, 4
    %v4545 = vsel %vm2950, %v2931, %v4544
    %v4547 = vunpack.c.l.s4 1983009808
    %v4548 = vunpack.c.0.s8 %v4547
    %v4549 = vperm.slane %v4543, %v4548
    %v4551 = vunpack.c.l.s4 1983009808
    %v4552 = vunpack.c.0.s8 %v4551
    %v4553 = vperm.slane %v4545, %v4552
    %v4554 = vrot.slane %v2947, 4
    %v4555 = vsel %vm2950, %v4554, %v2915
    %v4556 = vrot.slane %v2915, 4
    %v4557 = vsel %vm2950, %v2947, %v4556
    %v4559 = vunpack.c.l.s4 1983009808
    %v4560 = vunpack.c.0.s8 %v4559
    %v4561 = vperm.slane %v4555, %v4560
    %v4563 = vunpack.c.l.s4 1983009808
    %v4564 = vunpack.c.0.s8 %v4563
    %v4565 = vperm.slane %v4557, %v4564
    %v4566 = vrot.slane %v4537, 4
    %v4567 = vsel %vm2950, %v4566, %v4525
    %v4568 = vrot.slane %v4525, 4
    %v4569 = vsel %vm2950, %v4537, %v4568
    %v4571 = vunpack.c.l.s4 1934713408
    %v4572 = vunpack.c.0.s8 %v4571
    %v4573 = vperm.slane %v4567, %v4572
    %v4575 = vunpack.c.l.s4 1934713408
    %v4576 = vunpack.c.0.s8 %v4575
    %v4577 = vperm.slane %v4569, %v4576
    %v4578 = vrot.slane %v4541, 4
    %v4579 = vsel %vm2950, %v4578, %v4529
    %v4580 = vrot.slane %v4529, 4
    %v4581 = vsel %vm2950, %v4541, %v4580
    %v4583 = vunpack.c.l.s4 1934713408
    %v4584 = vunpack.c.0.s8 %v4583
    %v4585 = vperm.slane %v4579, %v4584
    %v4587 = vunpack.c.l.s4 1934713408
    %v4588 = vunpack.c.0.s8 %v4587
    %v4589 = vperm.slane %v4581, %v4588
    %v4590 = vrot.slane %v4561, 4
    %v4591 = vsel %vm2950, %v4590, %v4549
    %v4592 = vrot.slane %v4549, 4
    %v4593 = vsel %vm2950, %v4561, %v4592
    %v4595 = vunpack.c.l.s4 1934713408
    %v4596 = vunpack.c.0.s8 %v4595
    %v4597 = vperm.slane %v4591, %v4596
    %v4599 = vunpack.c.l.s4 1934713408
    %v4600 = vunpack.c.0.s8 %v4599
    %v4601 = vperm.slane %v4593, %v4600
    %v4602 = vrot.slane %v4565, 4
    %v4603 = vsel %vm2950, %v4602, %v4553
    %v4604 = vrot.slane %v4553, 4
    %v4605 = vsel %vm2950, %v4565, %v4604
    %v4607 = vunpack.c.l.s4 1934713408
    %v4608 = vunpack.c.0.s8 %v4607
    %v4609 = vperm.slane %v4603, %v4608
    %v4611 = vunpack.c.l.s4 1934713408
    %v4612 = vunpack.c.0.s8 %v4611
    %v4613 = vperm.slane %v4605, %v4612
    %v4614 = vrot.slane %v4597, 4
    %v4615 = vsel %vm2950, %v4614, %v4573
    %v4616 = vrot.slane %v4573, 4
    %v4617 = vsel %vm2950, %v4597, %v4616
    %v4618 = vrot.slane %v4601, 4
    %v4619 = vsel %vm2950, %v4618, %v4577
    %v4620 = vrot.slane %v4577, 4
    %v4621 = vsel %vm2950, %v4601, %v4620
    %v4622 = vrot.slane %v4609, 4
    %v4623 = vsel %vm2950, %v4622, %v4585
    %v4624 = vrot.slane %v4585, 4
    %v4625 = vsel %vm2950, %v4609, %v4624
    %v4626 = vrot.slane %v4613, 4
    %v4627 = vsel %vm2950, %v4626, %v4589
    %v4628 = vrot.slane %v4589, 4
    %v4629 = vsel %vm2950, %v4613, %v4628
    %v4630 = vrot.slane %v2868, 4
    %v4631 = vsel %vm2950, %v4630, %v2836
    %v4632 = vrot.slane %v2836, 4
    %v4633 = vsel %vm2950, %v2868, %v4632
    %v4635 = vunpack.c.l.s4 1983009808
    %v4636 = vunpack.c.0.s8 %v4635
    %v4637 = vperm.slane %v4631, %v4636
    %v4639 = vunpack.c.l.s4 1983009808
    %v4640 = vunpack.c.0.s8 %v4639
    %v4641 = vperm.slane %v4633, %v4640
    %v4642 = vrot.slane %v2884, 4
    %v4643 = vsel %vm2950, %v4642, %v2852
    %v4644 = vrot.slane %v2852, 4
    %v4645 = vsel %vm2950, %v2884, %v4644
    %v4647 = vunpack.c.l.s4 1983009808
    %v4648 = vunpack.c.0.s8 %v4647
    %v4649 = vperm.slane %v4643, %v4648
    %v4651 = vunpack.c.l.s4 1983009808
    %v4652 = vunpack.c.0.s8 %v4651
    %v4653 = vperm.slane %v4645, %v4652
    %v4654 = vrot.slane %v2932, 4
    %v4655 = vsel %vm2950, %v4654, %v2900
    %v4656 = vrot.slane %v2900, 4
    %v4657 = vsel %vm2950, %v2932, %v4656
    %v4659 = vunpack.c.l.s4 1983009808
    %v4660 = vunpack.c.0.s8 %v4659
    %v4661 = vperm.slane %v4655, %v4660
    %v4663 = vunpack.c.l.s4 1983009808
    %v4664 = vunpack.c.0.s8 %v4663
    %v4665 = vperm.slane %v4657, %v4664
    %v4666 = vrot.slane %v2948, 4
    %v4667 = vsel %vm2950, %v4666, %v2916
    %v4668 = vrot.slane %v2916, 4
    %v4669 = vsel %vm2950, %v2948, %v4668
    %v4671 = vunpack.c.l.s4 1983009808
    %v4672 = vunpack.c.0.s8 %v4671
    %v4673 = vperm.slane %v4667, %v4672
    %v4675 = vunpack.c.l.s4 1983009808
    %v4676 = vunpack.c.0.s8 %v4675
    %v4677 = vperm.slane %v4669, %v4676
    %v4678 = vrot.slane %v4649, 4
    %v4679 = vsel %vm2950, %v4678, %v4637
    %v4680 = vrot.slane %v4637, 4
    %v4681 = vsel %vm2950, %v4649, %v4680
    %v4683 = vunpack.c.l.s4 1934713408
    %v4684 = vunpack.c.0.s8 %v4683
    %v4685 = vperm.slane %v4679, %v4684
    %v4687 = vunpack.c.l.s4 1934713408
    %v4688 = vunpack.c.0.s8 %v4687
    %v4689 = vperm.slane %v4681, %v4688
    %v4690 = vrot.slane %v4653, 4
    %v4691 = vsel %vm2950, %v4690, %v4641
    %v4692 = vrot.slane %v4641, 4
    %v4693 = vsel %vm2950, %v4653, %v4692
    %v4695 = vunpack.c.l.s4 1934713408
    %v4696 = vunpack.c.0.s8 %v4695
    %v4697 = vperm.slane %v4691, %v4696
    %v4699 = vunpack.c.l.s4 1934713408
    %v4700 = vunpack.c.0.s8 %v4699
    %v4701 = vperm.slane %v4693, %v4700
    %v4702 = vrot.slane %v4673, 4
    %v4703 = vsel %vm2950, %v4702, %v4661
    %v4704 = vrot.slane %v4661, 4
    %v4705 = vsel %vm2950, %v4673, %v4704
    %v4707 = vunpack.c.l.s4 1934713408
    %v4708 = vunpack.c.0.s8 %v4707
    %v4709 = vperm.slane %v4703, %v4708
    %v4711 = vunpack.c.l.s4 1934713408
    %v4712 = vunpack.c.0.s8 %v4711
    %v4713 = vperm.slane %v4705, %v4712
    %v4714 = vrot.slane %v4677, 4
    %v4715 = vsel %vm2950, %v4714, %v4665
    %v4716 = vrot.slane %v4665, 4
    %v4717 = vsel %vm2950, %v4677, %v4716
    %v4719 = vunpack.c.l.s4 1934713408
    %v4720 = vunpack.c.0.s8 %v4719
    %v4721 = vperm.slane %v4715, %v4720
    %v4723 = vunpack.c.l.s4 1934713408
    %v4724 = vunpack.c.0.s8 %v4723
    %v4725 = vperm.slane %v4717, %v4724
    %v4726 = vrot.slane %v4709, 4
    %v4727 = vsel %vm2950, %v4726, %v4685
    %v4728 = vrot.slane %v4685, 4
    %v4729 = vsel %vm2950, %v4709, %v4728
    %v4730 = vrot.slane %v4713, 4
    %v4731 = vsel %vm2950, %v4730, %v4689
    %v4732 = vrot.slane %v4689, 4
    %v4733 = vsel %vm2950, %v4713, %v4732
    %v4734 = vrot.slane %v4721, 4
    %v4735 = vsel %vm2950, %v4734, %v4697
    %v4736 = vrot.slane %v4697, 4
    %v4737 = vsel %vm2950, %v4721, %v4736
    %v4738 = vrot.slane %v4725, 4
    %v4739 = vsel %vm2950, %v4738, %v4701
    %v4740 = vrot.slane %v4701, 4
    %v4741 = vsel %vm2950, %v4725, %v4740
    %4743 = vrot.lane.b32.xlu0 %v3049, 3
    %v4744 = vpop.permute.xlu0 %4743
    %4747 = vrot.lane.b32.xlu0 %v3051, 6
    %v4748 = vpop.permute.xlu0 %4747
    %4751 = vrot.lane.b32.xlu0 %v3053, 9
    %v4752 = vpop.permute.xlu0 %4751
    %4755 = vrot.lane.b32.xlu0 %v3055, 12
    %v4756 = vpop.permute.xlu0 %4755
    %4759 = vrot.lane.b32.xlu0 %v3057, 15
    %v4760 = vpop.permute.xlu0 %4759
    %4763 = vrot.lane.b32.xlu0 %v3059, 18
    %v4764 = vpop.permute.xlu0 %4763
    %4767 = vrot.lane.b32.xlu0 %v3061, 21
    %v4768 = vpop.permute.xlu0 %4767
    %4771 = vrot.lane.b32.xlu0 %v3159, 24
    %v4772 = vpop.permute.xlu0 %4771
    %4775 = vrot.lane.b32.xlu0 %v3161, 27
    %v4776 = vpop.permute.xlu0 %4775
    %4779 = vrot.lane.b32.xlu0 %v3163, 30
    %v4780 = vpop.permute.xlu0 %4779
    %4783 = vrot.lane.b32.xlu0 %v3165, 33
    %v4784 = vpop.permute.xlu0 %4783
    %4787 = vrot.lane.b32.xlu0 %v3167, 36
    %v4788 = vpop.permute.xlu0 %4787
    %4791 = vrot.lane.b32.xlu0 %v3169, 39
    %v4792 = vpop.permute.xlu0 %4791
    %4795 = vrot.lane.b32.xlu0 %v3171, 42
    %v4796 = vpop.permute.xlu0 %4795
    %4799 = vrot.lane.b32.xlu0 %v3173, 45
    %v4800 = vpop.permute.xlu0 %4799
    %4803 = vrot.lane.b32.xlu0 %v3271, 48
    %v4804 = vpop.permute.xlu0 %4803
    %4807 = vrot.lane.b32.xlu0 %v3273, 51
    %v4808 = vpop.permute.xlu0 %4807
    %4811 = vrot.lane.b32.xlu0 %v3275, 54
    %v4812 = vpop.permute.xlu0 %4811
    %4815 = vrot.lane.b32.xlu0 %v3277, 57
    %v4816 = vpop.permute.xlu0 %4815
    %4819 = vrot.lane.b32.xlu0 %v3279, 60
    %v4820 = vpop.permute.xlu0 %4819
    %4823 = vrot.lane.b32.xlu0 %v3281, 63
    %v4824 = vpop.permute.xlu0 %4823
    %4827 = vrot.lane.b32.xlu0 %v3283, 66
    %v4828 = vpop.permute.xlu0 %4827
    %4831 = vrot.lane.b32.xlu0 %v3285, 69
    %v4832 = vpop.permute.xlu0 %4831
    %4835 = vrot.lane.b32.xlu0 %v3383, 72
    %v4836 = vpop.permute.xlu0 %4835
    %4839 = vrot.lane.b32.xlu0 %v3385, 75
    %v4840 = vpop.permute.xlu0 %4839
    %4843 = vrot.lane.b32.xlu0 %v3387, 78
    %v4844 = vpop.permute.xlu0 %4843
    %4847 = vrot.lane.b32.xlu0 %v3389, 81
    %v4848 = vpop.permute.xlu0 %4847
    %4851 = vrot.lane.b32.xlu0 %v3391, 84
    %v4852 = vpop.permute.xlu0 %4851
    %4855 = vrot.lane.b32.xlu0 %v3393, 87
    %v4856 = vpop.permute.xlu0 %4855
    %4859 = vrot.lane.b32.xlu0 %v3395, 90
    %v4860 = vpop.permute.xlu0 %4859
    %4863 = vrot.lane.b32.xlu0 %v3397, 93
    %v4864 = vpop.permute.xlu0 %4863
    %4867 = vrot.lane.b32.xlu0 %v3495, 96
    %v4868 = vpop.permute.xlu0 %4867
    %4871 = vrot.lane.b32.xlu0 %v3497, 99
    %v4872 = vpop.permute.xlu0 %4871
    %4875 = vrot.lane.b32.xlu0 %v3499, 102
    %v4876 = vpop.permute.xlu0 %4875
    %4879 = vrot.lane.b32.xlu0 %v3501, 105
    %v4880 = vpop.permute.xlu0 %4879
    %4883 = vrot.lane.b32.xlu0 %v3503, 108
    %v4884 = vpop.permute.xlu0 %4883
    %4887 = vrot.lane.b32.xlu0 %v3505, 111
    %v4888 = vpop.permute.xlu0 %4887
    %4891 = vrot.lane.b32.xlu0 %v3507, 114
    %v4892 = vpop.permute.xlu0 %4891
    %4895 = vrot.lane.b32.xlu0 %v3509, 117
    %v4896 = vpop.permute.xlu0 %4895
    %4899 = vrot.lane.b32.xlu0 %v3607, 120
    %v4900 = vpop.permute.xlu0 %4899
    %4903 = vrot.lane.b32.xlu0 %v3609, 123
    %v4904 = vpop.permute.xlu0 %4903
    %4907 = vrot.lane.b32.xlu0 %v3611, 126
    %v4908 = vpop.permute.xlu0 %4907
    %4911 = vrot.lane.b32.xlu0 %v3613, 1
    %v4912 = vpop.permute.xlu0 %4911
    %4915 = vrot.lane.b32.xlu0 %v3615, 4
    %v4916 = vpop.permute.xlu0 %4915
    %4919 = vrot.lane.b32.xlu0 %v3617, 7
    %v4920 = vpop.permute.xlu0 %4919
    %4923 = vrot.lane.b32.xlu0 %v3619, 10
    %v4924 = vpop.permute.xlu0 %4923
    %4927 = vrot.lane.b32.xlu0 %v3621, 13
    %v4928 = vpop.permute.xlu0 %4927
    %4931 = vrot.lane.b32.xlu0 %v3719, 16
    %v4932 = vpop.permute.xlu0 %4931
    %4935 = vrot.lane.b32.xlu0 %v3721, 19
    %v4936 = vpop.permute.xlu0 %4935
    %4939 = vrot.lane.b32.xlu0 %v3723, 22
    %v4940 = vpop.permute.xlu0 %4939
    %4943 = vrot.lane.b32.xlu0 %v3725, 25
    %v4944 = vpop.permute.xlu0 %4943
    %4947 = vrot.lane.b32.xlu0 %v3727, 28
    %v4948 = vpop.permute.xlu0 %4947
    %4951 = vrot.lane.b32.xlu0 %v3729, 31
    %v4952 = vpop.permute.xlu0 %4951
    %4955 = vrot.lane.b32.xlu0 %v3731, 34
    %v4956 = vpop.permute.xlu0 %4955
    %4959 = vrot.lane.b32.xlu0 %v3733, 37
    %v4960 = vpop.permute.xlu0 %4959
    %4963 = vrot.lane.b32.xlu0 %v3831, 40
    %v4964 = vpop.permute.xlu0 %4963
    %4967 = vrot.lane.b32.xlu0 %v3833, 43
    %v4968 = vpop.permute.xlu0 %4967
    %4971 = vrot.lane.b32.xlu0 %v3835, 46
    %v4972 = vpop.permute.xlu0 %4971
    %4975 = vrot.lane.b32.xlu0 %v3837, 49
    %v4976 = vpop.permute.xlu0 %4975
    %4979 = vrot.lane.b32.xlu0 %v3839, 52
    %v4980 = vpop.permute.xlu0 %4979
    %4983 = vrot.lane.b32.xlu0 %v3841, 55
    %v4984 = vpop.permute.xlu0 %4983
    %4987 = vrot.lane.b32.xlu0 %v3843, 58
    %v4988 = vpop.permute.xlu0 %4987
    %4991 = vrot.lane.b32.xlu0 %v3845, 61
    %v4992 = vpop.permute.xlu0 %4991
    %4995 = vrot.lane.b32.xlu0 %v3943, 64
    %v4996 = vpop.permute.xlu0 %4995
    %4999 = vrot.lane.b32.xlu0 %v3945, 67
    %v5000 = vpop.permute.xlu0 %4999
    %5003 = vrot.lane.b32.xlu0 %v3947, 70
    %v5004 = vpop.permute.xlu0 %5003
    %5007 = vrot.lane.b32.xlu0 %v3949, 73
    %v5008 = vpop.permute.xlu0 %5007
    %5011 = vrot.lane.b32.xlu0 %v3951, 76
    %v5012 = vpop.permute.xlu0 %5011
    %5015 = vrot.lane.b32.xlu0 %v3953, 79
    %v5016 = vpop.permute.xlu0 %5015
    %5019 = vrot.lane.b32.xlu0 %v3955, 82
    %v5020 = vpop.permute.xlu0 %5019
    %5023 = vrot.lane.b32.xlu0 %v3957, 85
    %v5024 = vpop.permute.xlu0 %5023
    %5027 = vrot.lane.b32.xlu0 %v4055, 88
    %v5028 = vpop.permute.xlu0 %5027
    %5031 = vrot.lane.b32.xlu0 %v4057, 91
    %v5032 = vpop.permute.xlu0 %5031
    %5035 = vrot.lane.b32.xlu0 %v4059, 94
    %v5036 = vpop.permute.xlu0 %5035
    %5039 = vrot.lane.b32.xlu0 %v4061, 97
    %v5040 = vpop.permute.xlu0 %5039
    %5043 = vrot.lane.b32.xlu0 %v4063, 100
    %v5044 = vpop.permute.xlu0 %5043
    %5047 = vrot.lane.b32.xlu0 %v4065, 103
    %v5048 = vpop.permute.xlu0 %5047
    %5051 = vrot.lane.b32.xlu0 %v4067, 106
    %v5052 = vpop.permute.xlu0 %5051
    %5055 = vrot.lane.b32.xlu0 %v4069, 109
    %v5056 = vpop.permute.xlu0 %5055
    %5059 = vrot.lane.b32.xlu0 %v4167, 112
    %v5060 = vpop.permute.xlu0 %5059
    %5063 = vrot.lane.b32.xlu0 %v4169, 115
    %v5064 = vpop.permute.xlu0 %5063
    %5067 = vrot.lane.b32.xlu0 %v4171, 118
    %v5068 = vpop.permute.xlu0 %5067
    %5071 = vrot.lane.b32.xlu0 %v4173, 121
    %v5072 = vpop.permute.xlu0 %5071
    %5075 = vrot.lane.b32.xlu0 %v4175, 124
    %v5076 = vpop.permute.xlu0 %5075
    %5079 = vrot.lane.b32.xlu0 %v4177, 127
    %v5080 = vpop.permute.xlu0 %5079
    %5083 = vrot.lane.b32.xlu0 %v4179, 2
    %v5084 = vpop.permute.xlu0 %5083
    %5087 = vrot.lane.b32.xlu0 %v4181, 5
    %v5088 = vpop.permute.xlu0 %5087
    %5091 = vrot.lane.b32.xlu0 %v4279, 8
    %v5092 = vpop.permute.xlu0 %5091
    %5095 = vrot.lane.b32.xlu0 %v4281, 11
    %v5096 = vpop.permute.xlu0 %5095
    %5099 = vrot.lane.b32.xlu0 %v4283, 14
    %v5100 = vpop.permute.xlu0 %5099
    %5103 = vrot.lane.b32.xlu0 %v4285, 17
    %v5104 = vpop.permute.xlu0 %5103
    %5107 = vrot.lane.b32.xlu0 %v4287, 20
    %v5108 = vpop.permute.xlu0 %5107
    %5111 = vrot.lane.b32.xlu0 %v4289, 23
    %v5112 = vpop.permute.xlu0 %5111
    %5115 = vrot.lane.b32.xlu0 %v4291, 26
    %v5116 = vpop.permute.xlu0 %5115
    %5119 = vrot.lane.b32.xlu0 %v4293, 29
    %v5120 = vpop.permute.xlu0 %5119
    %5123 = vrot.lane.b32.xlu0 %v4391, 32
    %v5124 = vpop.permute.xlu0 %5123
    %5127 = vrot.lane.b32.xlu0 %v4393, 35
    %v5128 = vpop.permute.xlu0 %5127
    %5131 = vrot.lane.b32.xlu0 %v4395, 38
    %v5132 = vpop.permute.xlu0 %5131
    %5135 = vrot.lane.b32.xlu0 %v4397, 41
    %v5136 = vpop.permute.xlu0 %5135
    %5139 = vrot.lane.b32.xlu0 %v4399, 44
    %v5140 = vpop.permute.xlu0 %5139
    %5143 = vrot.lane.b32.xlu0 %v4401, 47
    %v5144 = vpop.permute.xlu0 %5143
    %5147 = vrot.lane.b32.xlu0 %v4403, 50
    %v5148 = vpop.permute.xlu0 %5147
    %5151 = vrot.lane.b32.xlu0 %v4405, 53
    %v5152 = vpop.permute.xlu0 %5151
    %5155 = vrot.lane.b32.xlu0 %v4503, 56
    %v5156 = vpop.permute.xlu0 %5155
    %5159 = vrot.lane.b32.xlu0 %v4505, 59
    %v5160 = vpop.permute.xlu0 %5159
    %5163 = vrot.lane.b32.xlu0 %v4507, 62
    %v5164 = vpop.permute.xlu0 %5163
    %5167 = vrot.lane.b32.xlu0 %v4509, 65
    %v5168 = vpop.permute.xlu0 %5167
    %5171 = vrot.lane.b32.xlu0 %v4511, 68
    %v5172 = vpop.permute.xlu0 %5171
    %5175 = vrot.lane.b32.xlu0 %v4513, 71
    %v5176 = vpop.permute.xlu0 %5175
    %5179 = vrot.lane.b32.xlu0 %v4515, 74
    %v5180 = vpop.permute.xlu0 %5179
    %5183 = vrot.lane.b32.xlu0 %v4517, 77
    %v5184 = vpop.permute.xlu0 %5183
    %5187 = vrot.lane.b32.xlu0 %v4615, 80
    %v5188 = vpop.permute.xlu0 %5187
    %5191 = vrot.lane.b32.xlu0 %v4617, 83
    %v5192 = vpop.permute.xlu0 %5191
    %5195 = vrot.lane.b32.xlu0 %v4619, 86
    %v5196 = vpop.permute.xlu0 %5195
    %5199 = vrot.lane.b32.xlu0 %v4621, 89
    %v5200 = vpop.permute.xlu0 %5199
    %5203 = vrot.lane.b32.xlu0 %v4623, 92
    %v5204 = vpop.permute.xlu0 %5203
    %5207 = vrot.lane.b32.xlu0 %v4625, 95
    %v5208 = vpop.permute.xlu0 %5207
    %5211 = vrot.lane.b32.xlu0 %v4627, 98
    %v5212 = vpop.permute.xlu0 %5211
    %5215 = vrot.lane.b32.xlu0 %v4629, 101
    %v5216 = vpop.permute.xlu0 %5215
    %5219 = vrot.lane.b32.xlu0 %v4727, 104
    %v5220 = vpop.permute.xlu0 %5219
    %5223 = vrot.lane.b32.xlu0 %v4729, 107
    %v5224 = vpop.permute.xlu0 %5223
    %5227 = vrot.lane.b32.xlu0 %v4731, 110
    %v5228 = vpop.permute.xlu0 %5227
    %5231 = vrot.lane.b32.xlu0 %v4733, 113
    %v5232 = vpop.permute.xlu0 %5231
    %5235 = vrot.lane.b32.xlu0 %v4735, 116
    %v5236 = vpop.permute.xlu0 %5235
    %5239 = vrot.lane.b32.xlu0 %v4737, 119
    %v5240 = vpop.permute.xlu0 %5239
    %5243 = vrot.lane.b32.xlu0 %v4739, 122
    %v5244 = vpop.permute.xlu0 %5243
    %5247 = vrot.lane.b32.xlu0 %v4741, 125
    %v5248 = vpop.permute.xlu0 %5247
    %vm5250 = vcmask 23552
    %v5251 = vsel %vm5250, %v3047, %v4744
    %vm5252 = vcmask 48128
    %v5253 = vsel %vm5252, %v5251, %v4748
    %vm5254 = vcmask 72704
    %v5255 = vsel %vm5254, %v5253, %v4752
    %vm5256 = vcmask 97280
    %v5257 = vsel %vm5256, %v5255, %v4756
    %vm5258 = vcmask 121856
    %v5259 = vsel %vm5258, %v5257, %v4760
    %vm5260 = vcmask 146432
    %v5261 = vsel %vm5260, %v5259, %v4764
    %vm5262 = vcmask 171008
    %v5263 = vsel %vm5262, %v5261, %v4768
    %vm5264 = vcmask 195584
    %v5265 = vsel %vm5264, %v5263, %v4772
    %vm5266 = vcmask 220160
    %v5267 = vsel %vm5266, %v5265, %v4776
    %vm5268 = vcmask 244736
    %v5269 = vsel %vm5268, %v5267, %v4780
    %vm5270 = vcmask 269312
    %v5271 = vsel %vm5270, %v5269, %v4784
    %vm5272 = vcmask 293888
    %v5273 = vsel %vm5272, %v5271, %v4788
    %vm5274 = vcmask 318464
    %v5275 = vsel %vm5274, %v5273, %v4792
    %vm5276 = vcmask 343040
    %v5277 = vsel %vm5276, %v5275, %v4796
    %vm5278 = vcmask 367616
    %v5279 = vsel %vm5278, %v5277, %v4800
    %vm5280 = vcmask 392192
    %v5281 = vsel %vm5280, %v5279, %v4804
    %vm5282 = vcmask 416768
    %v5283 = vsel %vm5282, %v5281, %v4808
    %vm5284 = vcmask 441344
    %v5285 = vsel %vm5284, %v5283, %v4812
    %vm5286 = vcmask 465920
    %v5287 = vsel %vm5286, %v5285, %v4816
    %vm5288 = vcmask 490496
    %v5289 = vsel %vm5288, %v5287, %v4820
    %vm5290 = vcmask 515072
    %v5291 = vsel %vm5290, %v5289, %v4824
    %vm5292 = vcmask 539648
    %v5293 = vsel %vm5292, %v5291, %v4828
    %vm5294 = vcmask 564224
    %v5295 = vsel %vm5294, %v5293, %v4832
    %vm5296 = vcmask 588800
    %v5297 = vsel %vm5296, %v5295, %v4836
    %vm5298 = vcmask 613376
    %v5299 = vsel %vm5298, %v5297, %v4840
    %vm5300 = vcmask 637952
    %v5301 = vsel %vm5300, %v5299, %v4844
    %vm5302 = vcmask 662528
    %v5303 = vsel %vm5302, %v5301, %v4848
    %vm5304 = vcmask 687104
    %v5305 = vsel %vm5304, %v5303, %v4852
    %vm5306 = vcmask 711680
    %v5307 = vsel %vm5306, %v5305, %v4856
    %vm5308 = vcmask 736256
    %v5309 = vsel %vm5308, %v5307, %v4860
    %vm5310 = vcmask 760832
    %v5311 = vsel %vm5310, %v5309, %v4864
    %vm5312 = vcmask 785408
    %v5313 = vsel %vm5312, %v5311, %v4868
    %vm5314 = vcmask 809984
    %v5315 = vsel %vm5314, %v5313, %v4872
    %vm5316 = vcmask 834560
    %v5317 = vsel %vm5316, %v5315, %v4876
    %vm5318 = vcmask 859136
    %v5319 = vsel %vm5318, %v5317, %v4880
    %vm5320 = vcmask 883712
    %v5321 = vsel %vm5320, %v5319, %v4884
    %vm5322 = vcmask 908288
    %v5323 = vsel %vm5322, %v5321, %v4888
    %vm5324 = vcmask 932864
    %v5325 = vsel %vm5324, %v5323, %v4892
    %vm5326 = vcmask 957440
    %v5327 = vsel %vm5326, %v5325, %v4896
    %vm5328 = vcmask 982016
    %v5329 = vsel %vm5328, %v5327, %v4900
    %vm5330 = vcmask 1006592
    %v5331 = vsel %vm5330, %v5329, %v4904
    %vm5332 = vcmask 1031168
    %v5333 = vsel %vm5332, %v5331, %v4908
    %v5334 = vsel %vm2691, %v4908, %v4912
    %vm5335 = vcmask 31744
    %v5336 = vsel %vm5335, %v5334, %v4916
    %vm5337 = vcmask 56320
    %v5338 = vsel %vm5337, %v5336, %v4920
    %vm5339 = vcmask 80896
    %v5340 = vsel %vm5339, %v5338, %v4924
    %vm5341 = vcmask 105472
    %v5342 = vsel %vm5341, %v5340, %v4928
    %vm5343 = vcmask 130048
    %v5344 = vsel %vm5343, %v5342, %v4932
    %vm5345 = vcmask 154624
    %v5346 = vsel %vm5345, %v5344, %v4936
    %vm5347 = vcmask 179200
    %v5348 = vsel %vm5347, %v5346, %v4940
    %vm5349 = vcmask 203776
    %v5350 = vsel %vm5349, %v5348, %v4944
    %vm5351 = vcmask 228352
    %v5352 = vsel %vm5351, %v5350, %v4948
    %vm5353 = vcmask 252928
    %v5354 = vsel %vm5353, %v5352, %v4952
    %vm5355 = vcmask 277504
    %v5356 = vsel %vm5355, %v5354, %v4956
    %vm5357 = vcmask 302080
    %v5358 = vsel %vm5357, %v5356, %v4960
    %vm5359 = vcmask 326656
    %v5360 = vsel %vm5359, %v5358, %v4964
    %vm5361 = vcmask 351232
    %v5362 = vsel %vm5361, %v5360, %v4968
    %vm5363 = vcmask 375808
    %v5364 = vsel %vm5363, %v5362, %v4972
    %vm5365 = vcmask 400384
    %v5366 = vsel %vm5365, %v5364, %v4976
    %vm5367 = vcmask 424960
    %v5368 = vsel %vm5367, %v5366, %v4980
    %vm5369 = vcmask 449536
    %v5370 = vsel %vm5369, %v5368, %v4984
    %vm5371 = vcmask 474112
    %v5372 = vsel %vm5371, %v5370, %v4988
    %vm5373 = vcmask 498688
    %v5374 = vsel %vm5373, %v5372, %v4992
    %vm5375 = vcmask 523264
    %v5376 = vsel %vm5375, %v5374, %v4996
    %vm5377 = vcmask 547840
    %v5378 = vsel %vm5377, %v5376, %v5000
    %vm5379 = vcmask 572416
    %v5380 = vsel %vm5379, %v5378, %v5004
    %vm5381 = vcmask 596992
    %v5382 = vsel %vm5381, %v5380, %v5008
    %vm5383 = vcmask 621568
    %v5384 = vsel %vm5383, %v5382, %v5012
    %vm5385 = vcmask 646144
    %v5386 = vsel %vm5385, %v5384, %v5016
    %vm5387 = vcmask 670720
    %v5388 = vsel %vm5387, %v5386, %v5020
    %vm5389 = vcmask 695296
    %v5390 = vsel %vm5389, %v5388, %v5024
    %vm5391 = vcmask 719872
    %v5392 = vsel %vm5391, %v5390, %v5028
    %vm5393 = vcmask 744448
    %v5394 = vsel %vm5393, %v5392, %v5032
    %vm5395 = vcmask 769024
    %v5396 = vsel %vm5395, %v5394, %v5036
    %vm5397 = vcmask 793600
    %v5398 = vsel %vm5397, %v5396, %v5040
    %vm5399 = vcmask 818176
    %v5400 = vsel %vm5399, %v5398, %v5044
    %vm5401 = vcmask 842752
    %v5402 = vsel %vm5401, %v5400, %v5048
    %vm5403 = vcmask 867328
    %v5404 = vsel %vm5403, %v5402, %v5052
    %vm5405 = vcmask 891904
    %v5406 = vsel %vm5405, %v5404, %v5056
    %vm5407 = vcmask 916480
    %v5408 = vsel %vm5407, %v5406, %v5060
    %vm5409 = vcmask 941056
    %v5410 = vsel %vm5409, %v5408, %v5064
    %vm5411 = vcmask 965632
    %v5412 = vsel %vm5411, %v5410, %v5068
    %vm5413 = vcmask 990208
    %v5414 = vsel %vm5413, %v5412, %v5072
    %vm5415 = vcmask 1014784
    %v5416 = vsel %vm5415, %v5414, %v5076
    %vm5417 = vcmask 1039360
    %v5418 = vsel %vm5417, %v5416, %v5080
    %v5419 = vsel %vm2820, %v5080, %v5084
    %vm5420 = vcmask 39936
    %v5421 = vsel %vm5420, %v5419, %v5088
    %vm5422 = vcmask 64512
    %v5423 = vsel %vm5422, %v5421, %v5092
    %vm5424 = vcmask 89088
    %v5425 = vsel %vm5424, %v5423, %v5096
    %vm5426 = vcmask 113664
    %v5427 = vsel %vm5426, %v5425, %v5100
    %vm5428 = vcmask 138240
    %v5429 = vsel %vm5428, %v5427, %v5104
    %vm5430 = vcmask 162816
    %v5431 = vsel %vm5430, %v5429, %v5108
    %vm5432 = vcmask 187392
    %v5433 = vsel %vm5432, %v5431, %v5112
    %vm5434 = vcmask 211968
    %v5435 = vsel %vm5434, %v5433, %v5116
    %vm5436 = vcmask 236544
    %v5437 = vsel %vm5436, %v5435, %v5120
    %vm5438 = vcmask 261120
    %v5439 = vsel %vm5438, %v5437, %v5124
    %vm5440 = vcmask 285696
    %v5441 = vsel %vm5440, %v5439, %v5128
    %vm5442 = vcmask 310272
    %v5443 = vsel %vm5442, %v5441, %v5132
    %vm5444 = vcmask 334848
    %v5445 = vsel %vm5444, %v5443, %v5136
    %vm5446 = vcmask 359424
    %v5447 = vsel %vm5446, %v5445, %v5140
    %vm5448 = vcmask 384000
    %v5449 = vsel %vm5448, %v5447, %v5144
    %vm5450 = vcmask 408576
    %v5451 = vsel %vm5450, %v5449, %v5148
    %vm5452 = vcmask 433152
    %v5453 = vsel %vm5452, %v5451, %v5152
    %vm5454 = vcmask 457728
    %v5455 = vsel %vm5454, %v5453, %v5156
    %vm5456 = vcmask 482304
    %v5457 = vsel %vm5456, %v5455, %v5160
    %vm5458 = vcmask 506880
    %v5459 = vsel %vm5458, %v5457, %v5164
    %vm5460 = vcmask 531456
    %v5461 = vsel %vm5460, %v5459, %v5168
    %vm5462 = vcmask 556032
    %v5463 = vsel %vm5462, %v5461, %v5172
    %vm5464 = vcmask 580608
    %v5465 = vsel %vm5464, %v5463, %v5176
    %vm5466 = vcmask 605184
    %v5467 = vsel %vm5466, %v5465, %v5180
    %vm5468 = vcmask 629760
    %v5469 = vsel %vm5468, %v5467, %v5184
    %vm5470 = vcmask 654336
    %v5471 = vsel %vm5470, %v5469, %v5188
    %vm5472 = vcmask 678912
    %v5473 = vsel %vm5472, %v5471, %v5192
    %vm5474 = vcmask 703488
    %v5475 = vsel %vm5474, %v5473, %v5196
    %vm5476 = vcmask 728064
    %v5477 = vsel %vm5476, %v5475, %v5200
    %vm5478 = vcmask 752640
    %v5479 = vsel %vm5478, %v5477, %v5204
    %vm5480 = vcmask 777216
    %v5481 = vsel %vm5480, %v5479, %v5208
    %vm5482 = vcmask 801792
    %v5483 = vsel %vm5482, %v5481, %v5212
    %vm5484 = vcmask 826368
    %v5485 = vsel %vm5484, %v5483, %v5216
    %vm5486 = vcmask 850944
    %v5487 = vsel %vm5486, %v5485, %v5220
    %vm5488 = vcmask 875520
    %v5489 = vsel %vm5488, %v5487, %v5224
    %vm5490 = vcmask 900096
    %v5491 = vsel %vm5490, %v5489, %v5228
    %vm5492 = vcmask 924672
    %v5493 = vsel %vm5492, %v5491, %v5232
    %vm5494 = vcmask 949248
    %v5495 = vsel %vm5494, %v5493, %v5236
    %vm5496 = vcmask 973824
    %v5497 = vsel %vm5496, %v5495, %v5240
    %vm5498 = vcmask 998400
    %v5499 = vsel %vm5498, %v5497, %v5244
    %vm5500 = vcmask 1022976
    %v5501 = vsel %vm5500, %v5499, %v5248
    %5502 = vst [vmem:[#allocation7] sm:$0xff] %v5333
    %5503 = vst [vmem:[#allocation7 + $0x8] sm:$0xff] %v5418
    %5504 = vst [vmem:[#allocation7 + $0x10] sm:$0xff] %v5501
    // Predicated region
    $region18: #{tpu_custom_call.1} parent=1 // pred_check
      _
    $region19: #{tpu_custom_call.1} parent=1 // pred_check_branch
      %5506 = sbr.rel (0) target = $region21
    $region20: #{tpu_custom_call.1} parent=1 // pred_region
      %5508 = vsyncadd [#allocation4], 0
      %s5510 = sshll.u32 [#allocation7], 4
      %s5511 = int_to_ptr.vmem [resolvable:$true] %s5510
      %s5512 = sshll.u32 %s2, 4
      %s5513 = int_to_ptr.hbm [resolvable:$true] %s5512
      %5515 = dma.vmem_to_hbm [thread:$0]  %s5511, 384, %s5513, [#allocation4]
    $region21: #{tpu_custom_call.1} parent=1 // pred_fallthru
      _
    // Predicated region
    $region22: #{tpu_custom_call.1} parent=1 // pred_check
      _
    $region23: #{tpu_custom_call.1} parent=1 // pred_check_branch
      %5517 = sbr.rel (0) target = $region25
    $region24: #{tpu_custom_call.1} parent=1 // pred_region
      %5519 = dma.done [#allocation4], 384
    $region25: #{tpu_custom_call.1} parent=1 // pred_fallthru
      _
    %5520 = vsyncpa [#allocation3], 1
    %5521 = vsyncpa [#allocation4], 1
    %5522 = vsyncpa [#allocation5], 1

// kernel: tpu_custom_call.1
$region0: #{tpu_custom_call.1}
  #allocation0 [shape = 'u32[]', space=smem, size = 0x4, offset = 0x4, fixed_abs, tag = 'smem constant byte address 0x4 - core index']
  #allocation1 [shape = 'u32[72,128]{1,0:T(1,128)}', space=vmem, size = 0x9000, scoped, tag = 'internal scratch']
  %s0 = inlined_call_operand.hbm [shape: f32[4], index: 0, kind: input, shape index: {}]
  %s1 = inlined_call_operand.hbm [shape: f32[1,128], index: 1, kind: input, shape index: {}]
  %s2 = inlined_call_operand.hbm [shape: f32[3,1,128], index: 2, kind: output, shape index: {}]
  %s3 = sld [smem:[#allocation0]]
  $region26: #{tpu_custom_call.1} parent=0
    _
  %s5 = ssub.s32 1, %s3
  %s6 = scalar_select 0, %s5, %s3
  $region1: #{tpu_custom_call.1} parent=0
    #allocation2 [shape = 'u8[512]{0}', space=smem, size = 0x200, scoped, tag = 'input window, operand 0, single buffered']
    #allocation3 [shape = 's32[1]{0}', space=sflag, size = 0x4, scoped, tag = 'scoped memory for tpu_custom_call.1']
    #allocation4 [shape = 's32[1]{0}', space=sflag, size = 0x4, scoped, tag = 'scoped memory for tpu_custom_call.1']
    #allocation5 [shape = 's32[1]{0}', space=sflag, size = 0x4, scoped, tag = 'scoped memory for tpu_custom_call.1']
    #allocation6 [shape = 'u8[512]{0}', space=vmem, size = 0x400, scoped, tag = 'input window, operand 1, single buffered']
    #allocation7 [shape = 'u8[1536]{0}', space=vmem, size = 0x800, scoped, tag = 'output window, operand 0, single buffered']
    %7 = vsyncpa [#allocation5], 0
    %8 = vsyncpa [#allocation3], 0
    %9 = vsyncpa [#allocation4], 0
    // Predicated region
    $region2: #{tpu_custom_call.1} parent=1 // pred_check
      _
    $region3: #{tpu_custom_call.1} parent=1 // pred_check_branch
      %11 = sbr.rel (0) target = $region5
    $region4: #{tpu_custom_call.1} parent=1 // pred_region
      %13 = vsyncadd [#allocation5], 0
      %s15 = sshll.u32 %s0, 4
      %s16 = int_to_ptr.hbm [resolvable:$true] %s15
      %18 = dma.hbm_to_smem %s16, 16, [#allocation2], [#allocation5]
    $region5: #{tpu_custom_call.1} parent=1 // pred_fallthru
      _
    // Predicated region
    $region6: #{tpu_custom_call.1} parent=1 // pred_check
      _
    $region7: #{tpu_custom_call.1} parent=1 // pred_check_branch
      %20 = sbr.rel (0) target = $region9
    $region8: #{tpu_custom_call.1} parent=1 // pred_region
      %22 = vsyncadd [#allocation3], 0
      %s24 = sshll.u32 %s1, 4
      %s25 = int_to_ptr.hbm [resolvable:$true] %s24
      %s26 = sshll.u32 [#allocation6], 4
      %s27 = int_to_ptr.vmem [resolvable:$true] %s26
      %29 = dma.hbm_to_vmem [thread:$0]  %s25, 16, %s27, [#allocation3]
    $region9: #{tpu_custom_call.1} parent=1 // pred_fallthru
      _
    // Predicated region
    $region10: #{tpu_custom_call.1} parent=1 // pred_check
      _
    $region11: #{tpu_custom_call.1} parent=1 // pred_check_branch
      %31 = sbr.rel (0) target = $region13
    $region12: #{tpu_custom_call.1} parent=1 // pred_region
      %33 = dma.done [#allocation5], 16
    $region13: #{tpu_custom_call.1} parent=1 // pred_fallthru
      _
    // Predicated region
    $region14: #{tpu_custom_call.1} parent=1 // pred_check
      _
    $region15: #{tpu_custom_call.1} parent=1 // pred_check_branch
      %35 = sbr.rel (0) target = $region17
    $region16: #{tpu_custom_call.1} parent=1 // pred_region
      %37 = dma.done [#allocation3], 16
    $region17: #{tpu_custom_call.1} parent=1 // pred_fallthru
      _
    %38 = sfence
    %s39 = sld [smem:[#allocation2]]
    %s40 = sld [smem:[#allocation2 + $0x1]]
    %s41 = sld [smem:[#allocation2 + $0x2]]
    %s42 = sld [smem:[#allocation2 + $0x3]]
    %s43 = smul.f32 %s39, 6.2831855
    %s44 = smul.f32 %s39, %s42
    %v45 = vld [vmem:[#allocation6] sm:$0x1]
    %v46 = vstv %s44
    %v47 = vmul.f32 %v46, %v45
    %s48 = scalar_lea.vmem [#allocation7], 2
    %49 = vst [vmem:[%s48] sm:$0x1] %v47
    %v50 = vstv %s43
    %v51 = vmul.f32 %v50, %v45
    %v52 = vand.u32 2147483647, %v51
    %vm53 = vcmp.le.f32.partialorder %v52, 0.7853982
    %vm54 = vcmp.lt.s32.totalorder %v51, 0
    %v55 = vand.u32 %v51, 2139095040
    %v56 = vshrl.u32 %v55, 23
    %v57 = vsub.s32 %v56, 127
    %v58 = vand.u32 2147483647, %v51
    %v59 = vand.u32 %v58, 8388607
    %v60 = vor.u32 %v59, 8388608
    %v61 = vsub.s32 0, %v60
    %v62 = vadd.s32 %v57, 1
    %vm63 = vcmp.gt.s32.totalorder %v62, 0
    %v64 = vsel %vm63, %v62, 0
    %v65 = vshrl.u32 %v64, 5
    %v66 = vand.u32 %v64, 31
    %v67 = vsub.s32 32, %v66
    %v68 = vshrl.u32 683565275, %v67
    %v69 = vshll.u32 683565275, %v66
    %v70 = vshrl.u32 2475754826, %v67
    %v71 = vor.u32 %v69, %v70
    %v72 = vshll.u32 2475754826, %v66
    %v73 = vshrl.u32 2131351028, %v67
    %v74 = vor.u32 %v72, %v73
    %v75 = vshll.u32 2131351028, %v66
    %v76 = vshrl.u32 2102212464, %v67
    %v77 = vor.u32 %v75, %v76
    %v78 = vshll.u32 2102212464, %v66
    %v79 = vshrl.u32 920167782, %v67
    %v80 = vor.u32 %v78, %v79
    %v81 = vshll.u32 920167782, %v66
    %v82 = vshrl.u32 1326507024, %v67
    %v83 = vor.u32 %v81, %v82
    %vm84 = vcmp.lt.s32.totalorder %v65, 1
    %vm85 = vcmp.lt.s32.totalorder %v65, 2
    %vm86 = vcmp.lt.s32.totalorder %v65, 3
    %vm87 = vcmp.lt.s32.totalorder %v65, 4
    %v88 = vsel %vm84, %v68, %v71
    %v89 = vsel %vm87, %v77, 2102212464
    %v90 = vsel %vm86, %v74, %v89
    %v91 = vsel %vm85, %v88, %v90
    %v92 = vsel %vm84, %v71, %v74
    %v93 = vsel %vm87, %v80, 920167782
    %v94 = vsel %vm86, %v77, %v93
    %v95 = vsel %vm85, %v92, %v94
    %v96 = vsel %vm84, %v74, %v77
    %v97 = vsel %vm87, %v83, 1326507024
    %v98 = vsel %vm86, %v80, %v97
    %v99 = vsel %vm85, %v96, %v98
    %v100 = vshll.u32 %v60, 8
    %v101 = vand.u32 %v100, 65535
    %v102 = vshrl.u32 %v100, 16
    %v103 = vand.u32 %v99, 65535
    %v104 = vshrl.u32 %v99, 16
    %v105 = vmul.u32 %v101, %v103
    %v106 = vmul.u32 %v101, %v104
    %v107 = vmul.u32 %v102, %v103
    %v108 = vmul.u32 %v102, %v104
    %v109 = vshll.u32 %v106, 16
    %v110 = vshrl.u32 %v106, 16
    %v111 = vshll.u32 %v107, 16
    %v112 = vshrl.u32 %v107, 16
    %vm113 = vc.u32 %v105, %v109
    %v114 = vsel %vm113, 1, 0
    %v115 = vadd.s32 %v105, %v109
    %v116 = vadd.s32 %v108, %v114
    %vm117 = vc.u32 %v115, %v111
    %v118 = vsel %vm117, 1, 0
    %v119 = vadd.s32 %v115, %v111
    %v120 = vadd.s32 %v116, %v118
    %v121 = vadd.s32 %v120, %v110
    %v122 = vadd.s32 %v121, %v112
    %v123 = vand.u32 %v100, 65535
    %v124 = vshrl.u32 %v100, 16
    %v125 = vand.u32 %v95, 65535
    %v126 = vshrl.u32 %v95, 16
    %v127 = vmul.u32 %v123, %v125
    %v128 = vmul.u32 %v123, %v126
    %v129 = vmul.u32 %v124, %v125
    %v130 = vmul.u32 %v124, %v126
    %v131 = vshll.u32 %v128, 16
    %v132 = vshrl.u32 %v128, 16
    %v133 = vshll.u32 %v129, 16
    %v134 = vshrl.u32 %v129, 16
    %vm135 = vc.u32 %v127, %v131
    %v136 = vsel %vm135, 1, 0
    %v137 = vadd.s32 %v127, %v131
    %v138 = vadd.s32 %v130, %v136
    %vm139 = vc.u32 %v137, %v133
    %v140 = vsel %vm139, 1, 0
    %v141 = vadd.s32 %v137, %v133
    %v142 = vadd.s32 %v138, %v140
    %v143 = vadd.s32 %v142, %v132
    %v144 = vadd.s32 %v143, %v134
    %v145 = vmul.u32 %v100, %v91
    %v146 = vadd.s32 %v122, %v141
    %vm147 = vc.u32 %v122, %v141
    %v148 = vadd.s32 %v144, 1
    %v149 = vsel %vm147, %v148, %v144
    %v150 = vadd.s32 %v145, %v149
    %v151 = vadd.s32 %v150, 536870912
    %v152 = vshrl.u32 %v151, 30
    %v153 = vshll.u32 %v152, 30
    %v154 = vsub.s32 %v150, %v153
    %vm155 = vcmp.lt.s32.totalorder %v154, 0
    %v156 = vsub.s32 0, %v154
    %v157 = vsel %vm155, %v156, %v154
    %v158 = vclz %v157
    %v159 = vsub.s32 %v158, 2
    %vm160 = vcmp.gt.s32.totalorder 0, %v159
    %v161 = vsel %vm160, 0, %v159
    %v162 = vsub.s32 32, %v161
    %v163 = vshll.u32 %v154, %v161
    %v164 = vshrl.u32 %v146, %v162
    %v165 = vor.u32 %v163, %v164
    %v166 = vsub.s32 4294967266, %v161
    %v167 = vadd.s32 %v166, 127
    %v168 = vshll.u32 %v167, 23
    %v169 = vor.u32 4788187, %v168
    %v170 = vand.u32 2147483647, %v169
    %v172 = vcvt.s32.f32 %v165
    %v173 = vmul.f32 %v172, %v170
    %v174 = vxor.u32 %v173, 2147483648
    %v175 = vsel %vm54, %v174, %v173
    %v176 = vsub.s32 4, %v152
    %v177 = vsel %vm54, %v176, %v152
    %v178 = vsel %vm53, %v51, %v175
    %v179 = vsel %vm53, 0, %v177
    %v180 = vmul.f32 %v178, %v178
    %v181 = vmul.f32 %v180, -0.001358992
    %v182 = vadd.f32 %v181, 0.041655596
    %v183 = vmul.f32 %v180, %v182
    %v184 = vadd.f32 %v183, -0.4999988
    %v185 = vmul.f32 %v180, %v184
    %v186 = vadd.f32 1.0, %v185
    %v187 = vmul.f32 %v178, %v178
    %v188 = vmul.f32 %v187, -0.00019511016
    %v189 = vadd.f32 %v188, 0.008332121
    %v190 = vmul.f32 %v187, %v189
    %v191 = vadd.f32 %v190, -0.16666654
    %v192 = vmul.f32 %v187, %v191
    %v193 = vadd.f32 %v192, 1.0
    %v194 = vmul.f32 %v193, %v178
    %vm195 = vweird.f32 %v51
    %v196 = vand.u32 %v179, 3
    %vm197 = vcmp.lt.s32.totalorder %v196, 2
    %vm198 = vcmp.eq.s32.totalorder %v196, 0
    %v199 = vxor.u32 %v194, 2147483648
    %v200 = vsel %vm198, %v186, %v199
    %vm201 = vcmp.eq.s32.totalorder %v196, 2
    %v202 = vxor.u32 %v186, 2147483648
    %v203 = vsel %vm201, %v202, %v194
    %v204 = vsel %vm197, %v200, %v203
    %v205 = vsel %vm195, nan, %v204
    %v206 = vstv %s40
    %v207 = vmul.f32 %v206, %v205
    %208 = vst [vmem:[#allocation7] sm:$0x1] %v207
    %v209 = vand.u32 2147483647, %v51
    %vm210 = vcmp.le.f32.partialorder %v209, 0.7853982
    %vm211 = vcmp.lt.s32.totalorder %v51, 0
    %v212 = vand.u32 %v51, 2139095040
    %v213 = vshrl.u32 %v212, 23
    %v214 = vsub.s32 %v213, 127
    %v215 = vand.u32 2147483647, %v51
    %v216 = vand.u32 %v215, 8388607
    %v217 = vor.u32 %v216, 8388608
    %v218 = vsub.s32 0, %v217
    %v219 = vadd.s32 %v214, 1
    %vm220 = vcmp.gt.s32.totalorder %v219, 0
    %v221 = vsel %vm220, %v219, 0
    %v222 = vshrl.u32 %v221, 5
    %v223 = vand.u32 %v221, 31
    %v224 = vsub.s32 32, %v223
    %v225 = vshrl.u32 683565275, %v224
    %v226 = vshll.u32 683565275, %v223
    %v227 = vshrl.u32 2475754826, %v224
    %v228 = vor.u32 %v226, %v227
    %v229 = vshll.u32 2475754826, %v223
    %v230 = vshrl.u32 2131351028, %v224
    %v231 = vor.u32 %v229, %v230
    %v232 = vshll.u32 2131351028, %v223
    %v233 = vshrl.u32 2102212464, %v224
    %v234 = vor.u32 %v232, %v233
    %v235 = vshll.u32 2102212464, %v223
    %v236 = vshrl.u32 920167782, %v224
    %v237 = vor.u32 %v235, %v236
    %v238 = vshll.u32 920167782, %v223
    %v239 = vshrl.u32 1326507024, %v224
    %v240 = vor.u32 %v238, %v239
    %vm241 = vcmp.lt.s32.totalorder %v222, 1
    %vm242 = vcmp.lt.s32.totalorder %v222, 2
    %vm243 = vcmp.lt.s32.totalorder %v222, 3
    %vm244 = vcmp.lt.s32.totalorder %v222, 4
    %v245 = vsel %vm241, %v225, %v228
    %v246 = vsel %vm244, %v234, 2102212464
    %v247 = vsel %vm243, %v231, %v246
    %v248 = vsel %vm242, %v245, %v247
    %v249 = vsel %vm241, %v228, %v231
    %v250 = vsel %vm244, %v237, 920167782
    %v251 = vsel %vm243, %v234, %v250
    %v252 = vsel %vm242, %v249, %v251
    %v253 = vsel %vm241, %v231, %v234
    %v254 = vsel %vm244, %v240, 1326507024
    %v255 = vsel %vm243, %v237, %v254
    %v256 = vsel %vm242, %v253, %v255
    %v257 = vshll.u32 %v217, 8
    %v258 = vand.u32 %v257, 65535
    %v259 = vshrl.u32 %v257, 16
    %v260 = vand.u32 %v256, 65535
    %v261 = vshrl.u32 %v256, 16
    %v262 = vmul.u32 %v258, %v260
    %v263 = vmul.u32 %v258, %v261
    %v264 = vmul.u32 %v259, %v260
    %v265 = vmul.u32 %v259, %v261
    %v266 = vshll.u32 %v263, 16
    %v267 = vshrl.u32 %v263, 16
    %v268 = vshll.u32 %v264, 16
    %v269 = vshrl.u32 %v264, 16
    %vm270 = vc.u32 %v262, %v266
    %v271 = vsel %vm270, 1, 0
    %v272 = vadd.s32 %v262, %v266
    %v273 = vadd.s32 %v265, %v271
    %vm274 = vc.u32 %v272, %v268
    %v275 = vsel %vm274, 1, 0
    %v276 = vadd.s32 %v272, %v268
    %v277 = vadd.s32 %v273, %v275
    %v278 = vadd.s32 %v277, %v267
    %v279 = vadd.s32 %v278, %v269
    %v280 = vand.u32 %v257, 65535
    %v281 = vshrl.u32 %v257, 16
    %v282 = vand.u32 %v252, 65535
    %v283 = vshrl.u32 %v252, 16
    %v284 = vmul.u32 %v280, %v282
    %v285 = vmul.u32 %v280, %v283
    %v286 = vmul.u32 %v281, %v282
    %v287 = vmul.u32 %v281, %v283
    %v288 = vshll.u32 %v285, 16
    %v289 = vshrl.u32 %v285, 16
    %v290 = vshll.u32 %v286, 16
    %v291 = vshrl.u32 %v286, 16
    %vm292 = vc.u32 %v284, %v288
    %v293 = vsel %vm292, 1, 0
    %v294 = vadd.s32 %v284, %v288
    %v295 = vadd.s32 %v287, %v293
    %vm296 = vc.u32 %v294, %v290
    %v297 = vsel %vm296, 1, 0
    %v298 = vadd.s32 %v294, %v290
    %v299 = vadd.s32 %v295, %v297
    %v300 = vadd.s32 %v299, %v289
    %v301 = vadd.s32 %v300, %v291
    %v302 = vmul.u32 %v257, %v248
    %v303 = vadd.s32 %v279, %v298
    %vm304 = vc.u32 %v279, %v298
    %v305 = vadd.s32 %v301, 1
    %v306 = vsel %vm304, %v305, %v301
    %v307 = vadd.s32 %v302, %v306
    %v308 = vadd.s32 %v307, 536870912
    %v309 = vshrl.u32 %v308, 30
    %v310 = vshll.u32 %v309, 30
    %v311 = vsub.s32 %v307, %v310
    %vm312 = vcmp.lt.s32.totalorder %v311, 0
    %v313 = vsub.s32 0, %v311
    %v314 = vsel %vm312, %v313, %v311
    %v315 = vclz %v314
    %v316 = vsub.s32 %v315, 2
    %vm317 = vcmp.gt.s32.totalorder 0, %v316
    %v318 = vsel %vm317, 0, %v316
    %v319 = vsub.s32 32, %v318
    %v320 = vshll.u32 %v311, %v318
    %v321 = vshrl.u32 %v303, %v319
    %v322 = vor.u32 %v320, %v321
    %v323 = vsub.s32 4294967266, %v318
    %v324 = vadd.s32 %v323, 127
    %v325 = vshll.u32 %v324, 23
    %v326 = vor.u32 4788187, %v325
    %v327 = vand.u32 2147483647, %v326
    %v329 = vcvt.s32.f32 %v322
    %v330 = vmul.f32 %v329, %v327
    %v331 = vxor.u32 %v330, 2147483648
    %v332 = vsel %vm211, %v331, %v330
    %v333 = vsub.s32 4, %v309
    %v334 = vsel %vm211, %v333, %v309
    %v335 = vsel %vm210, %v51, %v332
    %v336 = vsel %vm210, 0, %v334
    %v337 = vmul.f32 %v335, %v335
    %v338 = vmul.f32 %v337, -0.001358992
    %v339 = vadd.f32 %v338, 0.041655596
    %v340 = vmul.f32 %v337, %v339
    %v341 = vadd.f32 %v340, -0.4999988
    %v342 = vmul.f32 %v337, %v341
    %v343 = vadd.f32 1.0, %v342
    %v344 = vmul.f32 %v335, %v335
    %v345 = vmul.f32 %v344, -0.00019511016
    %v346 = vadd.f32 %v345, 0.008332121
    %v347 = vmul.f32 %v344, %v346
    %v348 = vadd.f32 %v347, -0.16666654
    %v349 = vmul.f32 %v344, %v348
    %v350 = vadd.f32 %v349, 1.0
    %v351 = vmul.f32 %v350, %v335
    %vm352 = vweird.f32 %v51
    %v353 = vadd.s32 %v336, 3
    %v354 = vand.u32 %v353, 3
    %vm355 = vcmp.lt.s32.totalorder %v354, 2
    %vm356 = vcmp.eq.s32.totalorder %v354, 0
    %v357 = vxor.u32 %v351, 2147483648
    %v358 = vsel %vm356, %v343, %v357
    %vm359 = vcmp.eq.s32.totalorder %v354, 2
    %v360 = vxor.u32 %v343, 2147483648
    %v361 = vsel %vm359, %v360, %v351
    %v362 = vsel %vm355, %v358, %v361
    %v363 = vsel %vm352, nan, %v362
    %v364 = vstv %s41
    %v365 = vmul.f32 %v364, %v363
    %s366 = scalar_lea.vmem [#allocation7], 1
    %367 = vst [vmem:[%s366] sm:$0x1] %v365
    // Predicated region
    $region18: #{tpu_custom_call.1} parent=1 // pred_check
      _
    $region19: #{tpu_custom_call.1} parent=1 // pred_check_branch
      %369 = sbr.rel (0) target = $region21
    $region20: #{tpu_custom_call.1} parent=1 // pred_region
      %371 = vsyncadd [#allocation4], 0
      %s372 = sshll.u32 [#allocation7], 4
      %s373 = int_to_ptr.vmem [resolvable:$true] %s372
      %s374 = sshll.u32 %s2, 4
      %s375 = int_to_ptr.hbm [resolvable:$true] %s374
      %380 = dma.vmem_to_hbm [thread:$0]  %s373, 48, %s375, [#allocation4], 16, 16, 1
    $region21: #{tpu_custom_call.1} parent=1 // pred_fallthru
      _
    // Predicated region
    $region22: #{tpu_custom_call.1} parent=1 // pred_check
      _
    $region23: #{tpu_custom_call.1} parent=1 // pred_check_branch
      %382 = sbr.rel (0) target = $region25
    $region24: #{tpu_custom_call.1} parent=1 // pred_region
      %384 = dma.done [#allocation4], 48
    $region25: #{tpu_custom_call.1} parent=1 // pred_fallthru
      _
    %385 = vsyncpa [#allocation3], 1
    %386 = vsyncpa [#allocation4], 1
    %387 = vsyncpa [#allocation5], 1

</llo_original>
